<compile_context>
chip_gen: v5e
topology: v5e:2x2
jax: 0.10.0
libtpu: 0.0.40
codegen_flags: <defaults>
</compile_context>

<pallas_src>
import functools

import numpy as np

import jax
import jax.numpy as jnp
from jax import lax
from jax.experimental import pallas as pl
from jax.experimental.pallas import tpu as pltpu

EPS = 1e-5
PAD = 128                     # lane-pad every activation / operator to one full vreg lane span
BN_ONE_PASS_MIN_COUNT = 32    # below this many samples/channel use two-pass variance


# ----------------------------------------------------------------------------
# Fused whole-network Pallas kernel
# ----------------------------------------------------------------------------
def _segnet_kernel(*refs, cfgs):
    """refs = (x_ref, *per-layer constant refs, o_ref).

    Per layer the constants are, in consumption order:
      R    (n_mat, N*OH, N*Hin)   row-selection matrices for the non-identity active taps
                                  (omitted when every active tap is the identity)
      Ccat (n_active*PAD, PAD)    vertically stacked column-selection x weight matrices
      then, for BN+ReLU layers:
        GB (2, PAD)               [gamma_row ; beta_row]  (zero in the padded lanes)
        P  (PAD, PAD)             per-channel pooling matrix (1/count folded in)
      or, for plain / sigmoid layers:
        B  (1, PAD)               bias row
    """
    x_ref = refs[0]
    o_ref = refs[-1]
    consts = refs[1:-1]

    y = x_ref[...]                      # (rows, 128) f32, stays on-chip throughout
    i = 0
    for act, tap_ident in cfgs:
        n_active = len(tap_ident)
        n_mat = sum(1 for ident in tap_ident if not ident)
        if n_mat:
            r_ref = consts[i]
            i += 1
        c_ref = consts[i]
        i += 1

        # First stage: per-tap row selection. Taps are independent (no chained accumulator)
        # so they can overlap; identity taps cost nothing.
        taps, j = [], 0
        for ident in tap_ident:
            if ident:
                taps.append(y)
            else:
                taps.append(jnp.dot(r_ref[j], y, preferred_element_type=jnp.float32))
                j += 1
        t_cat = taps[0] if n_active == 1 else jnp.concatenate(taps, axis=1)

        # Second stage: single wide-K MXU matmul with all kernel taps folded in.
        acc = jnp.dot(t_cat, c_ref[...], preferred_element_type=jnp.float32)

        if act in ("bn", "bn_small"):   # train-mode BatchNorm2d + ReLU (conv bias cancels)
            gb = consts[i][...]
            p_ref = consts[i + 1]
            i += 2
            gamma, beta = gb[0:1, :], gb[1:2, :]
            if act == "bn":
                # one pooling matmul on the stacked [Σx ; Σx²] rows
                s = jnp.concatenate(
                    [jnp.sum(acc, axis=0, keepdims=True),
                     jnp.sum(acc * acc, axis=0, keepdims=True)], axis=0)
                stats = jnp.dot(s, p_ref[...], preferred_element_type=jnp.float32)
                mean = stats[0:1, :]
                var = jnp.maximum(stats[1:2, :] - mean * mean, 0.0)
                d = acc - mean
            else:
                # tiny per-channel sample counts (2-8): two-pass variance, no cancellation
                mean = jnp.dot(jnp.sum(acc, axis=0, keepdims=True), p_ref[...],
                               preferred_element_type=jnp.float32)
                d = acc - mean
                var = jnp.dot(jnp.sum(d * d, axis=0, keepdims=True), p_ref[...],
                              preferred_element_type=jnp.float32)
            acc = d * (lax.rsqrt(var + EPS) * gamma) + beta
            acc = jnp.maximum(acc, 0.0)
        else:                           # plain conv (+ optional sigmoid)
            b_ref = consts[i]
            i += 1
            acc = acc + b_ref[...]
            if act == "sigmoid":
                acc = 1.0 / (1.0 + jnp.exp(-acc))
        y = acc

    o_ref[...] = y                      # single lane-dense (N*H_out, 128) store


# ----------------------------------------------------------------------------
# One-time operator construction (selection matrices + folded weights)
# ----------------------------------------------------------------------------
def _sel_conv(n_out, n_in, stride, pad, k):
    # mask[o, i] = 1 iff i == o*stride + k - pad  (zero-padding handled by dropping rows)
    o = np.arange(n_out)[:, None]
    i = np.arange(n_in)[None, :]
    src = o * stride + k - pad
    return ((i == src) & (src >= 0) & (src < n_in)).astype(np.float32)


def _sel_convT(n_out, n_in, stride, pad, k):
    # mask[o, i] = 1 iff o == i*stride - pad + k   (transposed conv, no dilated zeros)
    o = np.arange(n_out)[:, None]
    i = np.arange(n_in)[None, :]
    num = o + pad - k
    src = num // stride
    ok = (num >= 0) & (num % stride == 0) & (src < n_in)
    return ((i == src) & ok).astype(np.float32)


def prepare_operators(params, x_shape):
    """Build all per-layer constant operands for the fused kernel (runs once)."""
    N, C0, H0, W0 = (int(s) for s in x_shape)
    ops, cfgs = [], []
    Hc, Wc, Cc = H0, W0, C0

    layer_defs = []
    for (w, b, g, be) in params["down"]:
        layer_defs.append(("conv", 2, 1, 0, w, b, g, be, "bn"))
    w, b = params["mid"]
    layer_defs.append(("conv", 1, 1, 0, w, b, None, None, "plain"))
    for (w, b, g, be) in params["up"]:
        layer_defs.append(("convT", 2, 1, 1, w, b, g, be, "bn"))
    w, b = params["final"]
    layer_defs.append(("conv", 1, 1, 0, w, b, None, None, "sigmoid"))

    for kind, stride, pad, opad, w, b, g, be, act in layer_defs:
        w_np = np.asarray(jax.device_get(w), dtype=np.float32)
        if kind == "conv":
            Cout, Cin = w_np.shape[0], w_np.shape[1]
            OH = (Hc + 2 * pad - 3) // stride + 1
            OW = (Wc + 2 * pad - 3) // stride + 1
            sel = _sel_conv

            def wmat(kh, kw, w_np=w_np):               # (Cin, Cout)
                return w_np[:, :, kh, kw].T
        else:
            Cin, Cout = w_np.shape[0], w_np.shape[1]
            OH = (Hc - 1) * stride - 2 * pad + 3 + opad
            OW = (Wc - 1) * stride - 2 * pad + 3 + opad
            sel = _sel_convT

            def wmat(kh, kw, w_np=w_np):               # (Cin, Cout)
                return w_np[:, :, kh, kw]
        assert Cin == Cc, (Cin, Cc)
        in_w, out_w = Wc * Cin, OW * Cout
        assert in_w <= PAD and out_w <= PAD, (in_w, out_w)

        eye_n = np.eye(N, dtype=np.float32)
        r_list, c_list, tap_ident = [], [], []
        for kh in range(3):
            r_small = sel(OH, Hc, stride, pad, kh)     # (OH, Hc)
            if not r_small.any():
                continue                               # all-zero tap: skip its matmuls entirely
            r_full = np.kron(eye_n, r_small)           # (N*OH, N*Hc), block-diag over batch
            ident = (r_full.shape[0] == r_full.shape[1] and
                     np.array_equal(r_full, np.eye(r_full.shape[0], dtype=np.float32)))
            ck = np.zeros((PAD, PAD), np.float32)      # lane-padded column-sel x weight matrix
            blk = np.zeros((in_w, out_w), np.float32)
            for kw in range(3):
                scol = sel(OW, Wc, stride, pad, kw).T  # (Wc, OW)
                if scol.any():
                    blk += np.kron(scol, wmat(kh, kw))
            ck[:in_w, :out_w] = blk
            tap_ident.append(bool(ident))
            if not ident:
                r_list.append(r_full)
            c_list.append(ck)

        if r_list:
            ops.append(jnp.asarray(np.stack(r_list)))             # (n_mat, N*OH, N*Hc)
        ops.append(jnp.asarray(np.concatenate(c_list, axis=0)))   # (n_active*PAD, PAD)

        if act == "bn":
            g_np = np.asarray(jax.device_get(g), np.float32)
            be_np = np.asarray(jax.device_get(be), np.float32)
            gb = np.zeros((2, PAD), np.float32)
            gb[0, :out_w] = np.tile(g_np, OW)
            gb[1, :out_w] = np.tile(be_np, OW)
            ops.append(jnp.asarray(gb))
            pool = np.zeros((PAD, PAD), np.float32)
            pool[:out_w, :out_w] = np.kron(np.ones((OW, OW), np.float32),
                                           np.eye(Cout, dtype=np.float32)) / float(N * OH * OW)
            ops.append(jnp.asarray(pool))
            act_tag = "bn" if (N * OH * OW) >= BN_ONE_PASS_MIN_COUNT else "bn_small"
        else:
            b_np = np.asarray(jax.device_get(b), np.float32)
            brow = np.zeros((1, PAD), np.float32)
            brow[0, :out_w] = np.tile(b_np, OW)
            ops.append(jnp.asarray(brow))
            act_tag = act
        cfgs.append((act_tag, tuple(tap_ident)))
        Hc, Wc, Cc = OH, OW, Cout

    return tuple(ops), tuple(cfgs), (Hc, Wc, Cc)


def make_forward(cfgs, out_hwc):
    kern = functools.partial(_segnet_kernel, cfgs=tuple(cfgs))
    OH, OW, Cout = out_hwc

    def forward(x_nchw, *ops):
        N, C, H, W = x_nchw.shape
        # NCHW -> (N*H, W*C) (+ lane pad): the only per-call XLA layout glue in the network.
        # TODO(synk): an NHWC (or pre-flattened 2-D) external contract would remove it.
        x2d = jnp.transpose(x_nchw, (0, 2, 3, 1)).reshape(N * H, W * C).astype(jnp.float32)
        if W * C < PAD:
            x2d = jnp.pad(x2d, ((0, 0), (0, PAD - W * C)))
        out2d = pl.pallas_call(
            kern,
            out_shape=jax.ShapeDtypeStruct((N * OH, PAD), jnp.float32),
            in_specs=[pl.BlockSpec(memory_space=pltpu.MemorySpace.VMEM)] * (1 + len(ops)),
            out_specs=pl.BlockSpec(memory_space=pltpu.MemorySpace.VMEM),
        )(x2d, *ops)
        out2d = out2d[:, :OW * Cout]
        return jnp.transpose(out2d.reshape(N, OH, OW, Cout), (0, 3, 1, 2))

    return forward


# ----------------------------------------------------------------------------
# Deterministic parameter initialization (shapes from SegNet.__init__)
# ----------------------------------------------------------------------------
def init_params(key, num_class):
    down_specs = [(num_class, 4), (4, 8), (8, 16), (16, 32), (32, 64)]
    up_specs = [(64, 32), (32, 16), (16, 8), (8, 4), (4, 2)]
    keys = iter(jax.random.split(key, 64))

    def nrm(shape):
        return (0.1 * jax.random.normal(next(keys), shape)).astype(jnp.float32)

    params = {"down": [], "up": []}
    for ci, co in down_specs:
        w = nrm((co, ci, 3, 3)); b = nrm((co,))
        g = (jnp.ones((co,)) + 0.1 * jax.random.normal(next(keys), (co,))).astype(jnp.float32)
        be = nrm((co,))
        params["down"].append((w, b, g, be))
    params["mid"] = (nrm((64, 64, 3, 3)), nrm((64,)))
    for ci, co in up_specs:
        w = nrm((ci, co, 3, 3)); b = nrm((co,))           # ConvTranspose2d weight layout
        g = (jnp.ones((co,)) + 0.1 * jax.random.normal(next(keys), (co,))).astype(jnp.float32)
        be = nrm((co,))
        params["up"].append((w, b, g, be))
    params["final"] = (nrm((num_class, 2, 3, 3)), nrm((num_class,)))
    return params


# ----------------------------------------------------------------------------
# Pure-JAX/XLA reference of the PyTorch module (for numerical validation only)
# ----------------------------------------------------------------------------
def segnet_reference(params, x):
    def conv(x, w, b, stride, pad):
        y = lax.conv_general_dilated(
            x, w, window_strides=(stride, stride),
            padding=[(pad, pad), (pad, pad)],
            dimension_numbers=("NCHW", "OIHW", "NCHW"),
            precision=lax.Precision.HIGHEST)
        return y + b.reshape(1, -1, 1, 1)

    def conv_t(x, w_t, b, stride, pad, opad):
        w_conv = jnp.transpose(w_t[:, :, ::-1, ::-1], (1, 0, 2, 3))
        p = (2 - pad, 2 - pad + opad)          # K-1-p, K-1-p+output_padding (K=3)
        y = lax.conv_general_dilated(
            x, w_conv, window_strides=(1, 1), padding=[p, p],
            lhs_dilation=(stride, stride),
            dimension_numbers=("NCHW", "OIHW", "NCHW"),
            precision=lax.Precision.HIGHEST)
        return y + b.reshape(1, -1, 1, 1)

    def bn_relu(x, g, be):
        mean = jnp.mean(x, axis=(0, 2, 3), keepdims=True)
        var = jnp.mean((x - mean) ** 2, axis=(0, 2, 3), keepdims=True)
        y = (x - mean) * lax.rsqrt(var + EPS)
        y = y * g.reshape(1, -1, 1, 1) + be.reshape(1, -1, 1, 1)
        return jnp.maximum(y, 0.0)

    for (w, b, g, be) in params["down"]:
        x = bn_relu(conv(x, w, b, 2, 1), g, be)
    w, b = params["mid"]
    x = conv(x, w, b, 1, 1)
    for (w, b, g, be) in params["up"]:
        x = bn_relu(conv_t(x, w, b, 2, 1, 1), g, be)
    w, b = params["final"]
    x = conv(x, w, b, 1, 1)
    return 1.0 / (1.0 + jnp.exp(-x))


if __name__ == "__main__":
    num_class = 4
    key = jax.random.PRNGKey(0)
    k_x, k_p = jax.random.split(key)
    # spatial 32: encoder 32/16/8/4/2/1 -> decoder 2/4/8/16/32 (output == input size)
    x = jax.random.normal(k_x, (2, num_class, 32, 32), dtype=jnp.float32)
    params = init_params(k_p, num_class)

    # one-time operator preparation (outside the per-forward hot path)
    ops, cfgs, out_hwc = prepare_operators(params, x.shape)
    forward = jax.jit(make_forward(cfgs, out_hwc))

    out = jax.block_until_ready(forward(x, *ops))

    assert out.shape == (2, num_class, 32, 32), out.shape
    assert out.dtype == jnp.float32
    assert bool(jnp.all(jnp.isfinite(out)))
    assert bool(jnp.all((out >= 0.0) & (out <= 1.0)))        # sigmoid range

    # numerical check against the pure-JAX/XLA reference of the PyTorch module
    # (tolerance tightened from 5e-2 to 2e-3 per review)
    ref = jax.block_until_ready(jax.jit(segnet_reference)(params, x))
    max_err = float(jnp.max(jnp.abs(out - ref)))
    assert max_err < 2e-3, f"max abs err vs reference: {max_err}"

    print("KERNEL_OK")
</pallas_src>

<mosaic_0001>
module attributes {stable_mosaic.version = 11 : i64} {
  func.func @_segnet_kernel(%arg0: memref<64x128xf32, #tpu.memory_space<vmem>>, %arg1: memref<3x32x64xf32, #tpu.memory_space<vmem>>, %arg2: memref<384x128xf32, #tpu.memory_space<vmem>>, %arg3: memref<2x128xf32, #tpu.memory_space<vmem>>, %arg4: memref<128x128xf32, #tpu.memory_space<vmem>>, %arg5: memref<3x16x32xf32, #tpu.memory_space<vmem>>, %arg6: memref<384x128xf32, #tpu.memory_space<vmem>>, %arg7: memref<2x128xf32, #tpu.memory_space<vmem>>, %arg8: memref<128x128xf32, #tpu.memory_space<vmem>>, %arg9: memref<3x8x16xf32, #tpu.memory_space<vmem>>, %arg10: memref<384x128xf32, #tpu.memory_space<vmem>>, %arg11: memref<2x128xf32, #tpu.memory_space<vmem>>, %arg12: memref<128x128xf32, #tpu.memory_space<vmem>>, %arg13: memref<3x4x8xf32, #tpu.memory_space<vmem>>, %arg14: memref<384x128xf32, #tpu.memory_space<vmem>>, %arg15: memref<2x128xf32, #tpu.memory_space<vmem>>, %arg16: memref<128x128xf32, #tpu.memory_space<vmem>>, %arg17: memref<2x2x4xf32, #tpu.memory_space<vmem>>, %arg18: memref<256x128xf32, #tpu.memory_space<vmem>>, %arg19: memref<2x128xf32, #tpu.memory_space<vmem>>, %arg20: memref<128x128xf32, #tpu.memory_space<vmem>>, %arg21: memref<128x128xf32, #tpu.memory_space<vmem>>, %arg22: memref<1x128xf32, #tpu.memory_space<vmem>>, %arg23: memref<2x4x2xf32, #tpu.memory_space<vmem>>, %arg24: memref<256x128xf32, #tpu.memory_space<vmem>>, %arg25: memref<2x128xf32, #tpu.memory_space<vmem>>, %arg26: memref<128x128xf32, #tpu.memory_space<vmem>>, %arg27: memref<3x8x4xf32, #tpu.memory_space<vmem>>, %arg28: memref<384x128xf32, #tpu.memory_space<vmem>>, %arg29: memref<2x128xf32, #tpu.memory_space<vmem>>, %arg30: memref<128x128xf32, #tpu.memory_space<vmem>>, %arg31: memref<3x16x8xf32, #tpu.memory_space<vmem>>, %arg32: memref<384x128xf32, #tpu.memory_space<vmem>>, %arg33: memref<2x128xf32, #tpu.memory_space<vmem>>, %arg34: memref<128x128xf32, #tpu.memory_space<vmem>>, %arg35: memref<3x32x16xf32, #tpu.memory_space<vmem>>, %arg36: memref<384x128xf32, #tpu.memory_space<vmem>>, %arg37: memref<2x128xf32, #tpu.memory_space<vmem>>, %arg38: memref<128x128xf32, #tpu.memory_space<vmem>>, %arg39: memref<3x64x32xf32, #tpu.memory_space<vmem>>, %arg40: memref<384x128xf32, #tpu.memory_space<vmem>>, %arg41: memref<2x128xf32, #tpu.memory_space<vmem>>, %arg42: memref<128x128xf32, #tpu.memory_space<vmem>>, %arg43: memref<2x64x64xf32, #tpu.memory_space<vmem>>, %arg44: memref<384x128xf32, #tpu.memory_space<vmem>>, %arg45: memref<1x128xf32, #tpu.memory_space<vmem>>, %arg46: memref<64x128xf32, #tpu.memory_space<vmem>>) attributes {dimension_semantics = [], scalar_prefetch = 0 : i64, scratch_operands = 0 : i64, tpu.core_type = #tpu.core_type<tc>} {
    %c0 = arith.constant 0 : index
    %c0_0 = arith.constant 0 : index
    %0 = vector.load %arg0[%c0, %c0_0] : memref<64x128xf32, #tpu.memory_space<vmem>>, vector<64x128xf32>
    %c0_1 = arith.constant 0 : index
    %c0_2 = arith.constant 0 : index
    %c0_3 = arith.constant 0 : index
    %1 = vector.load %arg1[%c0_1, %c0_2, %c0_3] : memref<3x32x64xf32, #tpu.memory_space<vmem>>, vector<1x32x64xf32>
    %2 = vector.shape_cast %1 : vector<1x32x64xf32> to vector<32x64xf32>
    %cst = arith.constant dense<0.000000e+00> : vector<32x128xf32>
    %3 = tpu.matmul %2, %0, %cst {dimension_numbers = #tpu.dot_dimension_numbers<[1], [0], [0], [1], [0, 0, 1, 1], [], []>} : vector<32x64xf32>, vector<64x128xf32>, vector<32x128xf32> -> vector<32x128xf32>
    %c1 = arith.constant 1 : index
    %c0_4 = arith.constant 0 : index
    %c0_5 = arith.constant 0 : index
    %4 = vector.load %arg1[%c1, %c0_4, %c0_5] : memref<3x32x64xf32, #tpu.memory_space<vmem>>, vector<1x32x64xf32>
    %5 = vector.shape_cast %4 : vector<1x32x64xf32> to vector<32x64xf32>
    %cst_6 = arith.constant dense<0.000000e+00> : vector<32x128xf32>
    %6 = tpu.matmul %5, %0, %cst_6 {dimension_numbers = #tpu.dot_dimension_numbers<[1], [0], [0], [1], [0, 0, 1, 1], [], []>} : vector<32x64xf32>, vector<64x128xf32>, vector<32x128xf32> -> vector<32x128xf32>
    %c2 = arith.constant 2 : index
    %c0_7 = arith.constant 0 : index
    %c0_8 = arith.constant 0 : index
    %7 = vector.load %arg1[%c2, %c0_7, %c0_8] : memref<3x32x64xf32, #tpu.memory_space<vmem>>, vector<1x32x64xf32>
    %8 = vector.shape_cast %7 : vector<1x32x64xf32> to vector<32x64xf32>
    %cst_9 = arith.constant dense<0.000000e+00> : vector<32x128xf32>
    %9 = tpu.matmul %8, %0, %cst_9 {dimension_numbers = #tpu.dot_dimension_numbers<[1], [0], [0], [1], [0, 0, 1, 1], [], []>} : vector<32x64xf32>, vector<64x128xf32>, vector<32x128xf32> -> vector<32x128xf32>
    %10 = tpu.concatenate %3, %6, %9 in 1 : vector<32x128xf32>, vector<32x128xf32>, vector<32x128xf32> -> vector<32x384xf32>
    %c0_10 = arith.constant 0 : index
    %c0_11 = arith.constant 0 : index
    %11 = vector.load %arg2[%c0_10, %c0_11] : memref<384x128xf32, #tpu.memory_space<vmem>>, vector<384x128xf32>
    %cst_12 = arith.constant dense<0.000000e+00> : vector<32x128xf32>
    %12 = tpu.matmul %10, %11, %cst_12 {dimension_numbers = #tpu.dot_dimension_numbers<[1], [0], [0], [1], [0, 0, 1, 1], [], []>} : vector<32x384xf32>, vector<384x128xf32>, vector<32x128xf32> -> vector<32x128xf32>
    %c0_13 = arith.constant 0 : index
    %c0_14 = arith.constant 0 : index
    %13 = vector.load %arg3[%c0_13, %c0_14] : memref<2x128xf32, #tpu.memory_space<vmem>>, vector<2x128xf32>
    %14 = vector.extract_strided_slice %13 {offsets = [0, 0], sizes = [1, 128], strides = [1, 1]} : vector<2x128xf32> to vector<1x128xf32>
    %15 = vector.extract_strided_slice %13 {offsets = [1, 0], sizes = [1, 128], strides = [1, 1]} : vector<2x128xf32> to vector<1x128xf32>
    %cst_15 = arith.constant dense<0.000000e+00> : vector<128xf32>
    %16 = vector.multi_reduction <add>, %12, %cst_15 [0] : vector<32x128xf32> to vector<128xf32>
    %17 = vector.shape_cast %16 : vector<128xf32> to vector<1x128xf32>
    %18 = arith.mulf %12, %12 : vector<32x128xf32>
    %cst_16 = arith.constant dense<0.000000e+00> : vector<128xf32>
    %19 = vector.multi_reduction <add>, %18, %cst_16 [0] : vector<32x128xf32> to vector<128xf32>
    %20 = vector.shape_cast %19 : vector<128xf32> to vector<1x128xf32>
    %21 = tpu.concatenate %17, %20 in 0 : vector<1x128xf32>, vector<1x128xf32> -> vector<2x128xf32>
    %c0_17 = arith.constant 0 : index
    %c0_18 = arith.constant 0 : index
    %22 = vector.load %arg4[%c0_17, %c0_18] : memref<128x128xf32, #tpu.memory_space<vmem>>, vector<128x128xf32>
    %cst_19 = arith.constant dense<0.000000e+00> : vector<2x128xf32>
    %23 = tpu.matmul %21, %22, %cst_19 {dimension_numbers = #tpu.dot_dimension_numbers<[1], [0], [0], [1], [0, 0, 1, 1], [], []>} : vector<2x128xf32>, vector<128x128xf32>, vector<2x128xf32> -> vector<2x128xf32>
    %24 = vector.extract_strided_slice %23 {offsets = [0, 0], sizes = [1, 128], strides = [1, 1]} : vector<2x128xf32> to vector<1x128xf32>
    %25 = vector.extract_strided_slice %23 {offsets = [1, 0], sizes = [1, 128], strides = [1, 1]} : vector<2x128xf32> to vector<1x128xf32>
    %26 = arith.mulf %24, %24 : vector<1x128xf32>
    %27 = arith.subf %25, %26 : vector<1x128xf32>
    %cst_20 = arith.constant 0.000000e+00 : f32
    %28 = vector.broadcast %cst_20 : f32 to vector<1x128xf32>
    %29 = arith.maximumf %27, %28 : vector<1x128xf32>
    %30 = vector.broadcast %24 : vector<1x128xf32> to vector<32x128xf32>
    %31 = arith.subf %12, %30 : vector<32x128xf32>
    %cst_21 = arith.constant 9.99999974E-6 : f32
    %32 = vector.broadcast %cst_21 : f32 to vector<1x128xf32>
    %33 = arith.addf %29, %32 : vector<1x128xf32>
    %34 = math.rsqrt %33 : vector<1x128xf32>
    %35 = arith.mulf %34, %14 : vector<1x128xf32>
    %36 = vector.broadcast %35 : vector<1x128xf32> to vector<32x128xf32>
    %37 = arith.mulf %31, %36 : vector<32x128xf32>
    %38 = vector.broadcast %15 : vector<1x128xf32> to vector<32x128xf32>
    %39 = arith.addf %37, %38 : vector<32x128xf32>
    %cst_22 = arith.constant 0.000000e+00 : f32
    %40 = vector.broadcast %cst_22 : f32 to vector<32x128xf32>
    %41 = arith.maximumf %39, %40 : vector<32x128xf32>
    %c0_23 = arith.constant 0 : index
    %c0_24 = arith.constant 0 : index
    %c0_25 = arith.constant 0 : index
    %42 = vector.load %arg5[%c0_23, %c0_24, %c0_25] : memref<3x16x32xf32, #tpu.memory_space<vmem>>, vector<1x16x32xf32>
    %43 = vector.shape_cast %42 : vector<1x16x32xf32> to vector<16x32xf32>
    %cst_26 = arith.constant dense<0.000000e+00> : vector<16x128xf32>
    %44 = tpu.matmul %43, %41, %cst_26 {dimension_numbers = #tpu.dot_dimension_numbers<[1], [0], [0], [1], [0, 0, 1, 1], [], []>} : vector<16x32xf32>, vector<32x128xf32>, vector<16x128xf32> -> vector<16x128xf32>
    %c1_27 = arith.constant 1 : index
    %c0_28 = arith.constant 0 : index
    %c0_29 = arith.constant 0 : index
    %45 = vector.load %arg5[%c1_27, %c0_28, %c0_29] : memref<3x16x32xf32, #tpu.memory_space<vmem>>, vector<1x16x32xf32>
    %46 = vector.shape_cast %45 : vector<1x16x32xf32> to vector<16x32xf32>
    %cst_30 = arith.constant dense<0.000000e+00> : vector<16x128xf32>
    %47 = tpu.matmul %46, %41, %cst_30 {dimension_numbers = #tpu.dot_dimension_numbers<[1], [0], [0], [1], [0, 0, 1, 1], [], []>} : vector<16x32xf32>, vector<32x128xf32>, vector<16x128xf32> -> vector<16x128xf32>
    %c2_31 = arith.constant 2 : index
    %c0_32 = arith.constant 0 : index
    %c0_33 = arith.constant 0 : index
    %48 = vector.load %arg5[%c2_31, %c0_32, %c0_33] : memref<3x16x32xf32, #tpu.memory_space<vmem>>, vector<1x16x32xf32>
    %49 = vector.shape_cast %48 : vector<1x16x32xf32> to vector<16x32xf32>
    %cst_34 = arith.constant dense<0.000000e+00> : vector<16x128xf32>
    %50 = tpu.matmul %49, %41, %cst_34 {dimension_numbers = #tpu.dot_dimension_numbers<[1], [0], [0], [1], [0, 0, 1, 1], [], []>} : vector<16x32xf32>, vector<32x128xf32>, vector<16x128xf32> -> vector<16x128xf32>
    %51 = tpu.concatenate %44, %47, %50 in 1 : vector<16x128xf32>, vector<16x128xf32>, vector<16x128xf32> -> vector<16x384xf32>
    %c0_35 = arith.constant 0 : index
    %c0_36 = arith.constant 0 : index
    %52 = vector.load %arg6[%c0_35, %c0_36] : memref<384x128xf32, #tpu.memory_space<vmem>>, vector<384x128xf32>
    %cst_37 = arith.constant dense<0.000000e+00> : vector<16x128xf32>
    %53 = tpu.matmul %51, %52, %cst_37 {dimension_numbers = #tpu.dot_dimension_numbers<[1], [0], [0], [1], [0, 0, 1, 1], [], []>} : vector<16x384xf32>, vector<384x128xf32>, vector<16x128xf32> -> vector<16x128xf32>
    %c0_38 = arith.constant 0 : index
    %c0_39 = arith.constant 0 : index
    %54 = vector.load %arg7[%c0_38, %c0_39] : memref<2x128xf32, #tpu.memory_space<vmem>>, vector<2x128xf32>
    %55 = vector.extract_strided_slice %54 {offsets = [0, 0], sizes = [1, 128], strides = [1, 1]} : vector<2x128xf32> to vector<1x128xf32>
    %56 = vector.extract_strided_slice %54 {offsets = [1, 0], sizes = [1, 128], strides = [1, 1]} : vector<2x128xf32> to vector<1x128xf32>
    %cst_40 = arith.constant dense<0.000000e+00> : vector<128xf32>
    %57 = vector.multi_reduction <add>, %53, %cst_40 [0] : vector<16x128xf32> to vector<128xf32>
    %58 = vector.shape_cast %57 : vector<128xf32> to vector<1x128xf32>
    %59 = arith.mulf %53, %53 : vector<16x128xf32>
    %cst_41 = arith.constant dense<0.000000e+00> : vector<128xf32>
    %60 = vector.multi_reduction <add>, %59, %cst_41 [0] : vector<16x128xf32> to vector<128xf32>
    %61 = vector.shape_cast %60 : vector<128xf32> to vector<1x128xf32>
    %62 = tpu.concatenate %58, %61 in 0 : vector<1x128xf32>, vector<1x128xf32> -> vector<2x128xf32>
    %c0_42 = arith.constant 0 : index
    %c0_43 = arith.constant 0 : index
    %63 = vector.load %arg8[%c0_42, %c0_43] : memref<128x128xf32, #tpu.memory_space<vmem>>, vector<128x128xf32>
    %cst_44 = arith.constant dense<0.000000e+00> : vector<2x128xf32>
    %64 = tpu.matmul %62, %63, %cst_44 {dimension_numbers = #tpu.dot_dimension_numbers<[1], [0], [0], [1], [0, 0, 1, 1], [], []>} : vector<2x128xf32>, vector<128x128xf32>, vector<2x128xf32> -> vector<2x128xf32>
    %65 = vector.extract_strided_slice %64 {offsets = [0, 0], sizes = [1, 128], strides = [1, 1]} : vector<2x128xf32> to vector<1x128xf32>
    %66 = vector.extract_strided_slice %64 {offsets = [1, 0], sizes = [1, 128], strides = [1, 1]} : vector<2x128xf32> to vector<1x128xf32>
    %67 = arith.mulf %65, %65 : vector<1x128xf32>
    %68 = arith.subf %66, %67 : vector<1x128xf32>
    %cst_45 = arith.constant 0.000000e+00 : f32
    %69 = vector.broadcast %cst_45 : f32 to vector<1x128xf32>
    %70 = arith.maximumf %68, %69 : vector<1x128xf32>
    %71 = vector.broadcast %65 : vector<1x128xf32> to vector<16x128xf32>
    %72 = arith.subf %53, %71 : vector<16x128xf32>
    %cst_46 = arith.constant 9.99999974E-6 : f32
    %73 = vector.broadcast %cst_46 : f32 to vector<1x128xf32>
    %74 = arith.addf %70, %73 : vector<1x128xf32>
    %75 = math.rsqrt %74 : vector<1x128xf32>
    %76 = arith.mulf %75, %55 : vector<1x128xf32>
    %77 = vector.broadcast %76 : vector<1x128xf32> to vector<16x128xf32>
    %78 = arith.mulf %72, %77 : vector<16x128xf32>
    %79 = vector.broadcast %56 : vector<1x128xf32> to vector<16x128xf32>
    %80 = arith.addf %78, %79 : vector<16x128xf32>
    %cst_47 = arith.constant 0.000000e+00 : f32
    %81 = vector.broadcast %cst_47 : f32 to vector<16x128xf32>
    %82 = arith.maximumf %80, %81 : vector<16x128xf32>
    %c0_48 = arith.constant 0 : index
    %c0_49 = arith.constant 0 : index
    %c0_50 = arith.constant 0 : index
    %83 = vector.load %arg9[%c0_48, %c0_49, %c0_50] : memref<3x8x16xf32, #tpu.memory_space<vmem>>, vector<1x8x16xf32>
    %84 = vector.shape_cast %83 : vector<1x8x16xf32> to vector<8x16xf32>
    %cst_51 = arith.constant dense<0.000000e+00> : vector<8x128xf32>
    %85 = tpu.matmul %84, %82, %cst_51 {dimension_numbers = #tpu.dot_dimension_numbers<[1], [0], [0], [1], [0, 0, 1, 1], [], []>} : vector<8x16xf32>, vector<16x128xf32>, vector<8x128xf32> -> vector<8x128xf32>
    %c1_52 = arith.constant 1 : index
    %c0_53 = arith.constant 0 : index
    %c0_54 = arith.constant 0 : index
    %86 = vector.load %arg9[%c1_52, %c0_53, %c0_54] : memref<3x8x16xf32, #tpu.memory_space<vmem>>, vector<1x8x16xf32>
    %87 = vector.shape_cast %86 : vector<1x8x16xf32> to vector<8x16xf32>
    %cst_55 = arith.constant dense<0.000000e+00> : vector<8x128xf32>
    %88 = tpu.matmul %87, %82, %cst_55 {dimension_numbers = #tpu.dot_dimension_numbers<[1], [0], [0], [1], [0, 0, 1, 1], [], []>} : vector<8x16xf32>, vector<16x128xf32>, vector<8x128xf32> -> vector<8x128xf32>
    %c2_56 = arith.constant 2 : index
    %c0_57 = arith.constant 0 : index
    %c0_58 = arith.constant 0 : index
    %89 = vector.load %arg9[%c2_56, %c0_57, %c0_58] : memref<3x8x16xf32, #tpu.memory_space<vmem>>, vector<1x8x16xf32>
    %90 = vector.shape_cast %89 : vector<1x8x16xf32> to vector<8x16xf32>
    %cst_59 = arith.constant dense<0.000000e+00> : vector<8x128xf32>
    %91 = tpu.matmul %90, %82, %cst_59 {dimension_numbers = #tpu.dot_dimension_numbers<[1], [0], [0], [1], [0, 0, 1, 1], [], []>} : vector<8x16xf32>, vector<16x128xf32>, vector<8x128xf32> -> vector<8x128xf32>
    %92 = tpu.concatenate %85, %88, %91 in 1 : vector<8x128xf32>, vector<8x128xf32>, vector<8x128xf32> -> vector<8x384xf32>
    %c0_60 = arith.constant 0 : index
    %c0_61 = arith.constant 0 : index
    %93 = vector.load %arg10[%c0_60, %c0_61] : memref<384x128xf32, #tpu.memory_space<vmem>>, vector<384x128xf32>
    %cst_62 = arith.constant dense<0.000000e+00> : vector<8x128xf32>
    %94 = tpu.matmul %92, %93, %cst_62 {dimension_numbers = #tpu.dot_dimension_numbers<[1], [0], [0], [1], [0, 0, 1, 1], [], []>} : vector<8x384xf32>, vector<384x128xf32>, vector<8x128xf32> -> vector<8x128xf32>
    %c0_63 = arith.constant 0 : index
    %c0_64 = arith.constant 0 : index
    %95 = vector.load %arg11[%c0_63, %c0_64] : memref<2x128xf32, #tpu.memory_space<vmem>>, vector<2x128xf32>
    %96 = vector.extract_strided_slice %95 {offsets = [0, 0], sizes = [1, 128], strides = [1, 1]} : vector<2x128xf32> to vector<1x128xf32>
    %97 = vector.extract_strided_slice %95 {offsets = [1, 0], sizes = [1, 128], strides = [1, 1]} : vector<2x128xf32> to vector<1x128xf32>
    %cst_65 = arith.constant dense<0.000000e+00> : vector<128xf32>
    %98 = vector.multi_reduction <add>, %94, %cst_65 [0] : vector<8x128xf32> to vector<128xf32>
    %99 = vector.shape_cast %98 : vector<128xf32> to vector<1x128xf32>
    %100 = arith.mulf %94, %94 : vector<8x128xf32>
    %cst_66 = arith.constant dense<0.000000e+00> : vector<128xf32>
    %101 = vector.multi_reduction <add>, %100, %cst_66 [0] : vector<8x128xf32> to vector<128xf32>
    %102 = vector.shape_cast %101 : vector<128xf32> to vector<1x128xf32>
    %103 = tpu.concatenate %99, %102 in 0 : vector<1x128xf32>, vector<1x128xf32> -> vector<2x128xf32>
    %c0_67 = arith.constant 0 : index
    %c0_68 = arith.constant 0 : index
    %104 = vector.load %arg12[%c0_67, %c0_68] : memref<128x128xf32, #tpu.memory_space<vmem>>, vector<128x128xf32>
    %cst_69 = arith.constant dense<0.000000e+00> : vector<2x128xf32>
    %105 = tpu.matmul %103, %104, %cst_69 {dimension_numbers = #tpu.dot_dimension_numbers<[1], [0], [0], [1], [0, 0, 1, 1], [], []>} : vector<2x128xf32>, vector<128x128xf32>, vector<2x128xf32> -> vector<2x128xf32>
    %106 = vector.extract_strided_slice %105 {offsets = [0, 0], sizes = [1, 128], strides = [1, 1]} : vector<2x128xf32> to vector<1x128xf32>
    %107 = vector.extract_strided_slice %105 {offsets = [1, 0], sizes = [1, 128], strides = [1, 1]} : vector<2x128xf32> to vector<1x128xf32>
    %108 = arith.mulf %106, %106 : vector<1x128xf32>
    %109 = arith.subf %107, %108 : vector<1x128xf32>
    %cst_70 = arith.constant 0.000000e+00 : f32
    %110 = vector.broadcast %cst_70 : f32 to vector<1x128xf32>
    %111 = arith.maximumf %109, %110 : vector<1x128xf32>
    %112 = vector.broadcast %106 : vector<1x128xf32> to vector<8x128xf32>
    %113 = arith.subf %94, %112 : vector<8x128xf32>
    %cst_71 = arith.constant 9.99999974E-6 : f32
    %114 = vector.broadcast %cst_71 : f32 to vector<1x128xf32>
    %115 = arith.addf %111, %114 : vector<1x128xf32>
    %116 = math.rsqrt %115 : vector<1x128xf32>
    %117 = arith.mulf %116, %96 : vector<1x128xf32>
    %118 = vector.broadcast %117 : vector<1x128xf32> to vector<8x128xf32>
    %119 = arith.mulf %113, %118 : vector<8x128xf32>
    %120 = vector.broadcast %97 : vector<1x128xf32> to vector<8x128xf32>
    %121 = arith.addf %119, %120 : vector<8x128xf32>
    %cst_72 = arith.constant 0.000000e+00 : f32
    %122 = vector.broadcast %cst_72 : f32 to vector<8x128xf32>
    %123 = arith.maximumf %121, %122 : vector<8x128xf32>
    %c0_73 = arith.constant 0 : index
    %c0_74 = arith.constant 0 : index
    %c0_75 = arith.constant 0 : index
    %124 = vector.load %arg13[%c0_73, %c0_74, %c0_75] : memref<3x4x8xf32, #tpu.memory_space<vmem>>, vector<1x4x8xf32>
    %125 = vector.shape_cast %124 : vector<1x4x8xf32> to vector<4x8xf32>
    %cst_76 = arith.constant dense<0.000000e+00> : vector<4x128xf32>
    %126 = tpu.matmul %125, %123, %cst_76 {dimension_numbers = #tpu.dot_dimension_numbers<[1], [0], [0], [1], [0, 0, 1, 1], [], []>} : vector<4x8xf32>, vector<8x128xf32>, vector<4x128xf32> -> vector<4x128xf32>
    %c1_77 = arith.constant 1 : index
    %c0_78 = arith.constant 0 : index
    %c0_79 = arith.constant 0 : index
    %127 = vector.load %arg13[%c1_77, %c0_78, %c0_79] : memref<3x4x8xf32, #tpu.memory_space<vmem>>, vector<1x4x8xf32>
    %128 = vector.shape_cast %127 : vector<1x4x8xf32> to vector<4x8xf32>
    %cst_80 = arith.constant dense<0.000000e+00> : vector<4x128xf32>
    %129 = tpu.matmul %128, %123, %cst_80 {dimension_numbers = #tpu.dot_dimension_numbers<[1], [0], [0], [1], [0, 0, 1, 1], [], []>} : vector<4x8xf32>, vector<8x128xf32>, vector<4x128xf32> -> vector<4x128xf32>
    %c2_81 = arith.constant 2 : index
    %c0_82 = arith.constant 0 : index
    %c0_83 = arith.constant 0 : index
    %130 = vector.load %arg13[%c2_81, %c0_82, %c0_83] : memref<3x4x8xf32, #tpu.memory_space<vmem>>, vector<1x4x8xf32>
    %131 = vector.shape_cast %130 : vector<1x4x8xf32> to vector<4x8xf32>
    %cst_84 = arith.constant dense<0.000000e+00> : vector<4x128xf32>
    %132 = tpu.matmul %131, %123, %cst_84 {dimension_numbers = #tpu.dot_dimension_numbers<[1], [0], [0], [1], [0, 0, 1, 1], [], []>} : vector<4x8xf32>, vector<8x128xf32>, vector<4x128xf32> -> vector<4x128xf32>
    %133 = tpu.concatenate %126, %129, %132 in 1 : vector<4x128xf32>, vector<4x128xf32>, vector<4x128xf32> -> vector<4x384xf32>
    %c0_85 = arith.constant 0 : index
    %c0_86 = arith.constant 0 : index
    %134 = vector.load %arg14[%c0_85, %c0_86] : memref<384x128xf32, #tpu.memory_space<vmem>>, vector<384x128xf32>
    %cst_87 = arith.constant dense<0.000000e+00> : vector<4x128xf32>
    %135 = tpu.matmul %133, %134, %cst_87 {dimension_numbers = #tpu.dot_dimension_numbers<[1], [0], [0], [1], [0, 0, 1, 1], [], []>} : vector<4x384xf32>, vector<384x128xf32>, vector<4x128xf32> -> vector<4x128xf32>
    %c0_88 = arith.constant 0 : index
    %c0_89 = arith.constant 0 : index
    %136 = vector.load %arg15[%c0_88, %c0_89] : memref<2x128xf32, #tpu.memory_space<vmem>>, vector<2x128xf32>
    %137 = vector.extract_strided_slice %136 {offsets = [0, 0], sizes = [1, 128], strides = [1, 1]} : vector<2x128xf32> to vector<1x128xf32>
    %138 = vector.extract_strided_slice %136 {offsets = [1, 0], sizes = [1, 128], strides = [1, 1]} : vector<2x128xf32> to vector<1x128xf32>
    %cst_90 = arith.constant dense<0.000000e+00> : vector<128xf32>
    %139 = vector.multi_reduction <add>, %135, %cst_90 [0] : vector<4x128xf32> to vector<128xf32>
    %140 = vector.shape_cast %139 : vector<128xf32> to vector<1x128xf32>
    %c0_91 = arith.constant 0 : index
    %c0_92 = arith.constant 0 : index
    %141 = vector.load %arg16[%c0_91, %c0_92] : memref<128x128xf32, #tpu.memory_space<vmem>>, vector<128x128xf32>
    %cst_93 = arith.constant dense<0.000000e+00> : vector<1x128xf32>
    %142 = tpu.matmul %140, %141, %cst_93 {dimension_numbers = #tpu.dot_dimension_numbers<[1], [0], [0], [1], [0, 0, 1, 1], [], []>} : vector<1x128xf32>, vector<128x128xf32>, vector<1x128xf32> -> vector<1x128xf32>
    %143 = vector.broadcast %142 : vector<1x128xf32> to vector<4x128xf32>
    %144 = arith.subf %135, %143 : vector<4x128xf32>
    %145 = arith.mulf %144, %144 : vector<4x128xf32>
    %cst_94 = arith.constant dense<0.000000e+00> : vector<128xf32>
    %146 = vector.multi_reduction <add>, %145, %cst_94 [0] : vector<4x128xf32> to vector<128xf32>
    %147 = vector.shape_cast %146 : vector<128xf32> to vector<1x128xf32>
    %c0_95 = arith.constant 0 : index
    %c0_96 = arith.constant 0 : index
    %148 = vector.load %arg16[%c0_95, %c0_96] : memref<128x128xf32, #tpu.memory_space<vmem>>, vector<128x128xf32>
    %cst_97 = arith.constant dense<0.000000e+00> : vector<1x128xf32>
    %149 = tpu.matmul %147, %148, %cst_97 {dimension_numbers = #tpu.dot_dimension_numbers<[1], [0], [0], [1], [0, 0, 1, 1], [], []>} : vector<1x128xf32>, vector<128x128xf32>, vector<1x128xf32> -> vector<1x128xf32>
    %cst_98 = arith.constant 9.99999974E-6 : f32
    %150 = vector.broadcast %cst_98 : f32 to vector<1x128xf32>
    %151 = arith.addf %149, %150 : vector<1x128xf32>
    %152 = math.rsqrt %151 : vector<1x128xf32>
    %153 = arith.mulf %152, %137 : vector<1x128xf32>
    %154 = vector.broadcast %153 : vector<1x128xf32> to vector<4x128xf32>
    %155 = arith.mulf %144, %154 : vector<4x128xf32>
    %156 = vector.broadcast %138 : vector<1x128xf32> to vector<4x128xf32>
    %157 = arith.addf %155, %156 : vector<4x128xf32>
    %cst_99 = arith.constant 0.000000e+00 : f32
    %158 = vector.broadcast %cst_99 : f32 to vector<4x128xf32>
    %159 = arith.maximumf %157, %158 : vector<4x128xf32>
    %c0_100 = arith.constant 0 : index
    %c0_101 = arith.constant 0 : index
    %c0_102 = arith.constant 0 : index
    %160 = vector.load %arg17[%c0_100, %c0_101, %c0_102] : memref<2x2x4xf32, #tpu.memory_space<vmem>>, vector<1x2x4xf32>
    %161 = vector.shape_cast %160 : vector<1x2x4xf32> to vector<2x4xf32>
    %cst_103 = arith.constant dense<0.000000e+00> : vector<2x128xf32>
    %162 = tpu.matmul %161, %159, %cst_103 {dimension_numbers = #tpu.dot_dimension_numbers<[1], [0], [0], [1], [0, 0, 1, 1], [], []>} : vector<2x4xf32>, vector<4x128xf32>, vector<2x128xf32> -> vector<2x128xf32>
    %c1_104 = arith.constant 1 : index
    %c0_105 = arith.constant 0 : index
    %c0_106 = arith.constant 0 : index
    %163 = vector.load %arg17[%c1_104, %c0_105, %c0_106] : memref<2x2x4xf32, #tpu.memory_space<vmem>>, vector<1x2x4xf32>
    %164 = vector.shape_cast %163 : vector<1x2x4xf32> to vector<2x4xf32>
    %cst_107 = arith.constant dense<0.000000e+00> : vector<2x128xf32>
    %165 = tpu.matmul %164, %159, %cst_107 {dimension_numbers = #tpu.dot_dimension_numbers<[1], [0], [0], [1], [0, 0, 1, 1], [], []>} : vector<2x4xf32>, vector<4x128xf32>, vector<2x128xf32> -> vector<2x128xf32>
    %166 = tpu.concatenate %162, %165 in 1 : vector<2x128xf32>, vector<2x128xf32> -> vector<2x256xf32>
    %c0_108 = arith.constant 0 : index
    %c0_109 = arith.constant 0 : index
    %167 = vector.load %arg18[%c0_108, %c0_109] : memref<256x128xf32, #tpu.memory_space<vmem>>, vector<256x128xf32>
    %cst_110 = arith.constant dense<0.000000e+00> : vector<2x128xf32>
    %168 = tpu.matmul %166, %167, %cst_110 {dimension_numbers = #tpu.dot_dimension_numbers<[1], [0], [0], [1], [0, 0, 1, 1], [], []>} : vector<2x256xf32>, vector<256x128xf32>, vector<2x128xf32> -> vector<2x128xf32>
    %c0_111 = arith.constant 0 : index
    %c0_112 = arith.constant 0 : index
    %169 = vector.load %arg19[%c0_111, %c0_112] : memref<2x128xf32, #tpu.memory_space<vmem>>, vector<2x128xf32>
    %170 = vector.extract_strided_slice %169 {offsets = [0, 0], sizes = [1, 128], strides = [1, 1]} : vector<2x128xf32> to vector<1x128xf32>
    %171 = vector.extract_strided_slice %169 {offsets = [1, 0], sizes = [1, 128], strides = [1, 1]} : vector<2x128xf32> to vector<1x128xf32>
    %cst_113 = arith.constant dense<0.000000e+00> : vector<128xf32>
    %172 = vector.multi_reduction <add>, %168, %cst_113 [0] : vector<2x128xf32> to vector<128xf32>
    %173 = vector.shape_cast %172 : vector<128xf32> to vector<1x128xf32>
    %c0_114 = arith.constant 0 : index
    %c0_115 = arith.constant 0 : index
    %174 = vector.load %arg20[%c0_114, %c0_115] : memref<128x128xf32, #tpu.memory_space<vmem>>, vector<128x128xf32>
    %cst_116 = arith.constant dense<0.000000e+00> : vector<1x128xf32>
    %175 = tpu.matmul %173, %174, %cst_116 {dimension_numbers = #tpu.dot_dimension_numbers<[1], [0], [0], [1], [0, 0, 1, 1], [], []>} : vector<1x128xf32>, vector<128x128xf32>, vector<1x128xf32> -> vector<1x128xf32>
    %176 = vector.broadcast %175 : vector<1x128xf32> to vector<2x128xf32>
    %177 = arith.subf %168, %176 : vector<2x128xf32>
    %178 = arith.mulf %177, %177 : vector<2x128xf32>
    %cst_117 = arith.constant dense<0.000000e+00> : vector<128xf32>
    %179 = vector.multi_reduction <add>, %178, %cst_117 [0] : vector<2x128xf32> to vector<128xf32>
    %180 = vector.shape_cast %179 : vector<128xf32> to vector<1x128xf32>
    %c0_118 = arith.constant 0 : index
    %c0_119 = arith.constant 0 : index
    %181 = vector.load %arg20[%c0_118, %c0_119] : memref<128x128xf32, #tpu.memory_space<vmem>>, vector<128x128xf32>
    %cst_120 = arith.constant dense<0.000000e+00> : vector<1x128xf32>
    %182 = tpu.matmul %180, %181, %cst_120 {dimension_numbers = #tpu.dot_dimension_numbers<[1], [0], [0], [1], [0, 0, 1, 1], [], []>} : vector<1x128xf32>, vector<128x128xf32>, vector<1x128xf32> -> vector<1x128xf32>
    %cst_121 = arith.constant 9.99999974E-6 : f32
    %183 = vector.broadcast %cst_121 : f32 to vector<1x128xf32>
    %184 = arith.addf %182, %183 : vector<1x128xf32>
    %185 = math.rsqrt %184 : vector<1x128xf32>
    %186 = arith.mulf %185, %170 : vector<1x128xf32>
    %187 = vector.broadcast %186 : vector<1x128xf32> to vector<2x128xf32>
    %188 = arith.mulf %177, %187 : vector<2x128xf32>
    %189 = vector.broadcast %171 : vector<1x128xf32> to vector<2x128xf32>
    %190 = arith.addf %188, %189 : vector<2x128xf32>
    %cst_122 = arith.constant 0.000000e+00 : f32
    %191 = vector.broadcast %cst_122 : f32 to vector<2x128xf32>
    %192 = arith.maximumf %190, %191 : vector<2x128xf32>
    %c0_123 = arith.constant 0 : index
    %c0_124 = arith.constant 0 : index
    %193 = vector.load %arg21[%c0_123, %c0_124] : memref<128x128xf32, #tpu.memory_space<vmem>>, vector<128x128xf32>
    %cst_125 = arith.constant dense<0.000000e+00> : vector<2x128xf32>
    %194 = tpu.matmul %192, %193, %cst_125 {dimension_numbers = #tpu.dot_dimension_numbers<[1], [0], [0], [1], [0, 0, 1, 1], [], []>} : vector<2x128xf32>, vector<128x128xf32>, vector<2x128xf32> -> vector<2x128xf32>
    %c0_126 = arith.constant 0 : index
    %c0_127 = arith.constant 0 : index
    %195 = vector.load %arg22[%c0_126, %c0_127] : memref<1x128xf32, #tpu.memory_space<vmem>>, vector<1x128xf32>
    %196 = vector.broadcast %195 : vector<1x128xf32> to vector<2x128xf32>
    %197 = arith.addf %194, %196 : vector<2x128xf32>
    %c0_128 = arith.constant 0 : index
    %c0_129 = arith.constant 0 : index
    %c0_130 = arith.constant 0 : index
    %198 = vector.load %arg23[%c0_128, %c0_129, %c0_130] : memref<2x4x2xf32, #tpu.memory_space<vmem>>, vector<1x4x2xf32>
    %199 = vector.shape_cast %198 : vector<1x4x2xf32> to vector<4x2xf32>
    %cst_131 = arith.constant dense<0.000000e+00> : vector<4x128xf32>
    %200 = tpu.matmul %199, %197, %cst_131 {dimension_numbers = #tpu.dot_dimension_numbers<[1], [0], [0], [1], [0, 0, 1, 1], [], []>} : vector<4x2xf32>, vector<2x128xf32>, vector<4x128xf32> -> vector<4x128xf32>
    %c1_132 = arith.constant 1 : index
    %c0_133 = arith.constant 0 : index
    %c0_134 = arith.constant 0 : index
    %201 = vector.load %arg23[%c1_132, %c0_133, %c0_134] : memref<2x4x2xf32, #tpu.memory_space<vmem>>, vector<1x4x2xf32>
    %202 = vector.shape_cast %201 : vector<1x4x2xf32> to vector<4x2xf32>
    %cst_135 = arith.constant dense<0.000000e+00> : vector<4x128xf32>
    %203 = tpu.matmul %202, %197, %cst_135 {dimension_numbers = #tpu.dot_dimension_numbers<[1], [0], [0], [1], [0, 0, 1, 1], [], []>} : vector<4x2xf32>, vector<2x128xf32>, vector<4x128xf32> -> vector<4x128xf32>
    %204 = tpu.concatenate %200, %203 in 1 : vector<4x128xf32>, vector<4x128xf32> -> vector<4x256xf32>
    %c0_136 = arith.constant 0 : index
    %c0_137 = arith.constant 0 : index
    %205 = vector.load %arg24[%c0_136, %c0_137] : memref<256x128xf32, #tpu.memory_space<vmem>>, vector<256x128xf32>
    %cst_138 = arith.constant dense<0.000000e+00> : vector<4x128xf32>
    %206 = tpu.matmul %204, %205, %cst_138 {dimension_numbers = #tpu.dot_dimension_numbers<[1], [0], [0], [1], [0, 0, 1, 1], [], []>} : vector<4x256xf32>, vector<256x128xf32>, vector<4x128xf32> -> vector<4x128xf32>
    %c0_139 = arith.constant 0 : index
    %c0_140 = arith.constant 0 : index
    %207 = vector.load %arg25[%c0_139, %c0_140] : memref<2x128xf32, #tpu.memory_space<vmem>>, vector<2x128xf32>
    %208 = vector.extract_strided_slice %207 {offsets = [0, 0], sizes = [1, 128], strides = [1, 1]} : vector<2x128xf32> to vector<1x128xf32>
    %209 = vector.extract_strided_slice %207 {offsets = [1, 0], sizes = [1, 128], strides = [1, 1]} : vector<2x128xf32> to vector<1x128xf32>
    %cst_141 = arith.constant dense<0.000000e+00> : vector<128xf32>
    %210 = vector.multi_reduction <add>, %206, %cst_141 [0] : vector<4x128xf32> to vector<128xf32>
    %211 = vector.shape_cast %210 : vector<128xf32> to vector<1x128xf32>
    %c0_142 = arith.constant 0 : index
    %c0_143 = arith.constant 0 : index
    %212 = vector.load %arg26[%c0_142, %c0_143] : memref<128x128xf32, #tpu.memory_space<vmem>>, vector<128x128xf32>
    %cst_144 = arith.constant dense<0.000000e+00> : vector<1x128xf32>
    %213 = tpu.matmul %211, %212, %cst_144 {dimension_numbers = #tpu.dot_dimension_numbers<[1], [0], [0], [1], [0, 0, 1, 1], [], []>} : vector<1x128xf32>, vector<128x128xf32>, vector<1x128xf32> -> vector<1x128xf32>
    %214 = vector.broadcast %213 : vector<1x128xf32> to vector<4x128xf32>
    %215 = arith.subf %206, %214 : vector<4x128xf32>
    %216 = arith.mulf %215, %215 : vector<4x128xf32>
    %cst_145 = arith.constant dense<0.000000e+00> : vector<128xf32>
    %217 = vector.multi_reduction <add>, %216, %cst_145 [0] : vector<4x128xf32> to vector<128xf32>
    %218 = vector.shape_cast %217 : vector<128xf32> to vector<1x128xf32>
    %c0_146 = arith.constant 0 : index
    %c0_147 = arith.constant 0 : index
    %219 = vector.load %arg26[%c0_146, %c0_147] : memref<128x128xf32, #tpu.memory_space<vmem>>, vector<128x128xf32>
    %cst_148 = arith.constant dense<0.000000e+00> : vector<1x128xf32>
    %220 = tpu.matmul %218, %219, %cst_148 {dimension_numbers = #tpu.dot_dimension_numbers<[1], [0], [0], [1], [0, 0, 1, 1], [], []>} : vector<1x128xf32>, vector<128x128xf32>, vector<1x128xf32> -> vector<1x128xf32>
    %cst_149 = arith.constant 9.99999974E-6 : f32
    %221 = vector.broadcast %cst_149 : f32 to vector<1x128xf32>
    %222 = arith.addf %220, %221 : vector<1x128xf32>
    %223 = math.rsqrt %222 : vector<1x128xf32>
    %224 = arith.mulf %223, %208 : vector<1x128xf32>
    %225 = vector.broadcast %224 : vector<1x128xf32> to vector<4x128xf32>
    %226 = arith.mulf %215, %225 : vector<4x128xf32>
    %227 = vector.broadcast %209 : vector<1x128xf32> to vector<4x128xf32>
    %228 = arith.addf %226, %227 : vector<4x128xf32>
    %cst_150 = arith.constant 0.000000e+00 : f32
    %229 = vector.broadcast %cst_150 : f32 to vector<4x128xf32>
    %230 = arith.maximumf %228, %229 : vector<4x128xf32>
    %c0_151 = arith.constant 0 : index
    %c0_152 = arith.constant 0 : index
    %c0_153 = arith.constant 0 : index
    %231 = vector.load %arg27[%c0_151, %c0_152, %c0_153] : memref<3x8x4xf32, #tpu.memory_space<vmem>>, vector<1x8x4xf32>
    %232 = vector.shape_cast %231 : vector<1x8x4xf32> to vector<8x4xf32>
    %cst_154 = arith.constant dense<0.000000e+00> : vector<8x128xf32>
    %233 = tpu.matmul %232, %230, %cst_154 {dimension_numbers = #tpu.dot_dimension_numbers<[1], [0], [0], [1], [0, 0, 1, 1], [], []>} : vector<8x4xf32>, vector<4x128xf32>, vector<8x128xf32> -> vector<8x128xf32>
    %c1_155 = arith.constant 1 : index
    %c0_156 = arith.constant 0 : index
    %c0_157 = arith.constant 0 : index
    %234 = vector.load %arg27[%c1_155, %c0_156, %c0_157] : memref<3x8x4xf32, #tpu.memory_space<vmem>>, vector<1x8x4xf32>
    %235 = vector.shape_cast %234 : vector<1x8x4xf32> to vector<8x4xf32>
    %cst_158 = arith.constant dense<0.000000e+00> : vector<8x128xf32>
    %236 = tpu.matmul %235, %230, %cst_158 {dimension_numbers = #tpu.dot_dimension_numbers<[1], [0], [0], [1], [0, 0, 1, 1], [], []>} : vector<8x4xf32>, vector<4x128xf32>, vector<8x128xf32> -> vector<8x128xf32>
    %c2_159 = arith.constant 2 : index
    %c0_160 = arith.constant 0 : index
    %c0_161 = arith.constant 0 : index
    %237 = vector.load %arg27[%c2_159, %c0_160, %c0_161] : memref<3x8x4xf32, #tpu.memory_space<vmem>>, vector<1x8x4xf32>
    %238 = vector.shape_cast %237 : vector<1x8x4xf32> to vector<8x4xf32>
    %cst_162 = arith.constant dense<0.000000e+00> : vector<8x128xf32>
    %239 = tpu.matmul %238, %230, %cst_162 {dimension_numbers = #tpu.dot_dimension_numbers<[1], [0], [0], [1], [0, 0, 1, 1], [], []>} : vector<8x4xf32>, vector<4x128xf32>, vector<8x128xf32> -> vector<8x128xf32>
    %240 = tpu.concatenate %233, %236, %239 in 1 : vector<8x128xf32>, vector<8x128xf32>, vector<8x128xf32> -> vector<8x384xf32>
    %c0_163 = arith.constant 0 : index
    %c0_164 = arith.constant 0 : index
    %241 = vector.load %arg28[%c0_163, %c0_164] : memref<384x128xf32, #tpu.memory_space<vmem>>, vector<384x128xf32>
    %cst_165 = arith.constant dense<0.000000e+00> : vector<8x128xf32>
    %242 = tpu.matmul %240, %241, %cst_165 {dimension_numbers = #tpu.dot_dimension_numbers<[1], [0], [0], [1], [0, 0, 1, 1], [], []>} : vector<8x384xf32>, vector<384x128xf32>, vector<8x128xf32> -> vector<8x128xf32>
    %c0_166 = arith.constant 0 : index
    %c0_167 = arith.constant 0 : index
    %243 = vector.load %arg29[%c0_166, %c0_167] : memref<2x128xf32, #tpu.memory_space<vmem>>, vector<2x128xf32>
    %244 = vector.extract_strided_slice %243 {offsets = [0, 0], sizes = [1, 128], strides = [1, 1]} : vector<2x128xf32> to vector<1x128xf32>
    %245 = vector.extract_strided_slice %243 {offsets = [1, 0], sizes = [1, 128], strides = [1, 1]} : vector<2x128xf32> to vector<1x128xf32>
    %cst_168 = arith.constant dense<0.000000e+00> : vector<128xf32>
    %246 = vector.multi_reduction <add>, %242, %cst_168 [0] : vector<8x128xf32> to vector<128xf32>
    %247 = vector.shape_cast %246 : vector<128xf32> to vector<1x128xf32>
    %248 = arith.mulf %242, %242 : vector<8x128xf32>
    %cst_169 = arith.constant dense<0.000000e+00> : vector<128xf32>
    %249 = vector.multi_reduction <add>, %248, %cst_169 [0] : vector<8x128xf32> to vector<128xf32>
    %250 = vector.shape_cast %249 : vector<128xf32> to vector<1x128xf32>
    %251 = tpu.concatenate %247, %250 in 0 : vector<1x128xf32>, vector<1x128xf32> -> vector<2x128xf32>
    %c0_170 = arith.constant 0 : index
    %c0_171 = arith.constant 0 : index
    %252 = vector.load %arg30[%c0_170, %c0_171] : memref<128x128xf32, #tpu.memory_space<vmem>>, vector<128x128xf32>
    %cst_172 = arith.constant dense<0.000000e+00> : vector<2x128xf32>
    %253 = tpu.matmul %251, %252, %cst_172 {dimension_numbers = #tpu.dot_dimension_numbers<[1], [0], [0], [1], [0, 0, 1, 1], [], []>} : vector<2x128xf32>, vector<128x128xf32>, vector<2x128xf32> -> vector<2x128xf32>
    %254 = vector.extract_strided_slice %253 {offsets = [0, 0], sizes = [1, 128], strides = [1, 1]} : vector<2x128xf32> to vector<1x128xf32>
    %255 = vector.extract_strided_slice %253 {offsets = [1, 0], sizes = [1, 128], strides = [1, 1]} : vector<2x128xf32> to vector<1x128xf32>
    %256 = arith.mulf %254, %254 : vector<1x128xf32>
    %257 = arith.subf %255, %256 : vector<1x128xf32>
    %cst_173 = arith.constant 0.000000e+00 : f32
    %258 = vector.broadcast %cst_173 : f32 to vector<1x128xf32>
    %259 = arith.maximumf %257, %258 : vector<1x128xf32>
    %260 = vector.broadcast %254 : vector<1x128xf32> to vector<8x128xf32>
    %261 = arith.subf %242, %260 : vector<8x128xf32>
    %cst_174 = arith.constant 9.99999974E-6 : f32
    %262 = vector.broadcast %cst_174 : f32 to vector<1x128xf32>
    %263 = arith.addf %259, %262 : vector<1x128xf32>
    %264 = math.rsqrt %263 : vector<1x128xf32>
    %265 = arith.mulf %264, %244 : vector<1x128xf32>
    %266 = vector.broadcast %265 : vector<1x128xf32> to vector<8x128xf32>
    %267 = arith.mulf %261, %266 : vector<8x128xf32>
    %268 = vector.broadcast %245 : vector<1x128xf32> to vector<8x128xf32>
    %269 = arith.addf %267, %268 : vector<8x128xf32>
    %cst_175 = arith.constant 0.000000e+00 : f32
    %270 = vector.broadcast %cst_175 : f32 to vector<8x128xf32>
    %271 = arith.maximumf %269, %270 : vector<8x128xf32>
    %c0_176 = arith.constant 0 : index
    %c0_177 = arith.constant 0 : index
    %c0_178 = arith.constant 0 : index
    %272 = vector.load %arg31[%c0_176, %c0_177, %c0_178] : memref<3x16x8xf32, #tpu.memory_space<vmem>>, vector<1x16x8xf32>
    %273 = vector.shape_cast %272 : vector<1x16x8xf32> to vector<16x8xf32>
    %cst_179 = arith.constant dense<0.000000e+00> : vector<16x128xf32>
    %274 = tpu.matmul %273, %271, %cst_179 {dimension_numbers = #tpu.dot_dimension_numbers<[1], [0], [0], [1], [0, 0, 1, 1], [], []>} : vector<16x8xf32>, vector<8x128xf32>, vector<16x128xf32> -> vector<16x128xf32>
    %c1_180 = arith.constant 1 : index
    %c0_181 = arith.constant 0 : index
    %c0_182 = arith.constant 0 : index
    %275 = vector.load %arg31[%c1_180, %c0_181, %c0_182] : memref<3x16x8xf32, #tpu.memory_space<vmem>>, vector<1x16x8xf32>
    %276 = vector.shape_cast %275 : vector<1x16x8xf32> to vector<16x8xf32>
    %cst_183 = arith.constant dense<0.000000e+00> : vector<16x128xf32>
    %277 = tpu.matmul %276, %271, %cst_183 {dimension_numbers = #tpu.dot_dimension_numbers<[1], [0], [0], [1], [0, 0, 1, 1], [], []>} : vector<16x8xf32>, vector<8x128xf32>, vector<16x128xf32> -> vector<16x128xf32>
    %c2_184 = arith.constant 2 : index
    %c0_185 = arith.constant 0 : index
    %c0_186 = arith.constant 0 : index
    %278 = vector.load %arg31[%c2_184, %c0_185, %c0_186] : memref<3x16x8xf32, #tpu.memory_space<vmem>>, vector<1x16x8xf32>
    %279 = vector.shape_cast %278 : vector<1x16x8xf32> to vector<16x8xf32>
    %cst_187 = arith.constant dense<0.000000e+00> : vector<16x128xf32>
    %280 = tpu.matmul %279, %271, %cst_187 {dimension_numbers = #tpu.dot_dimension_numbers<[1], [0], [0], [1], [0, 0, 1, 1], [], []>} : vector<16x8xf32>, vector<8x128xf32>, vector<16x128xf32> -> vector<16x128xf32>
    %281 = tpu.concatenate %274, %277, %280 in 1 : vector<16x128xf32>, vector<16x128xf32>, vector<16x128xf32> -> vector<16x384xf32>
    %c0_188 = arith.constant 0 : index
    %c0_189 = arith.constant 0 : index
    %282 = vector.load %arg32[%c0_188, %c0_189] : memref<384x128xf32, #tpu.memory_space<vmem>>, vector<384x128xf32>
    %cst_190 = arith.constant dense<0.000000e+00> : vector<16x128xf32>
    %283 = tpu.matmul %281, %282, %cst_190 {dimension_numbers = #tpu.dot_dimension_numbers<[1], [0], [0], [1], [0, 0, 1, 1], [], []>} : vector<16x384xf32>, vector<384x128xf32>, vector<16x128xf32> -> vector<16x128xf32>
    %c0_191 = arith.constant 0 : index
    %c0_192 = arith.constant 0 : index
    %284 = vector.load %arg33[%c0_191, %c0_192] : memref<2x128xf32, #tpu.memory_space<vmem>>, vector<2x128xf32>
    %285 = vector.extract_strided_slice %284 {offsets = [0, 0], sizes = [1, 128], strides = [1, 1]} : vector<2x128xf32> to vector<1x128xf32>
    %286 = vector.extract_strided_slice %284 {offsets = [1, 0], sizes = [1, 128], strides = [1, 1]} : vector<2x128xf32> to vector<1x128xf32>
    %cst_193 = arith.constant dense<0.000000e+00> : vector<128xf32>
    %287 = vector.multi_reduction <add>, %283, %cst_193 [0] : vector<16x128xf32> to vector<128xf32>
    %288 = vector.shape_cast %287 : vector<128xf32> to vector<1x128xf32>
    %289 = arith.mulf %283, %283 : vector<16x128xf32>
    %cst_194 = arith.constant dense<0.000000e+00> : vector<128xf32>
    %290 = vector.multi_reduction <add>, %289, %cst_194 [0] : vector<16x128xf32> to vector<128xf32>
    %291 = vector.shape_cast %290 : vector<128xf32> to vector<1x128xf32>
    %292 = tpu.concatenate %288, %291 in 0 : vector<1x128xf32>, vector<1x128xf32> -> vector<2x128xf32>
    %c0_195 = arith.constant 0 : index
    %c0_196 = arith.constant 0 : index
    %293 = vector.load %arg34[%c0_195, %c0_196] : memref<128x128xf32, #tpu.memory_space<vmem>>, vector<128x128xf32>
    %cst_197 = arith.constant dense<0.000000e+00> : vector<2x128xf32>
    %294 = tpu.matmul %292, %293, %cst_197 {dimension_numbers = #tpu.dot_dimension_numbers<[1], [0], [0], [1], [0, 0, 1, 1], [], []>} : vector<2x128xf32>, vector<128x128xf32>, vector<2x128xf32> -> vector<2x128xf32>
    %295 = vector.extract_strided_slice %294 {offsets = [0, 0], sizes = [1, 128], strides = [1, 1]} : vector<2x128xf32> to vector<1x128xf32>
    %296 = vector.extract_strided_slice %294 {offsets = [1, 0], sizes = [1, 128], strides = [1, 1]} : vector<2x128xf32> to vector<1x128xf32>
    %297 = arith.mulf %295, %295 : vector<1x128xf32>
    %298 = arith.subf %296, %297 : vector<1x128xf32>
    %cst_198 = arith.constant 0.000000e+00 : f32
    %299 = vector.broadcast %cst_198 : f32 to vector<1x128xf32>
    %300 = arith.maximumf %298, %299 : vector<1x128xf32>
    %301 = vector.broadcast %295 : vector<1x128xf32> to vector<16x128xf32>
    %302 = arith.subf %283, %301 : vector<16x128xf32>
    %cst_199 = arith.constant 9.99999974E-6 : f32
    %303 = vector.broadcast %cst_199 : f32 to vector<1x128xf32>
    %304 = arith.addf %300, %303 : vector<1x128xf32>
    %305 = math.rsqrt %304 : vector<1x128xf32>
    %306 = arith.mulf %305, %285 : vector<1x128xf32>
    %307 = vector.broadcast %306 : vector<1x128xf32> to vector<16x128xf32>
    %308 = arith.mulf %302, %307 : vector<16x128xf32>
    %309 = vector.broadcast %286 : vector<1x128xf32> to vector<16x128xf32>
    %310 = arith.addf %308, %309 : vector<16x128xf32>
    %cst_200 = arith.constant 0.000000e+00 : f32
    %311 = vector.broadcast %cst_200 : f32 to vector<16x128xf32>
    %312 = arith.maximumf %310, %311 : vector<16x128xf32>
    %c0_201 = arith.constant 0 : index
    %c0_202 = arith.constant 0 : index
    %c0_203 = arith.constant 0 : index
    %313 = vector.load %arg35[%c0_201, %c0_202, %c0_203] : memref<3x32x16xf32, #tpu.memory_space<vmem>>, vector<1x32x16xf32>
    %314 = vector.shape_cast %313 : vector<1x32x16xf32> to vector<32x16xf32>
    %cst_204 = arith.constant dense<0.000000e+00> : vector<32x128xf32>
    %315 = tpu.matmul %314, %312, %cst_204 {dimension_numbers = #tpu.dot_dimension_numbers<[1], [0], [0], [1], [0, 0, 1, 1], [], []>} : vector<32x16xf32>, vector<16x128xf32>, vector<32x128xf32> -> vector<32x128xf32>
    %c1_205 = arith.constant 1 : index
    %c0_206 = arith.constant 0 : index
    %c0_207 = arith.constant 0 : index
    %316 = vector.load %arg35[%c1_205, %c0_206, %c0_207] : memref<3x32x16xf32, #tpu.memory_space<vmem>>, vector<1x32x16xf32>
    %317 = vector.shape_cast %316 : vector<1x32x16xf32> to vector<32x16xf32>
    %cst_208 = arith.constant dense<0.000000e+00> : vector<32x128xf32>
    %318 = tpu.matmul %317, %312, %cst_208 {dimension_numbers = #tpu.dot_dimension_numbers<[1], [0], [0], [1], [0, 0, 1, 1], [], []>} : vector<32x16xf32>, vector<16x128xf32>, vector<32x128xf32> -> vector<32x128xf32>
    %c2_209 = arith.constant 2 : index
    %c0_210 = arith.constant 0 : index
    %c0_211 = arith.constant 0 : index
    %319 = vector.load %arg35[%c2_209, %c0_210, %c0_211] : memref<3x32x16xf32, #tpu.memory_space<vmem>>, vector<1x32x16xf32>
    %320 = vector.shape_cast %319 : vector<1x32x16xf32> to vector<32x16xf32>
    %cst_212 = arith.constant dense<0.000000e+00> : vector<32x128xf32>
    %321 = tpu.matmul %320, %312, %cst_212 {dimension_numbers = #tpu.dot_dimension_numbers<[1], [0], [0], [1], [0, 0, 1, 1], [], []>} : vector<32x16xf32>, vector<16x128xf32>, vector<32x128xf32> -> vector<32x128xf32>
    %322 = tpu.concatenate %315, %318, %321 in 1 : vector<32x128xf32>, vector<32x128xf32>, vector<32x128xf32> -> vector<32x384xf32>
    %c0_213 = arith.constant 0 : index
    %c0_214 = arith.constant 0 : index
    %323 = vector.load %arg36[%c0_213, %c0_214] : memref<384x128xf32, #tpu.memory_space<vmem>>, vector<384x128xf32>
    %cst_215 = arith.constant dense<0.000000e+00> : vector<32x128xf32>
    %324 = tpu.matmul %322, %323, %cst_215 {dimension_numbers = #tpu.dot_dimension_numbers<[1], [0], [0], [1], [0, 0, 1, 1], [], []>} : vector<32x384xf32>, vector<384x128xf32>, vector<32x128xf32> -> vector<32x128xf32>
    %c0_216 = arith.constant 0 : index
    %c0_217 = arith.constant 0 : index
    %325 = vector.load %arg37[%c0_216, %c0_217] : memref<2x128xf32, #tpu.memory_space<vmem>>, vector<2x128xf32>
    %326 = vector.extract_strided_slice %325 {offsets = [0, 0], sizes = [1, 128], strides = [1, 1]} : vector<2x128xf32> to vector<1x128xf32>
    %327 = vector.extract_strided_slice %325 {offsets = [1, 0], sizes = [1, 128], strides = [1, 1]} : vector<2x128xf32> to vector<1x128xf32>
    %cst_218 = arith.constant dense<0.000000e+00> : vector<128xf32>
    %328 = vector.multi_reduction <add>, %324, %cst_218 [0] : vector<32x128xf32> to vector<128xf32>
    %329 = vector.shape_cast %328 : vector<128xf32> to vector<1x128xf32>
    %330 = arith.mulf %324, %324 : vector<32x128xf32>
    %cst_219 = arith.constant dense<0.000000e+00> : vector<128xf32>
    %331 = vector.multi_reduction <add>, %330, %cst_219 [0] : vector<32x128xf32> to vector<128xf32>
    %332 = vector.shape_cast %331 : vector<128xf32> to vector<1x128xf32>
    %333 = tpu.concatenate %329, %332 in 0 : vector<1x128xf32>, vector<1x128xf32> -> vector<2x128xf32>
    %c0_220 = arith.constant 0 : index
    %c0_221 = arith.constant 0 : index
    %334 = vector.load %arg38[%c0_220, %c0_221] : memref<128x128xf32, #tpu.memory_space<vmem>>, vector<128x128xf32>
    %cst_222 = arith.constant dense<0.000000e+00> : vector<2x128xf32>
    %335 = tpu.matmul %333, %334, %cst_222 {dimension_numbers = #tpu.dot_dimension_numbers<[1], [0], [0], [1], [0, 0, 1, 1], [], []>} : vector<2x128xf32>, vector<128x128xf32>, vector<2x128xf32> -> vector<2x128xf32>
    %336 = vector.extract_strided_slice %335 {offsets = [0, 0], sizes = [1, 128], strides = [1, 1]} : vector<2x128xf32> to vector<1x128xf32>
    %337 = vector.extract_strided_slice %335 {offsets = [1, 0], sizes = [1, 128], strides = [1, 1]} : vector<2x128xf32> to vector<1x128xf32>
    %338 = arith.mulf %336, %336 : vector<1x128xf32>
    %339 = arith.subf %337, %338 : vector<1x128xf32>
    %cst_223 = arith.constant 0.000000e+00 : f32
    %340 = vector.broadcast %cst_223 : f32 to vector<1x128xf32>
    %341 = arith.maximumf %339, %340 : vector<1x128xf32>
    %342 = vector.broadcast %336 : vector<1x128xf32> to vector<32x128xf32>
    %343 = arith.subf %324, %342 : vector<32x128xf32>
    %cst_224 = arith.constant 9.99999974E-6 : f32
    %344 = vector.broadcast %cst_224 : f32 to vector<1x128xf32>
    %345 = arith.addf %341, %344 : vector<1x128xf32>
    %346 = math.rsqrt %345 : vector<1x128xf32>
    %347 = arith.mulf %346, %326 : vector<1x128xf32>
    %348 = vector.broadcast %347 : vector<1x128xf32> to vector<32x128xf32>
    %349 = arith.mulf %343, %348 : vector<32x128xf32>
    %350 = vector.broadcast %327 : vector<1x128xf32> to vector<32x128xf32>
    %351 = arith.addf %349, %350 : vector<32x128xf32>
    %cst_225 = arith.constant 0.000000e+00 : f32
    %352 = vector.broadcast %cst_225 : f32 to vector<32x128xf32>
    %353 = arith.maximumf %351, %352 : vector<32x128xf32>
    %c0_226 = arith.constant 0 : index
    %c0_227 = arith.constant 0 : index
    %c0_228 = arith.constant 0 : index
    %354 = vector.load %arg39[%c0_226, %c0_227, %c0_228] : memref<3x64x32xf32, #tpu.memory_space<vmem>>, vector<1x64x32xf32>
    %355 = vector.shape_cast %354 : vector<1x64x32xf32> to vector<64x32xf32>
    %cst_229 = arith.constant dense<0.000000e+00> : vector<64x128xf32>
    %356 = tpu.matmul %355, %353, %cst_229 {dimension_numbers = #tpu.dot_dimension_numbers<[1], [0], [0], [1], [0, 0, 1, 1], [], []>} : vector<64x32xf32>, vector<32x128xf32>, vector<64x128xf32> -> vector<64x128xf32>
    %c1_230 = arith.constant 1 : index
    %c0_231 = arith.constant 0 : index
    %c0_232 = arith.constant 0 : index
    %357 = vector.load %arg39[%c1_230, %c0_231, %c0_232] : memref<3x64x32xf32, #tpu.memory_space<vmem>>, vector<1x64x32xf32>
    %358 = vector.shape_cast %357 : vector<1x64x32xf32> to vector<64x32xf32>
    %cst_233 = arith.constant dense<0.000000e+00> : vector<64x128xf32>
    %359 = tpu.matmul %358, %353, %cst_233 {dimension_numbers = #tpu.dot_dimension_numbers<[1], [0], [0], [1], [0, 0, 1, 1], [], []>} : vector<64x32xf32>, vector<32x128xf32>, vector<64x128xf32> -> vector<64x128xf32>
    %c2_234 = arith.constant 2 : index
    %c0_235 = arith.constant 0 : index
    %c0_236 = arith.constant 0 : index
    %360 = vector.load %arg39[%c2_234, %c0_235, %c0_236] : memref<3x64x32xf32, #tpu.memory_space<vmem>>, vector<1x64x32xf32>
    %361 = vector.shape_cast %360 : vector<1x64x32xf32> to vector<64x32xf32>
    %cst_237 = arith.constant dense<0.000000e+00> : vector<64x128xf32>
    %362 = tpu.matmul %361, %353, %cst_237 {dimension_numbers = #tpu.dot_dimension_numbers<[1], [0], [0], [1], [0, 0, 1, 1], [], []>} : vector<64x32xf32>, vector<32x128xf32>, vector<64x128xf32> -> vector<64x128xf32>
    %363 = tpu.concatenate %356, %359, %362 in 1 : vector<64x128xf32>, vector<64x128xf32>, vector<64x128xf32> -> vector<64x384xf32>
    %c0_238 = arith.constant 0 : index
    %c0_239 = arith.constant 0 : index
    %364 = vector.load %arg40[%c0_238, %c0_239] : memref<384x128xf32, #tpu.memory_space<vmem>>, vector<384x128xf32>
    %cst_240 = arith.constant dense<0.000000e+00> : vector<64x128xf32>
    %365 = tpu.matmul %363, %364, %cst_240 {dimension_numbers = #tpu.dot_dimension_numbers<[1], [0], [0], [1], [0, 0, 1, 1], [], []>} : vector<64x384xf32>, vector<384x128xf32>, vector<64x128xf32> -> vector<64x128xf32>
    %c0_241 = arith.constant 0 : index
    %c0_242 = arith.constant 0 : index
    %366 = vector.load %arg41[%c0_241, %c0_242] : memref<2x128xf32, #tpu.memory_space<vmem>>, vector<2x128xf32>
    %367 = vector.extract_strided_slice %366 {offsets = [0, 0], sizes = [1, 128], strides = [1, 1]} : vector<2x128xf32> to vector<1x128xf32>
    %368 = vector.extract_strided_slice %366 {offsets = [1, 0], sizes = [1, 128], strides = [1, 1]} : vector<2x128xf32> to vector<1x128xf32>
    %cst_243 = arith.constant dense<0.000000e+00> : vector<128xf32>
    %369 = vector.multi_reduction <add>, %365, %cst_243 [0] : vector<64x128xf32> to vector<128xf32>
    %370 = vector.shape_cast %369 : vector<128xf32> to vector<1x128xf32>
    %371 = arith.mulf %365, %365 : vector<64x128xf32>
    %cst_244 = arith.constant dense<0.000000e+00> : vector<128xf32>
    %372 = vector.multi_reduction <add>, %371, %cst_244 [0] : vector<64x128xf32> to vector<128xf32>
    %373 = vector.shape_cast %372 : vector<128xf32> to vector<1x128xf32>
    %374 = tpu.concatenate %370, %373 in 0 : vector<1x128xf32>, vector<1x128xf32> -> vector<2x128xf32>
    %c0_245 = arith.constant 0 : index
    %c0_246 = arith.constant 0 : index
    %375 = vector.load %arg42[%c0_245, %c0_246] : memref<128x128xf32, #tpu.memory_space<vmem>>, vector<128x128xf32>
    %cst_247 = arith.constant dense<0.000000e+00> : vector<2x128xf32>
    %376 = tpu.matmul %374, %375, %cst_247 {dimension_numbers = #tpu.dot_dimension_numbers<[1], [0], [0], [1], [0, 0, 1, 1], [], []>} : vector<2x128xf32>, vector<128x128xf32>, vector<2x128xf32> -> vector<2x128xf32>
    %377 = vector.extract_strided_slice %376 {offsets = [0, 0], sizes = [1, 128], strides = [1, 1]} : vector<2x128xf32> to vector<1x128xf32>
    %378 = vector.extract_strided_slice %376 {offsets = [1, 0], sizes = [1, 128], strides = [1, 1]} : vector<2x128xf32> to vector<1x128xf32>
    %379 = arith.mulf %377, %377 : vector<1x128xf32>
    %380 = arith.subf %378, %379 : vector<1x128xf32>
    %cst_248 = arith.constant 0.000000e+00 : f32
    %381 = vector.broadcast %cst_248 : f32 to vector<1x128xf32>
    %382 = arith.maximumf %380, %381 : vector<1x128xf32>
    %383 = vector.broadcast %377 : vector<1x128xf32> to vector<64x128xf32>
    %384 = arith.subf %365, %383 : vector<64x128xf32>
    %cst_249 = arith.constant 9.99999974E-6 : f32
    %385 = vector.broadcast %cst_249 : f32 to vector<1x128xf32>
    %386 = arith.addf %382, %385 : vector<1x128xf32>
    %387 = math.rsqrt %386 : vector<1x128xf32>
    %388 = arith.mulf %387, %367 : vector<1x128xf32>
    %389 = vector.broadcast %388 : vector<1x128xf32> to vector<64x128xf32>
    %390 = arith.mulf %384, %389 : vector<64x128xf32>
    %391 = vector.broadcast %368 : vector<1x128xf32> to vector<64x128xf32>
    %392 = arith.addf %390, %391 : vector<64x128xf32>
    %cst_250 = arith.constant 0.000000e+00 : f32
    %393 = vector.broadcast %cst_250 : f32 to vector<64x128xf32>
    %394 = arith.maximumf %392, %393 : vector<64x128xf32>
    %c0_251 = arith.constant 0 : index
    %c0_252 = arith.constant 0 : index
    %c0_253 = arith.constant 0 : index
    %395 = vector.load %arg43[%c0_251, %c0_252, %c0_253] : memref<2x64x64xf32, #tpu.memory_space<vmem>>, vector<1x64x64xf32>
    %396 = vector.shape_cast %395 : vector<1x64x64xf32> to vector<64x64xf32>
    %cst_254 = arith.constant dense<0.000000e+00> : vector<64x128xf32>
    %397 = tpu.matmul %396, %394, %cst_254 {dimension_numbers = #tpu.dot_dimension_numbers<[1], [0], [0], [1], [0, 0, 1, 1], [], []>} : vector<64x64xf32>, vector<64x128xf32>, vector<64x128xf32> -> vector<64x128xf32>
    %c1_255 = arith.constant 1 : index
    %c0_256 = arith.constant 0 : index
    %c0_257 = arith.constant 0 : index
    %398 = vector.load %arg43[%c1_255, %c0_256, %c0_257] : memref<2x64x64xf32, #tpu.memory_space<vmem>>, vector<1x64x64xf32>
    %399 = vector.shape_cast %398 : vector<1x64x64xf32> to vector<64x64xf32>
    %cst_258 = arith.constant dense<0.000000e+00> : vector<64x128xf32>
    %400 = tpu.matmul %399, %394, %cst_258 {dimension_numbers = #tpu.dot_dimension_numbers<[1], [0], [0], [1], [0, 0, 1, 1], [], []>} : vector<64x64xf32>, vector<64x128xf32>, vector<64x128xf32> -> vector<64x128xf32>
    %401 = tpu.concatenate %397, %394, %400 in 1 : vector<64x128xf32>, vector<64x128xf32>, vector<64x128xf32> -> vector<64x384xf32>
    %c0_259 = arith.constant 0 : index
    %c0_260 = arith.constant 0 : index
    %402 = vector.load %arg44[%c0_259, %c0_260] : memref<384x128xf32, #tpu.memory_space<vmem>>, vector<384x128xf32>
    %cst_261 = arith.constant dense<0.000000e+00> : vector<64x128xf32>
    %403 = tpu.matmul %401, %402, %cst_261 {dimension_numbers = #tpu.dot_dimension_numbers<[1], [0], [0], [1], [0, 0, 1, 1], [], []>} : vector<64x384xf32>, vector<384x128xf32>, vector<64x128xf32> -> vector<64x128xf32>
    %c0_262 = arith.constant 0 : index
    %c0_263 = arith.constant 0 : index
    %404 = vector.load %arg45[%c0_262, %c0_263] : memref<1x128xf32, #tpu.memory_space<vmem>>, vector<1x128xf32>
    %405 = vector.broadcast %404 : vector<1x128xf32> to vector<64x128xf32>
    %406 = arith.addf %403, %405 : vector<64x128xf32>
    %cst_264 = arith.constant 0.000000e+00 : f32
    %407 = vector.broadcast %cst_264 : f32 to vector<64x128xf32>
    %408 = arith.subf %407, %406 : vector<64x128xf32>
    %409 = math.exp %408 : vector<64x128xf32>
    %cst_265 = arith.constant 1.000000e+00 : f32
    %410 = vector.broadcast %cst_265 : f32 to vector<64x128xf32>
    %411 = arith.addf %410, %409 : vector<64x128xf32>
    %cst_266 = arith.constant 1.000000e+00 : f32
    %412 = vector.broadcast %cst_266 : f32 to vector<64x128xf32>
    %413 = arith.divf %412, %411 : vector<64x128xf32>
    %c0_267 = arith.constant 0 : index
    %c0_268 = arith.constant 0 : index
    %414 = vector.load %arg46[%c0_267, %c0_268] : memref<64x128xf32, #tpu.memory_space<vmem>>, vector<64x128xf32>
    tpu.vector_store %arg46[%c0_267, %c0_268], %413 {strides = array<i32>} : memref<64x128xf32, #tpu.memory_space<vmem>>, vector<64x128xf32>,
    return
  }
}

</mosaic_0001>

<llo_original>
// kernel: forward.1
$region0: #{forward.1}
  #allocation0 [shape = 'u32[]', space=smem, size = 0x4, offset = 0x4, fixed_abs, tag = 'smem constant byte address 0x4 - core index']
  #allocation1 [shape = 'u32[72,128]{1,0:T(1,128)}', space=vmem, size = 0x9000, scoped, tag = 'internal scratch']
  %s0 = inlined_call_operand.smem [shape: u32[47], index: -1, kind: input, shape index: {}]
  %s1 = sld [smem:[%s0]]
  %s2 = scalar_lea.smem %s0, 1
  %s3 = sld [smem:[%s2]]
  %s4 = scalar_lea.smem %s0, 2
  %s5 = sld [smem:[%s4]]
  %s6 = scalar_lea.smem %s0, 3
  %s7 = sld [smem:[%s6]]
  %s8 = scalar_lea.smem %s0, 4
  %s9 = sld [smem:[%s8]]
  %s10 = scalar_lea.smem %s0, 5
  %s11 = sld [smem:[%s10]]
  %s12 = scalar_lea.smem %s0, 6
  %s13 = sld [smem:[%s12]]
  %s14 = scalar_lea.smem %s0, 7
  %s15 = sld [smem:[%s14]]
  %s16 = scalar_lea.smem %s0, 8
  %s17 = sld [smem:[%s16]]
  %s18 = scalar_lea.smem %s0, 9
  %s19 = sld [smem:[%s18]]
  %s20 = scalar_lea.smem %s0, 10
  %s21 = sld [smem:[%s20]]
  %s22 = scalar_lea.smem %s0, 11
  %s23 = sld [smem:[%s22]]
  %s24 = scalar_lea.smem %s0, 12
  %s25 = sld [smem:[%s24]]
  %s26 = scalar_lea.smem %s0, 13
  %s27 = sld [smem:[%s26]]
  %s28 = scalar_lea.smem %s0, 14
  %s29 = sld [smem:[%s28]]
  %s30 = scalar_lea.smem %s0, 15
  %s31 = sld [smem:[%s30]]
  %s32 = scalar_lea.smem %s0, 16
  %s33 = sld [smem:[%s32]]
  %s34 = scalar_lea.smem %s0, 17
  %s35 = sld [smem:[%s34]]
  %s36 = scalar_lea.smem %s0, 18
  %s37 = sld [smem:[%s36]]
  %s38 = scalar_lea.smem %s0, 19
  %s39 = sld [smem:[%s38]]
  %s40 = scalar_lea.smem %s0, 20
  %s41 = sld [smem:[%s40]]
  %s42 = scalar_lea.smem %s0, 21
  %s43 = sld [smem:[%s42]]
  %s44 = scalar_lea.smem %s0, 22
  %s45 = sld [smem:[%s44]]
  %s46 = scalar_lea.smem %s0, 23
  %s47 = sld [smem:[%s46]]
  %s48 = scalar_lea.smem %s0, 24
  %s49 = sld [smem:[%s48]]
  %s50 = scalar_lea.smem %s0, 25
  %s51 = sld [smem:[%s50]]
  %s52 = scalar_lea.smem %s0, 26
  %s53 = sld [smem:[%s52]]
  %s54 = scalar_lea.smem %s0, 27
  %s55 = sld [smem:[%s54]]
  %s56 = scalar_lea.smem %s0, 28
  %s57 = sld [smem:[%s56]]
  %s58 = scalar_lea.smem %s0, 29
  %s59 = sld [smem:[%s58]]
  %s60 = scalar_lea.smem %s0, 30
  %s61 = sld [smem:[%s60]]
  %s62 = scalar_lea.smem %s0, 31
  %s63 = sld [smem:[%s62]]
  %s64 = scalar_lea.smem %s0, 32
  %s65 = sld [smem:[%s64]]
  %s66 = scalar_lea.smem %s0, 33
  %s67 = sld [smem:[%s66]]
  %s68 = scalar_lea.smem %s0, 34
  %s69 = sld [smem:[%s68]]
  %s70 = scalar_lea.smem %s0, 35
  %s71 = sld [smem:[%s70]]
  %s72 = scalar_lea.smem %s0, 36
  %s73 = sld [smem:[%s72]]
  %s74 = scalar_lea.smem %s0, 37
  %s75 = sld [smem:[%s74]]
  %s76 = scalar_lea.smem %s0, 38
  %s77 = sld [smem:[%s76]]
  %s78 = scalar_lea.smem %s0, 39
  %s79 = sld [smem:[%s78]]
  %s80 = scalar_lea.smem %s0, 40
  %s81 = sld [smem:[%s80]]
  %s82 = scalar_lea.smem %s0, 41
  %s83 = sld [smem:[%s82]]
  %s84 = scalar_lea.smem %s0, 42
  %s85 = sld [smem:[%s84]]
  %s86 = scalar_lea.smem %s0, 43
  %s87 = sld [smem:[%s86]]
  %s88 = scalar_lea.smem %s0, 44
  %s89 = sld [smem:[%s88]]
  %s90 = scalar_lea.smem %s0, 45
  %s91 = sld [smem:[%s90]]
  %s92 = scalar_lea.smem %s0, 46
  %s93 = sld [smem:[%s92]]
  %s94 = sld [smem:[#allocation0]]
  $region282: #{forward.1} parent=0
    _
  %s96 = ssub.s32 1, %s94
  %s97 = scalar_select 0, %s96, %s94
  $region1: #{forward.1} parent=0
    #allocation2 [shape = 'u8[49152]{0}', space=vmem, size = 0xc000, scoped, tag = 'input window, operand 1, single buffered']
    #allocation3 [shape = 's32[1]{0}', space=sflag, size = 0x4, scoped, tag = 'scoped memory for forward.1']
    #allocation4 [shape = 'u8[24576]{0}', space=vmem, size = 0x6000, scoped, tag = 'input window, operand 5, single buffered']
    #allocation5 [shape = 's32[1]{0}', space=sflag, size = 0x4, scoped, tag = 'scoped memory for forward.1']
    #allocation6 [shape = 'u8[196608]{0}', space=vmem, size = 0x30000, scoped, tag = 'input window, operand 10, single buffered']
    #allocation7 [shape = 'u8[196608]{0}', space=vmem, size = 0x30000, scoped, tag = 'input window, operand 14, single buffered']
    #allocation8 [shape = 's32[1]{0}', space=sflag, size = 0x4, scoped, tag = 'scoped memory for forward.1']
    #allocation9 [shape = 'u8[65536]{0}', space=vmem, size = 0x10000, scoped, tag = 'input window, operand 16, single buffered']
    #allocation10 [shape = 'u8[65536]{0}', space=vmem, size = 0x10000, scoped, tag = 'input window, operand 20, single buffered']
    #allocation11 [shape = 's32[1]{0}', space=sflag, size = 0x4, scoped, tag = 'scoped memory for forward.1']
    #allocation12 [shape = 'u8[65536]{0}', space=vmem, size = 0x10000, scoped, tag = 'input window, operand 21, single buffered']
    #allocation13 [shape = 'u8[131072]{0}', space=vmem, size = 0x20000, scoped, tag = 'input window, operand 24, single buffered']
    #allocation14 [shape = 's32[1]{0}', space=sflag, size = 0x4, scoped, tag = 'scoped memory for forward.1']
    #allocation15 [shape = 'u8[65536]{0}', space=vmem, size = 0x10000, scoped, tag = 'input window, operand 26, single buffered']
    #allocation16 [shape = 'u8[196608]{0}', space=vmem, size = 0x30000, scoped, tag = 'input window, operand 28, single buffered']
    #allocation17 [shape = 's32[1]{0}', space=sflag, size = 0x4, scoped, tag = 'scoped memory for forward.1']
    #allocation18 [shape = 'u8[65536]{0}', space=vmem, size = 0x10000, scoped, tag = 'input window, operand 30, single buffered']
    #allocation19 [shape = 'u8[196608]{0}', space=vmem, size = 0x30000, scoped, tag = 'input window, operand 32, single buffered']
    #allocation20 [shape = 's32[1]{0}', space=sflag, size = 0x4, scoped, tag = 'scoped memory for forward.1']
    #allocation21 [shape = 'u8[65536]{0}', space=vmem, size = 0x10000, scoped, tag = 'input window, operand 34, single buffered']
    #allocation22 [shape = 'u8[196608]{0}', space=vmem, size = 0x30000, scoped, tag = 'input window, operand 36, single buffered']
    #allocation23 [shape = 's32[1]{0}', space=sflag, size = 0x4, scoped, tag = 'scoped memory for forward.1']
    #allocation24 [shape = 'u8[1024]{0}', space=vmem, size = 0x400, scoped, tag = 'input window, operand 37, single buffered']
    #allocation25 [shape = 'u8[65536]{0}', space=vmem, size = 0x10000, scoped, tag = 'input window, operand 38, single buffered']
    #allocation26 [shape = 's32[1]{0}', space=sflag, size = 0x4, scoped, tag = 'scoped memory for forward.1']
    #allocation27 [shape = 'u8[196608]{0}', space=vmem, size = 0x30000, scoped, tag = 'input window, operand 40, single buffered']
    #allocation28 [shape = 'u8[1024]{0}', space=vmem, size = 0x400, scoped, tag = 'input window, operand 41, single buffered']
    #allocation29 [shape = 's32[1]{0}', space=sflag, size = 0x4, scoped, tag = 'scoped memory for forward.1']
    #allocation30 [shape = 'u8[65536]{0}', space=vmem, size = 0x10000, scoped, tag = 'input window, operand 42, single buffered']
    #allocation31 [shape = 'u8[65536]{0}', space=vmem, size = 0x10000, scoped, tag = 'input window, operand 43, single buffered']
    #allocation32 [shape = 's32[1]{0}', space=sflag, size = 0x4, scoped, tag = 'scoped memory for forward.1']
    #allocation33 [shape = 'u8[196608]{0}', space=vmem, size = 0x30000, scoped, tag = 'input window, operand 44, single buffered']
    #allocation34 [shape = 'u8[512]{0}', space=vmem, size = 0x400, scoped, tag = 'input window, operand 45, single buffered']
    #allocation35 [shape = 's32[1]{0}', space=sflag, size = 0x4, scoped, tag = 'scoped memory for forward.1']
    %98 = vsyncpa [#allocation3], 0
    %99 = vsyncpa [#allocation5], 0
    %100 = vsyncpa [#allocation8], 0
    %101 = vsyncpa [#allocation11], 0
    %102 = vsyncpa [#allocation14], 0
    %103 = vsyncpa [#allocation17], 0
    %104 = vsyncpa [#allocation20], 0
    %105 = vsyncpa [#allocation23], 0
    %106 = vsyncpa [#allocation26], 0
    %107 = vsyncpa [#allocation29], 0
    %108 = vsyncpa [#allocation32], 0
    %109 = vsyncpa [#allocation35], 0
    // Predicated region
    $region2: #{forward.1} parent=1 // pred_check
      _
    $region3: #{forward.1} parent=1 // pred_check_branch
      %111 = sbr.rel (0) target = $region5
    $region4: #{forward.1} parent=1 // pred_region
      _
    $region5: #{forward.1} parent=1 // pred_fallthru
      _
    // Predicated region
    $region6: #{forward.1} parent=1 // pred_check
      _
    $region7: #{forward.1} parent=1 // pred_check_branch
      %113 = sbr.rel (0) target = $region9
    $region8: #{forward.1} parent=1 // pred_region
      %115 = vsyncadd [#allocation3], 0
      %s116 = sshll.u32 %s3, 4
      %s117 = int_to_ptr.hbm [resolvable:$true] %s116
      %s118 = sshll.u32 [#allocation2], 4
      %s119 = int_to_ptr.vmem [resolvable:$true] %s118
      %124 = dma.hbm_to_vmem [thread:$0]  %s117, 1536, %s119, [#allocation3], 128, 128, 8
    $region9: #{forward.1} parent=1 // pred_fallthru
      _
    // Predicated region
    $region10: #{forward.1} parent=1 // pred_check
      _
    $region11: #{forward.1} parent=1 // pred_check_branch
      %126 = sbr.rel (0) target = $region13
    $region12: #{forward.1} parent=1 // pred_region
      _
    $region13: #{forward.1} parent=1 // pred_fallthru
      _
    // Predicated region
    $region14: #{forward.1} parent=1 // pred_check
      _
    $region15: #{forward.1} parent=1 // pred_check_branch
      %128 = sbr.rel (0) target = $region17
    $region16: #{forward.1} parent=1 // pred_region
      _
    $region17: #{forward.1} parent=1 // pred_fallthru
      _
    // Predicated region
    $region18: #{forward.1} parent=1 // pred_check
      _
    $region19: #{forward.1} parent=1 // pred_check_branch
      %130 = sbr.rel (0) target = $region21
    $region20: #{forward.1} parent=1 // pred_region
      _
    $region21: #{forward.1} parent=1 // pred_fallthru
      _
    // Predicated region
    $region22: #{forward.1} parent=1 // pred_check
      _
    $region23: #{forward.1} parent=1 // pred_check_branch
      %132 = sbr.rel (0) target = $region25
    $region24: #{forward.1} parent=1 // pred_region
      %134 = vsyncadd [#allocation5], 0
      %s135 = sshll.u32 %s11, 4
      %s136 = int_to_ptr.hbm [resolvable:$true] %s135
      %s137 = sshll.u32 [#allocation4], 4
      %s138 = int_to_ptr.vmem [resolvable:$true] %s137
      %143 = dma.hbm_to_vmem [thread:$0]  %s136, 768, %s138, [#allocation5], 128, 128, 8
    $region25: #{forward.1} parent=1 // pred_fallthru
      _
    // Predicated region
    $region26: #{forward.1} parent=1 // pred_check
      _
    $region27: #{forward.1} parent=1 // pred_check_branch
      %145 = sbr.rel (0) target = $region29
    $region28: #{forward.1} parent=1 // pred_region
      _
    $region29: #{forward.1} parent=1 // pred_fallthru
      _
    // Predicated region
    $region30: #{forward.1} parent=1 // pred_check
      _
    $region31: #{forward.1} parent=1 // pred_check_branch
      %147 = sbr.rel (0) target = $region33
    $region32: #{forward.1} parent=1 // pred_region
      _
    $region33: #{forward.1} parent=1 // pred_fallthru
      _
    // Predicated region
    $region34: #{forward.1} parent=1 // pred_check
      _
    $region35: #{forward.1} parent=1 // pred_check_branch
      %149 = sbr.rel (0) target = $region37
    $region36: #{forward.1} parent=1 // pred_region
      _
    $region37: #{forward.1} parent=1 // pred_fallthru
      _
    // Predicated region
    $region38: #{forward.1} parent=1 // pred_check
      _
    $region39: #{forward.1} parent=1 // pred_check_branch
      %151 = sbr.rel (0) target = $region41
    $region40: #{forward.1} parent=1 // pred_region
      _
    $region41: #{forward.1} parent=1 // pred_fallthru
      _
    // Predicated region
    $region42: #{forward.1} parent=1 // pred_check
      _
    $region43: #{forward.1} parent=1 // pred_check_branch
      %153 = sbr.rel (0) target = $region45
    $region44: #{forward.1} parent=1 // pred_region
      %155 = vsyncadd [#allocation5], 0
      %s156 = sshll.u32 %s21, 4
      %s157 = int_to_ptr.hbm [resolvable:$true] %s156
      %s158 = sshll.u32 [#allocation6], 4
      %s159 = int_to_ptr.vmem [resolvable:$true] %s158
      %164 = dma.hbm_to_vmem [thread:$0]  %s157, 6144, %s159, [#allocation5], 128, 128, 8
    $region45: #{forward.1} parent=1 // pred_fallthru
      _
    // Predicated region
    $region46: #{forward.1} parent=1 // pred_check
      _
    $region47: #{forward.1} parent=1 // pred_check_branch
      %166 = sbr.rel (0) target = $region49
    $region48: #{forward.1} parent=1 // pred_region
      _
    $region49: #{forward.1} parent=1 // pred_fallthru
      _
    // Predicated region
    $region50: #{forward.1} parent=1 // pred_check
      _
    $region51: #{forward.1} parent=1 // pred_check_branch
      %168 = sbr.rel (0) target = $region53
    $region52: #{forward.1} parent=1 // pred_region
      _
    $region53: #{forward.1} parent=1 // pred_fallthru
      _
    // Predicated region
    $region54: #{forward.1} parent=1 // pred_check
      _
    $region55: #{forward.1} parent=1 // pred_check_branch
      %170 = sbr.rel (0) target = $region57
    $region56: #{forward.1} parent=1 // pred_region
      _
    $region57: #{forward.1} parent=1 // pred_fallthru
      _
    // Predicated region
    $region58: #{forward.1} parent=1 // pred_check
      _
    $region59: #{forward.1} parent=1 // pred_check_branch
      %172 = sbr.rel (0) target = $region61
    $region60: #{forward.1} parent=1 // pred_region
      %174 = vsyncadd [#allocation8], 0
      %s175 = sshll.u32 %s29, 4
      %s176 = int_to_ptr.hbm [resolvable:$true] %s175
      %s177 = sshll.u32 [#allocation7], 4
      %s178 = int_to_ptr.vmem [resolvable:$true] %s177
      %183 = dma.hbm_to_vmem [thread:$0]  %s176, 6144, %s178, [#allocation8], 128, 128, 8
    $region61: #{forward.1} parent=1 // pred_fallthru
      _
    // Predicated region
    $region62: #{forward.1} parent=1 // pred_check
      _
    $region63: #{forward.1} parent=1 // pred_check_branch
      %185 = sbr.rel (0) target = $region65
    $region64: #{forward.1} parent=1 // pred_region
      _
    $region65: #{forward.1} parent=1 // pred_fallthru
      _
    // Predicated region
    $region66: #{forward.1} parent=1 // pred_check
      _
    $region67: #{forward.1} parent=1 // pred_check_branch
      %187 = sbr.rel (0) target = $region69
    $region68: #{forward.1} parent=1 // pred_region
      %189 = vsyncadd [#allocation8], 0
      %s190 = sshll.u32 %s33, 4
      %s191 = int_to_ptr.hbm [resolvable:$true] %s190
      %s192 = sshll.u32 [#allocation9], 4
      %s193 = int_to_ptr.vmem [resolvable:$true] %s192
      %198 = dma.hbm_to_vmem [thread:$0]  %s191, 2048, %s193, [#allocation8], 128, 128, 8
    $region69: #{forward.1} parent=1 // pred_fallthru
      _
    // Predicated region
    $region70: #{forward.1} parent=1 // pred_check
      _
    $region71: #{forward.1} parent=1 // pred_check_branch
      %200 = sbr.rel (0) target = $region73
    $region72: #{forward.1} parent=1 // pred_region
      _
    $region73: #{forward.1} parent=1 // pred_fallthru
      _
    // Predicated region
    $region74: #{forward.1} parent=1 // pred_check
      _
    $region75: #{forward.1} parent=1 // pred_check_branch
      %202 = sbr.rel (0) target = $region77
    $region76: #{forward.1} parent=1 // pred_region
      _
    $region77: #{forward.1} parent=1 // pred_fallthru
      _
    // Predicated region
    $region78: #{forward.1} parent=1 // pred_check
      _
    $region79: #{forward.1} parent=1 // pred_check_branch
      %204 = sbr.rel (0) target = $region81
    $region80: #{forward.1} parent=1 // pred_region
      _
    $region81: #{forward.1} parent=1 // pred_fallthru
      _
    // Predicated region
    $region82: #{forward.1} parent=1 // pred_check
      _
    $region83: #{forward.1} parent=1 // pred_check_branch
      %206 = sbr.rel (0) target = $region85
    $region84: #{forward.1} parent=1 // pred_region
      %208 = vsyncadd [#allocation11], 0
      %s209 = sshll.u32 %s41, 4
      %s210 = int_to_ptr.hbm [resolvable:$true] %s209
      %s211 = sshll.u32 [#allocation10], 4
      %s212 = int_to_ptr.vmem [resolvable:$true] %s211
      %217 = dma.hbm_to_vmem [thread:$0]  %s210, 2048, %s212, [#allocation11], 128, 128, 8
    $region85: #{forward.1} parent=1 // pred_fallthru
      _
    // Predicated region
    $region86: #{forward.1} parent=1 // pred_check
      _
    $region87: #{forward.1} parent=1 // pred_check_branch
      %219 = sbr.rel (0) target = $region89
    $region88: #{forward.1} parent=1 // pred_region
      %221 = vsyncadd [#allocation11], 0
      %s222 = sshll.u32 %s43, 4
      %s223 = int_to_ptr.hbm [resolvable:$true] %s222
      %s224 = sshll.u32 [#allocation12], 4
      %s225 = int_to_ptr.vmem [resolvable:$true] %s224
      %230 = dma.hbm_to_vmem [thread:$0]  %s223, 2048, %s225, [#allocation11], 128, 128, 8
    $region89: #{forward.1} parent=1 // pred_fallthru
      _
    // Predicated region
    $region90: #{forward.1} parent=1 // pred_check
      _
    $region91: #{forward.1} parent=1 // pred_check_branch
      %232 = sbr.rel (0) target = $region93
    $region92: #{forward.1} parent=1 // pred_region
      _
    $region93: #{forward.1} parent=1 // pred_fallthru
      _
    // Predicated region
    $region94: #{forward.1} parent=1 // pred_check
      _
    $region95: #{forward.1} parent=1 // pred_check_branch
      %234 = sbr.rel (0) target = $region97
    $region96: #{forward.1} parent=1 // pred_region
      _
    $region97: #{forward.1} parent=1 // pred_fallthru
      _
    // Predicated region
    $region98: #{forward.1} parent=1 // pred_check
      _
    $region99: #{forward.1} parent=1 // pred_check_branch
      %236 = sbr.rel (0) target = $region101
    $region100: #{forward.1} parent=1 // pred_region
      %238 = vsyncadd [#allocation14], 0
      %s239 = sshll.u32 %s49, 4
      %s240 = int_to_ptr.hbm [resolvable:$true] %s239
      %s241 = sshll.u32 [#allocation13], 4
      %s242 = int_to_ptr.vmem [resolvable:$true] %s241
      %247 = dma.hbm_to_vmem [thread:$0]  %s240, 4096, %s242, [#allocation14], 128, 128, 8
    $region101: #{forward.1} parent=1 // pred_fallthru
      _
    // Predicated region
    $region102: #{forward.1} parent=1 // pred_check
      _
    $region103: #{forward.1} parent=1 // pred_check_branch
      %249 = sbr.rel (0) target = $region105
    $region104: #{forward.1} parent=1 // pred_region
      _
    $region105: #{forward.1} parent=1 // pred_fallthru
      _
    // Predicated region
    $region106: #{forward.1} parent=1 // pred_check
      _
    $region107: #{forward.1} parent=1 // pred_check_branch
      %251 = sbr.rel (0) target = $region109
    $region108: #{forward.1} parent=1 // pred_region
      %253 = vsyncadd [#allocation14], 0
      %s254 = sshll.u32 %s53, 4
      %s255 = int_to_ptr.hbm [resolvable:$true] %s254
      %s256 = sshll.u32 [#allocation15], 4
      %s257 = int_to_ptr.vmem [resolvable:$true] %s256
      %262 = dma.hbm_to_vmem [thread:$0]  %s255, 2048, %s257, [#allocation14], 128, 128, 8
    $region109: #{forward.1} parent=1 // pred_fallthru
      _
    // Predicated region
    $region110: #{forward.1} parent=1 // pred_check
      _
    $region111: #{forward.1} parent=1 // pred_check_branch
      %264 = sbr.rel (0) target = $region113
    $region112: #{forward.1} parent=1 // pred_region
      _
    $region113: #{forward.1} parent=1 // pred_fallthru
      _
    // Predicated region
    $region114: #{forward.1} parent=1 // pred_check
      _
    $region115: #{forward.1} parent=1 // pred_check_branch
      %266 = sbr.rel (0) target = $region117
    $region116: #{forward.1} parent=1 // pred_region
      %268 = vsyncadd [#allocation17], 0
      %s269 = sshll.u32 %s57, 4
      %s270 = int_to_ptr.hbm [resolvable:$true] %s269
      %s271 = sshll.u32 [#allocation16], 4
      %s272 = int_to_ptr.vmem [resolvable:$true] %s271
      %277 = dma.hbm_to_vmem [thread:$0]  %s270, 6144, %s272, [#allocation17], 128, 128, 8
    $region117: #{forward.1} parent=1 // pred_fallthru
      _
    // Predicated region
    $region118: #{forward.1} parent=1 // pred_check
      _
    $region119: #{forward.1} parent=1 // pred_check_branch
      %279 = sbr.rel (0) target = $region121
    $region120: #{forward.1} parent=1 // pred_region
      _
    $region121: #{forward.1} parent=1 // pred_fallthru
      _
    // Predicated region
    $region122: #{forward.1} parent=1 // pred_check
      _
    $region123: #{forward.1} parent=1 // pred_check_branch
      %281 = sbr.rel (0) target = $region125
    $region124: #{forward.1} parent=1 // pred_region
      %283 = vsyncadd [#allocation17], 0
      %s284 = sshll.u32 %s61, 4
      %s285 = int_to_ptr.hbm [resolvable:$true] %s284
      %s286 = sshll.u32 [#allocation18], 4
      %s287 = int_to_ptr.vmem [resolvable:$true] %s286
      %292 = dma.hbm_to_vmem [thread:$0]  %s285, 2048, %s287, [#allocation17], 128, 128, 8
    $region125: #{forward.1} parent=1 // pred_fallthru
      _
    // Predicated region
    $region126: #{forward.1} parent=1 // pred_check
      _
    $region127: #{forward.1} parent=1 // pred_check_branch
      %294 = sbr.rel (0) target = $region129
    $region128: #{forward.1} parent=1 // pred_region
      _
    $region129: #{forward.1} parent=1 // pred_fallthru
      _
    // Predicated region
    $region130: #{forward.1} parent=1 // pred_check
      _
    $region131: #{forward.1} parent=1 // pred_check_branch
      %296 = sbr.rel (0) target = $region133
    $region132: #{forward.1} parent=1 // pred_region
      %298 = vsyncadd [#allocation20], 0
      %s299 = sshll.u32 %s65, 4
      %s300 = int_to_ptr.hbm [resolvable:$true] %s299
      %s301 = sshll.u32 [#allocation19], 4
      %s302 = int_to_ptr.vmem [resolvable:$true] %s301
      %307 = dma.hbm_to_vmem [thread:$0]  %s300, 6144, %s302, [#allocation20], 128, 128, 8
    $region133: #{forward.1} parent=1 // pred_fallthru
      _
    // Predicated region
    $region134: #{forward.1} parent=1 // pred_check
      _
    $region135: #{forward.1} parent=1 // pred_check_branch
      %309 = sbr.rel (0) target = $region137
    $region136: #{forward.1} parent=1 // pred_region
      _
    $region137: #{forward.1} parent=1 // pred_fallthru
      _
    // Predicated region
    $region138: #{forward.1} parent=1 // pred_check
      _
    $region139: #{forward.1} parent=1 // pred_check_branch
      %311 = sbr.rel (0) target = $region141
    $region140: #{forward.1} parent=1 // pred_region
      %313 = vsyncadd [#allocation20], 0
      %s314 = sshll.u32 %s69, 4
      %s315 = int_to_ptr.hbm [resolvable:$true] %s314
      %s316 = sshll.u32 [#allocation21], 4
      %s317 = int_to_ptr.vmem [resolvable:$true] %s316
      %322 = dma.hbm_to_vmem [thread:$0]  %s315, 2048, %s317, [#allocation20], 128, 128, 8
    $region141: #{forward.1} parent=1 // pred_fallthru
      _
    // Predicated region
    $region142: #{forward.1} parent=1 // pred_check
      _
    $region143: #{forward.1} parent=1 // pred_check_branch
      %324 = sbr.rel (0) target = $region145
    $region144: #{forward.1} parent=1 // pred_region
      _
    $region145: #{forward.1} parent=1 // pred_fallthru
      _
    // Predicated region
    $region146: #{forward.1} parent=1 // pred_check
      _
    $region147: #{forward.1} parent=1 // pred_check_branch
      %326 = sbr.rel (0) target = $region149
    $region148: #{forward.1} parent=1 // pred_region
      %328 = vsyncadd [#allocation23], 0
      %s329 = sshll.u32 %s73, 4
      %s330 = int_to_ptr.hbm [resolvable:$true] %s329
      %s331 = sshll.u32 [#allocation22], 4
      %s332 = int_to_ptr.vmem [resolvable:$true] %s331
      %337 = dma.hbm_to_vmem [thread:$0]  %s330, 6144, %s332, [#allocation23], 128, 128, 8
    $region149: #{forward.1} parent=1 // pred_fallthru
      _
    // Predicated region
    $region150: #{forward.1} parent=1 // pred_check
      _
    $region151: #{forward.1} parent=1 // pred_check_branch
      %339 = sbr.rel (0) target = $region153
    $region152: #{forward.1} parent=1 // pred_region
      %341 = vsyncadd [#allocation23], 0
      %s343 = sshll.u32 %s75, 4
      %s344 = int_to_ptr.hbm [resolvable:$true] %s343
      %s345 = sshll.u32 [#allocation24], 4
      %s346 = int_to_ptr.vmem [resolvable:$true] %s345
      %348 = dma.hbm_to_vmem [thread:$0]  %s344, 32, %s346, [#allocation23]
    $region153: #{forward.1} parent=1 // pred_fallthru
      _
    // Predicated region
    $region154: #{forward.1} parent=1 // pred_check
      _
    $region155: #{forward.1} parent=1 // pred_check_branch
      %350 = sbr.rel (0) target = $region157
    $region156: #{forward.1} parent=1 // pred_region
      %352 = vsyncadd [#allocation26], 0
      %s353 = sshll.u32 %s77, 4
      %s354 = int_to_ptr.hbm [resolvable:$true] %s353
      %s355 = sshll.u32 [#allocation25], 4
      %s356 = int_to_ptr.vmem [resolvable:$true] %s355
      %361 = dma.hbm_to_vmem [thread:$0]  %s354, 2048, %s356, [#allocation26], 128, 128, 8
    $region157: #{forward.1} parent=1 // pred_fallthru
      _
    // Predicated region
    $region158: #{forward.1} parent=1 // pred_check
      _
    $region159: #{forward.1} parent=1 // pred_check_branch
      %363 = sbr.rel (0) target = $region161
    $region160: #{forward.1} parent=1 // pred_region
      _
    $region161: #{forward.1} parent=1 // pred_fallthru
      _
    // Predicated region
    $region162: #{forward.1} parent=1 // pred_check
      _
    $region163: #{forward.1} parent=1 // pred_check_branch
      %365 = sbr.rel (0) target = $region165
    $region164: #{forward.1} parent=1 // pred_region
      %367 = vsyncadd [#allocation26], 0
      %s368 = sshll.u32 %s81, 4
      %s369 = int_to_ptr.hbm [resolvable:$true] %s368
      %s370 = sshll.u32 [#allocation27], 4
      %s371 = int_to_ptr.vmem [resolvable:$true] %s370
      %376 = dma.hbm_to_vmem [thread:$0]  %s369, 6144, %s371, [#allocation26], 128, 128, 8
    $region165: #{forward.1} parent=1 // pred_fallthru
      _
    // Predicated region
    $region166: #{forward.1} parent=1 // pred_check
      _
    $region167: #{forward.1} parent=1 // pred_check_branch
      %378 = sbr.rel (0) target = $region169
    $region168: #{forward.1} parent=1 // pred_region
      %380 = vsyncadd [#allocation29], 0
      %s382 = sshll.u32 %s83, 4
      %s383 = int_to_ptr.hbm [resolvable:$true] %s382
      %s384 = sshll.u32 [#allocation28], 4
      %s385 = int_to_ptr.vmem [resolvable:$true] %s384
      %387 = dma.hbm_to_vmem [thread:$0]  %s383, 32, %s385, [#allocation29]
    $region169: #{forward.1} parent=1 // pred_fallthru
      _
    // Predicated region
    $region170: #{forward.1} parent=1 // pred_check
      _
    $region171: #{forward.1} parent=1 // pred_check_branch
      %389 = sbr.rel (0) target = $region173
    $region172: #{forward.1} parent=1 // pred_region
      %391 = vsyncadd [#allocation29], 0
      %s392 = sshll.u32 %s85, 4
      %s393 = int_to_ptr.hbm [resolvable:$true] %s392
      %s394 = sshll.u32 [#allocation30], 4
      %s395 = int_to_ptr.vmem [resolvable:$true] %s394
      %400 = dma.hbm_to_vmem [thread:$0]  %s393, 2048, %s395, [#allocation29], 128, 128, 8
    $region173: #{forward.1} parent=1 // pred_fallthru
      _
    // Predicated region
    $region174: #{forward.1} parent=1 // pred_check
      _
    $region175: #{forward.1} parent=1 // pred_check_branch
      %402 = sbr.rel (0) target = $region177
    $region176: #{forward.1} parent=1 // pred_region
      %404 = vsyncadd [#allocation32], 0
      %s405 = sshll.u32 %s87, 4
      %s406 = int_to_ptr.hbm [resolvable:$true] %s405
      %s407 = sshll.u32 [#allocation31], 4
      %s408 = int_to_ptr.vmem [resolvable:$true] %s407
      %413 = dma.hbm_to_vmem [thread:$0]  %s406, 2048, %s408, [#allocation32], 128, 128, 8
    $region177: #{forward.1} parent=1 // pred_fallthru
      _
    // Predicated region
    $region178: #{forward.1} parent=1 // pred_check
      _
    $region179: #{forward.1} parent=1 // pred_check_branch
      %415 = sbr.rel (0) target = $region181
    $region180: #{forward.1} parent=1 // pred_region
      %417 = vsyncadd [#allocation32], 0
      %s418 = sshll.u32 %s89, 4
      %s419 = int_to_ptr.hbm [resolvable:$true] %s418
      %s420 = sshll.u32 [#allocation33], 4
      %s421 = int_to_ptr.vmem [resolvable:$true] %s420
      %426 = dma.hbm_to_vmem [thread:$0]  %s419, 6144, %s421, [#allocation32], 128, 128, 8
    $region181: #{forward.1} parent=1 // pred_fallthru
      _
    // Predicated region
    $region182: #{forward.1} parent=1 // pred_check
      _
    $region183: #{forward.1} parent=1 // pred_check_branch
      %428 = sbr.rel (0) target = $region185
    $region184: #{forward.1} parent=1 // pred_region
      %430 = vsyncadd [#allocation35], 0
      %s432 = sshll.u32 %s91, 4
      %s433 = int_to_ptr.hbm [resolvable:$true] %s432
      %s434 = sshll.u32 [#allocation34], 4
      %s435 = int_to_ptr.vmem [resolvable:$true] %s434
      %437 = dma.hbm_to_vmem [thread:$0]  %s433, 16, %s435, [#allocation35]
    $region185: #{forward.1} parent=1 // pred_fallthru
      _
    // Predicated region
    $region186: #{forward.1} parent=1 // pred_check
      _
    $region187: #{forward.1} parent=1 // pred_check_branch
      %439 = sbr.rel (0) target = $region189
    $region188: #{forward.1} parent=1 // pred_region
      %441 = dma.done [#allocation3], 1536
    $region189: #{forward.1} parent=1 // pred_fallthru
      _
    // Predicated region
    $region190: #{forward.1} parent=1 // pred_check
      _
    $region191: #{forward.1} parent=1 // pred_check_branch
      %443 = sbr.rel (0) target = $region193
    $region192: #{forward.1} parent=1 // pred_region
      %445 = dma.done [#allocation5], 768
    $region193: #{forward.1} parent=1 // pred_fallthru
      _
    // Predicated region
    $region194: #{forward.1} parent=1 // pred_check
      _
    $region195: #{forward.1} parent=1 // pred_check_branch
      %447 = sbr.rel (0) target = $region197
    $region196: #{forward.1} parent=1 // pred_region
      %449 = dma.done [#allocation5], 6144
    $region197: #{forward.1} parent=1 // pred_fallthru
      _
    // Predicated region
    $region198: #{forward.1} parent=1 // pred_check
      _
    $region199: #{forward.1} parent=1 // pred_check_branch
      %451 = sbr.rel (0) target = $region201
    $region200: #{forward.1} parent=1 // pred_region
      %453 = dma.done [#allocation8], 6144
    $region201: #{forward.1} parent=1 // pred_fallthru
      _
    // Predicated region
    $region202: #{forward.1} parent=1 // pred_check
      _
    $region203: #{forward.1} parent=1 // pred_check_branch
      %455 = sbr.rel (0) target = $region205
    $region204: #{forward.1} parent=1 // pred_region
      %457 = dma.done [#allocation8], 2048
    $region205: #{forward.1} parent=1 // pred_fallthru
      _
    // Predicated region
    $region206: #{forward.1} parent=1 // pred_check
      _
    $region207: #{forward.1} parent=1 // pred_check_branch
      %459 = sbr.rel (0) target = $region209
    $region208: #{forward.1} parent=1 // pred_region
      %461 = dma.done [#allocation11], 2048
    $region209: #{forward.1} parent=1 // pred_fallthru
      _
    // Predicated region
    $region210: #{forward.1} parent=1 // pred_check
      _
    $region211: #{forward.1} parent=1 // pred_check_branch
      %463 = sbr.rel (0) target = $region213
    $region212: #{forward.1} parent=1 // pred_region
      %465 = dma.done [#allocation11], 2048
    $region213: #{forward.1} parent=1 // pred_fallthru
      _
    // Predicated region
    $region214: #{forward.1} parent=1 // pred_check
      _
    $region215: #{forward.1} parent=1 // pred_check_branch
      %467 = sbr.rel (0) target = $region217
    $region216: #{forward.1} parent=1 // pred_region
      %469 = dma.done [#allocation14], 4096
    $region217: #{forward.1} parent=1 // pred_fallthru
      _
    // Predicated region
    $region218: #{forward.1} parent=1 // pred_check
      _
    $region219: #{forward.1} parent=1 // pred_check_branch
      %471 = sbr.rel (0) target = $region221
    $region220: #{forward.1} parent=1 // pred_region
      %473 = dma.done [#allocation14], 2048
    $region221: #{forward.1} parent=1 // pred_fallthru
      _
    // Predicated region
    $region222: #{forward.1} parent=1 // pred_check
      _
    $region223: #{forward.1} parent=1 // pred_check_branch
      %475 = sbr.rel (0) target = $region225
    $region224: #{forward.1} parent=1 // pred_region
      %477 = dma.done [#allocation17], 6144
    $region225: #{forward.1} parent=1 // pred_fallthru
      _
    // Predicated region
    $region226: #{forward.1} parent=1 // pred_check
      _
    $region227: #{forward.1} parent=1 // pred_check_branch
      %479 = sbr.rel (0) target = $region229
    $region228: #{forward.1} parent=1 // pred_region
      %481 = dma.done [#allocation17], 2048
    $region229: #{forward.1} parent=1 // pred_fallthru
      _
    // Predicated region
    $region230: #{forward.1} parent=1 // pred_check
      _
    $region231: #{forward.1} parent=1 // pred_check_branch
      %483 = sbr.rel (0) target = $region233
    $region232: #{forward.1} parent=1 // pred_region
      %485 = dma.done [#allocation20], 6144
    $region233: #{forward.1} parent=1 // pred_fallthru
      _
    // Predicated region
    $region234: #{forward.1} parent=1 // pred_check
      _
    $region235: #{forward.1} parent=1 // pred_check_branch
      %487 = sbr.rel (0) target = $region237
    $region236: #{forward.1} parent=1 // pred_region
      %489 = dma.done [#allocation20], 2048
    $region237: #{forward.1} parent=1 // pred_fallthru
      _
    // Predicated region
    $region238: #{forward.1} parent=1 // pred_check
      _
    $region239: #{forward.1} parent=1 // pred_check_branch
      %491 = sbr.rel (0) target = $region241
    $region240: #{forward.1} parent=1 // pred_region
      %493 = dma.done [#allocation23], 6144
    $region241: #{forward.1} parent=1 // pred_fallthru
      _
    // Predicated region
    $region242: #{forward.1} parent=1 // pred_check
      _
    $region243: #{forward.1} parent=1 // pred_check_branch
      %495 = sbr.rel (0) target = $region245
    $region244: #{forward.1} parent=1 // pred_region
      %497 = dma.done [#allocation23], 32
    $region245: #{forward.1} parent=1 // pred_fallthru
      _
    // Predicated region
    $region246: #{forward.1} parent=1 // pred_check
      _
    $region247: #{forward.1} parent=1 // pred_check_branch
      %499 = sbr.rel (0) target = $region249
    $region248: #{forward.1} parent=1 // pred_region
      %501 = dma.done [#allocation26], 2048
    $region249: #{forward.1} parent=1 // pred_fallthru
      _
    // Predicated region
    $region250: #{forward.1} parent=1 // pred_check
      _
    $region251: #{forward.1} parent=1 // pred_check_branch
      %503 = sbr.rel (0) target = $region253
    $region252: #{forward.1} parent=1 // pred_region
      %505 = dma.done [#allocation26], 6144
    $region253: #{forward.1} parent=1 // pred_fallthru
      _
    // Predicated region
    $region254: #{forward.1} parent=1 // pred_check
      _
    $region255: #{forward.1} parent=1 // pred_check_branch
      %507 = sbr.rel (0) target = $region257
    $region256: #{forward.1} parent=1 // pred_region
      %509 = dma.done [#allocation29], 32
    $region257: #{forward.1} parent=1 // pred_fallthru
      _
    // Predicated region
    $region258: #{forward.1} parent=1 // pred_check
      _
    $region259: #{forward.1} parent=1 // pred_check_branch
      %511 = sbr.rel (0) target = $region261
    $region260: #{forward.1} parent=1 // pred_region
      %513 = dma.done [#allocation29], 2048
    $region261: #{forward.1} parent=1 // pred_fallthru
      _
    // Predicated region
    $region262: #{forward.1} parent=1 // pred_check
      _
    $region263: #{forward.1} parent=1 // pred_check_branch
      %515 = sbr.rel (0) target = $region265
    $region264: #{forward.1} parent=1 // pred_region
      %517 = dma.done [#allocation32], 2048
    $region265: #{forward.1} parent=1 // pred_fallthru
      _
    // Predicated region
    $region266: #{forward.1} parent=1 // pred_check
      _
    $region267: #{forward.1} parent=1 // pred_check_branch
      %519 = sbr.rel (0) target = $region269
    $region268: #{forward.1} parent=1 // pred_region
      %521 = dma.done [#allocation32], 6144
    $region269: #{forward.1} parent=1 // pred_fallthru
      _
    // Predicated region
    $region270: #{forward.1} parent=1 // pred_check
      _
    $region271: #{forward.1} parent=1 // pred_check_branch
      %523 = sbr.rel (0) target = $region273
    $region272: #{forward.1} parent=1 // pred_region
      %525 = dma.done [#allocation35], 16
    $region273: #{forward.1} parent=1 // pred_fallthru
      _
    %v526 = vld [vmem:[%s1] sm:$0xff]
    %v527 = vld [vmem:[%s1 + $0x8] sm:$0xff]
    %v528 = vld [vmem:[%s1 + $0x10] sm:$0xff]
    %v529 = vld [vmem:[%s1 + $0x18] sm:$0xff]
    %v530 = vld [vmem:[%s1 + $0x20] sm:$0xff]
    %v531 = vld [vmem:[%s1 + $0x28] sm:$0xff]
    %v532 = vld [vmem:[%s1 + $0x30] sm:$0xff]
    %v533 = vld [vmem:[%s1 + $0x38] sm:$0xff]
    %v534 = vld [vmem:[#allocation2] sm:$0xff]
    %v535 = vld [vmem:[#allocation2 + $0x8] sm:$0xff]
    %v536 = vld [vmem:[#allocation2 + $0x10] sm:$0xff]
    %v537 = vld [vmem:[#allocation2 + $0x18] sm:$0xff]
    %vm538 = vcmask 523264
    %v540 = vsel %vm538, %v534, 0
    %v543 = vsel %vm538, %v535, 0
    %v546 = vsel %vm538, %v536, 0
    %v549 = vsel %vm538, %v537, 0
    %551 = vmatpush.msra.mxu0 0.0
    %552 = vmatpush.msra.mxu0 0.0
    %553 = vmatpush.msra.mxu0 0.0
    %554 = vmatpush.msra.mxu0 0.0
    %555 = vmatpush.msra.mxu0 0.0
    %556 = vmatpush.msra.mxu0 0.0
    %557 = vmatpush.msra.mxu0 0.0
    %558 = vmatpush.msra.mxu0 0.0
    %559 = vmatpush.msra.mxu0 %v533
    %560 = vmatpush.msra.mxu0 %v532
    %561 = vmatpush.msra.mxu0 %v531
    %562 = vmatpush.msra.mxu0 %v530
    %563 = vmatpush.msra.mxu0 %v529
    %564 = vmatpush.msra.mxu0 %v528
    %565 = vmatpush.msra.mxu0 %v527
    %566 = vmatpush.msra.mxu0 %v526
    %567 = vmatmul.f32.gmra.mxu0 %v540
    %v568 = vpop.f32.mrf.mxu0
    %v569 = vadd.f32 0.0, %v568
    %570 = vmatmul.f32.gmra.mxu0 %v543
    %v571 = vpop.f32.mrf.mxu0
    %v572 = vadd.f32 0.0, %v571
    %573 = vmatmul.f32.gmra.mxu0 %v546
    %v574 = vpop.f32.mrf.mxu0
    %v575 = vadd.f32 0.0, %v574
    %576 = vmatmul.f32.gmra.mxu0 %v549
    %v577 = vpop.f32.mrf.mxu0
    %v578 = vadd.f32 0.0, %v577
    %579 = vdwg.mxu0
    %s580 = scalar_lea.vmem [#allocation2], 32
    %v581 = vld [vmem:[%s580] sm:$0xff]
    %v582 = vld [vmem:[%s580 + $0x8] sm:$0xff]
    %v583 = vld [vmem:[%s580 + $0x10] sm:$0xff]
    %v584 = vld [vmem:[%s580 + $0x18] sm:$0xff]
    %v586 = vsel %vm538, %v581, 0
    %v589 = vsel %vm538, %v582, 0
    %v592 = vsel %vm538, %v583, 0
    %v595 = vsel %vm538, %v584, 0
    %597 = vmatpush.msra.mxu0 0.0
    %598 = vmatpush.msra.mxu0 0.0
    %599 = vmatpush.msra.mxu0 0.0
    %600 = vmatpush.msra.mxu0 0.0
    %601 = vmatpush.msra.mxu0 0.0
    %602 = vmatpush.msra.mxu0 0.0
    %603 = vmatpush.msra.mxu0 0.0
    %604 = vmatpush.msra.mxu0 0.0
    %605 = vmatpush.msra.mxu0 %v533
    %606 = vmatpush.msra.mxu0 %v532
    %607 = vmatpush.msra.mxu0 %v531
    %608 = vmatpush.msra.mxu0 %v530
    %609 = vmatpush.msra.mxu0 %v529
    %610 = vmatpush.msra.mxu0 %v528
    %611 = vmatpush.msra.mxu0 %v527
    %612 = vmatpush.msra.mxu0 %v526
    %613 = vmatmul.f32.gmra.mxu0 %v586
    %v614 = vpop.f32.mrf.mxu0
    %v615 = vadd.f32 0.0, %v614
    %616 = vmatmul.f32.gmra.mxu0 %v589
    %v617 = vpop.f32.mrf.mxu0
    %v618 = vadd.f32 0.0, %v617
    %619 = vmatmul.f32.gmra.mxu0 %v592
    %v620 = vpop.f32.mrf.mxu0
    %v621 = vadd.f32 0.0, %v620
    %622 = vmatmul.f32.gmra.mxu0 %v595
    %v623 = vpop.f32.mrf.mxu0
    %v624 = vadd.f32 0.0, %v623
    %625 = vdwg.mxu0
    %s626 = scalar_lea.vmem [#allocation2], 64
    %v627 = vld [vmem:[%s626] sm:$0xff]
    %v628 = vld [vmem:[%s626 + $0x8] sm:$0xff]
    %v629 = vld [vmem:[%s626 + $0x10] sm:$0xff]
    %v630 = vld [vmem:[%s626 + $0x18] sm:$0xff]
    %v632 = vsel %vm538, %v627, 0
    %v635 = vsel %vm538, %v628, 0
    %v638 = vsel %vm538, %v629, 0
    %v641 = vsel %vm538, %v630, 0
    %643 = vmatpush.msra.mxu0 0.0
    %644 = vmatpush.msra.mxu0 0.0
    %645 = vmatpush.msra.mxu0 0.0
    %646 = vmatpush.msra.mxu0 0.0
    %647 = vmatpush.msra.mxu0 0.0
    %648 = vmatpush.msra.mxu0 0.0
    %649 = vmatpush.msra.mxu0 0.0
    %650 = vmatpush.msra.mxu0 0.0
    %651 = vmatpush.msra.mxu0 %v533
    %652 = vmatpush.msra.mxu0 %v532
    %653 = vmatpush.msra.mxu0 %v531
    %654 = vmatpush.msra.mxu0 %v530
    %655 = vmatpush.msra.mxu0 %v529
    %656 = vmatpush.msra.mxu0 %v528
    %657 = vmatpush.msra.mxu0 %v527
    %658 = vmatpush.msra.mxu0 %v526
    %659 = vmatmul.f32.gmra.mxu0 %v632
    %v660 = vpop.f32.mrf.mxu0
    %v661 = vadd.f32 0.0, %v660
    %662 = vmatmul.f32.gmra.mxu0 %v635
    %v663 = vpop.f32.mrf.mxu0
    %v664 = vadd.f32 0.0, %v663
    %665 = vmatmul.f32.gmra.mxu0 %v638
    %v666 = vpop.f32.mrf.mxu0
    %v667 = vadd.f32 0.0, %v666
    %668 = vmatmul.f32.gmra.mxu0 %v641
    %v669 = vpop.f32.mrf.mxu0
    %v670 = vadd.f32 0.0, %v669
    %671 = vdwg.mxu0
    %v672 = vld [vmem:[%s5] sm:$0xff]
    %v673 = vld [vmem:[%s5 + $0x8] sm:$0xff]
    %v674 = vld [vmem:[%s5 + $0x10] sm:$0xff]
    %v675 = vld [vmem:[%s5 + $0x18] sm:$0xff]
    %v676 = vld [vmem:[%s5 + $0x20] sm:$0xff]
    %v677 = vld [vmem:[%s5 + $0x28] sm:$0xff]
    %v678 = vld [vmem:[%s5 + $0x30] sm:$0xff]
    %v679 = vld [vmem:[%s5 + $0x38] sm:$0xff]
    %v680 = vld [vmem:[%s5 + $0x40] sm:$0xff]
    %v681 = vld [vmem:[%s5 + $0x48] sm:$0xff]
    %v682 = vld [vmem:[%s5 + $0x50] sm:$0xff]
    %v683 = vld [vmem:[%s5 + $0x58] sm:$0xff]
    %v684 = vld [vmem:[%s5 + $0x60] sm:$0xff]
    %v685 = vld [vmem:[%s5 + $0x68] sm:$0xff]
    %v686 = vld [vmem:[%s5 + $0x70] sm:$0xff]
    %v687 = vld [vmem:[%s5 + $0x78] sm:$0xff]
    %v688 = vld [vmem:[%s5 + $0x80] sm:$0xff]
    %v689 = vld [vmem:[%s5 + $0x88] sm:$0xff]
    %v690 = vld [vmem:[%s5 + $0x90] sm:$0xff]
    %v691 = vld [vmem:[%s5 + $0x98] sm:$0xff]
    %v692 = vld [vmem:[%s5 + $0xa0] sm:$0xff]
    %v693 = vld [vmem:[%s5 + $0xa8] sm:$0xff]
    %v694 = vld [vmem:[%s5 + $0xb0] sm:$0xff]
    %v695 = vld [vmem:[%s5 + $0xb8] sm:$0xff]
    %v696 = vld [vmem:[%s5 + $0xc0] sm:$0xff]
    %v697 = vld [vmem:[%s5 + $0xc8] sm:$0xff]
    %v698 = vld [vmem:[%s5 + $0xd0] sm:$0xff]
    %v699 = vld [vmem:[%s5 + $0xd8] sm:$0xff]
    %v700 = vld [vmem:[%s5 + $0xe0] sm:$0xff]
    %v701 = vld [vmem:[%s5 + $0xe8] sm:$0xff]
    %v702 = vld [vmem:[%s5 + $0xf0] sm:$0xff]
    %v703 = vld [vmem:[%s5 + $0xf8] sm:$0xff]
    %v704 = vld [vmem:[%s5 + $0x100] sm:$0xff]
    %v705 = vld [vmem:[%s5 + $0x108] sm:$0xff]
    %v706 = vld [vmem:[%s5 + $0x110] sm:$0xff]
    %v707 = vld [vmem:[%s5 + $0x118] sm:$0xff]
    %v708 = vld [vmem:[%s5 + $0x120] sm:$0xff]
    %v709 = vld [vmem:[%s5 + $0x128] sm:$0xff]
    %v710 = vld [vmem:[%s5 + $0x130] sm:$0xff]
    %v711 = vld [vmem:[%s5 + $0x138] sm:$0xff]
    %v712 = vld [vmem:[%s5 + $0x140] sm:$0xff]
    %v713 = vld [vmem:[%s5 + $0x148] sm:$0xff]
    %v714 = vld [vmem:[%s5 + $0x150] sm:$0xff]
    %v715 = vld [vmem:[%s5 + $0x158] sm:$0xff]
    %v716 = vld [vmem:[%s5 + $0x160] sm:$0xff]
    %v717 = vld [vmem:[%s5 + $0x168] sm:$0xff]
    %v718 = vld [vmem:[%s5 + $0x170] sm:$0xff]
    %v719 = vld [vmem:[%s5 + $0x178] sm:$0xff]
    %720 = vmatpush.msra.mxu0 %v687
    %721 = vmatpush.msra.mxu0 %v686
    %722 = vmatpush.msra.mxu0 %v685
    %723 = vmatpush.msra.mxu0 %v684
    %724 = vmatpush.msra.mxu0 %v683
    %725 = vmatpush.msra.mxu0 %v682
    %726 = vmatpush.msra.mxu0 %v681
    %727 = vmatpush.msra.mxu0 %v680
    %728 = vmatpush.msra.mxu0 %v679
    %729 = vmatpush.msra.mxu0 %v678
    %730 = vmatpush.msra.mxu0 %v677
    %731 = vmatpush.msra.mxu0 %v676
    %732 = vmatpush.msra.mxu0 %v675
    %733 = vmatpush.msra.mxu0 %v674
    %734 = vmatpush.msra.mxu0 %v673
    %735 = vmatpush.msra.mxu0 %v672
    %736 = vmatmul.f32.gmra.mxu0 %v569
    %v737 = vpop.f32.mrf.mxu0
    %v738 = vadd.f32 0.0, %v737
    %739 = vmatmul.f32.gmra.mxu0 %v572
    %v740 = vpop.f32.mrf.mxu0
    %v741 = vadd.f32 0.0, %v740
    %742 = vmatmul.f32.gmra.mxu0 %v575
    %v743 = vpop.f32.mrf.mxu0
    %v744 = vadd.f32 0.0, %v743
    %745 = vmatmul.f32.gmra.mxu0 %v578
    %v746 = vpop.f32.mrf.mxu0
    %v747 = vadd.f32 0.0, %v746
    %748 = vdwg.mxu0
    %749 = vmatpush.msra.mxu0 %v703
    %750 = vmatpush.msra.mxu0 %v702
    %751 = vmatpush.msra.mxu0 %v701
    %752 = vmatpush.msra.mxu0 %v700
    %753 = vmatpush.msra.mxu0 %v699
    %754 = vmatpush.msra.mxu0 %v698
    %755 = vmatpush.msra.mxu0 %v697
    %756 = vmatpush.msra.mxu0 %v696
    %757 = vmatpush.msra.mxu0 %v695
    %758 = vmatpush.msra.mxu0 %v694
    %759 = vmatpush.msra.mxu0 %v693
    %760 = vmatpush.msra.mxu0 %v692
    %761 = vmatpush.msra.mxu0 %v691
    %762 = vmatpush.msra.mxu0 %v690
    %763 = vmatpush.msra.mxu0 %v689
    %764 = vmatpush.msra.mxu0 %v688
    %765 = vmatmul.f32.gmra.mxu0 %v615
    %v766 = vpop.f32.mrf.mxu0
    %v767 = vadd.f32 %v738, %v766
    %768 = vmatmul.f32.gmra.mxu0 %v618
    %v769 = vpop.f32.mrf.mxu0
    %v770 = vadd.f32 %v741, %v769
    %771 = vmatmul.f32.gmra.mxu0 %v621
    %v772 = vpop.f32.mrf.mxu0
    %v773 = vadd.f32 %v744, %v772
    %774 = vmatmul.f32.gmra.mxu0 %v624
    %v775 = vpop.f32.mrf.mxu0
    %v776 = vadd.f32 %v747, %v775
    %777 = vdwg.mxu0
    %778 = vmatpush.msra.mxu0 %v719
    %779 = vmatpush.msra.mxu0 %v718
    %780 = vmatpush.msra.mxu0 %v717
    %781 = vmatpush.msra.mxu0 %v716
    %782 = vmatpush.msra.mxu0 %v715
    %783 = vmatpush.msra.mxu0 %v714
    %784 = vmatpush.msra.mxu0 %v713
    %785 = vmatpush.msra.mxu0 %v712
    %786 = vmatpush.msra.mxu0 %v711
    %787 = vmatpush.msra.mxu0 %v710
    %788 = vmatpush.msra.mxu0 %v709
    %789 = vmatpush.msra.mxu0 %v708
    %790 = vmatpush.msra.mxu0 %v707
    %791 = vmatpush.msra.mxu0 %v706
    %792 = vmatpush.msra.mxu0 %v705
    %793 = vmatpush.msra.mxu0 %v704
    %794 = vmatmul.f32.gmra.mxu0 %v661
    %v795 = vpop.f32.mrf.mxu0
    %v796 = vadd.f32 %v767, %v795
    %797 = vmatmul.f32.gmra.mxu0 %v664
    %v798 = vpop.f32.mrf.mxu0
    %v799 = vadd.f32 %v770, %v798
    %800 = vmatmul.f32.gmra.mxu0 %v667
    %v801 = vpop.f32.mrf.mxu0
    %v802 = vadd.f32 %v773, %v801
    %803 = vmatmul.f32.gmra.mxu0 %v670
    %v804 = vpop.f32.mrf.mxu0
    %v805 = vadd.f32 %v776, %v804
    %806 = vdwg.mxu0
    %v807 = vld [vmem:[%s7] sm:$0x3]
    %v808 = vadd.f32 %v796, %v799
    %v809 = vadd.f32 %v808, %v802
    %v810 = vadd.f32 %v809, %v805
    %v811 = vrot.slane %v810, 4
    %v812 = vadd.f32 %v810, %v811
    %v813 = vrot.slane %v812, 2
    %v814 = vadd.f32 %v812, %v813
    %v815 = vrot.slane %v814, 1
    %v816 = vadd.f32 %v814, %v815
    %v817 = vmul.f32 %v796, %v796
    %v818 = vmul.f32 %v799, %v799
    %v819 = vmul.f32 %v802, %v802
    %v820 = vmul.f32 %v805, %v805
    %v821 = vadd.f32 %v817, %v818
    %v822 = vadd.f32 %v821, %v819
    %v823 = vadd.f32 %v822, %v820
    %v824 = vrot.slane %v823, 4
    %v825 = vadd.f32 %v823, %v824
    %v826 = vrot.slane %v825, 2
    %v827 = vadd.f32 %v825, %v826
    %v828 = vrot.slane %v827, 1
    %v829 = vadd.f32 %v827, %v828
    %vm830 = vcmask 1040384
    %v831 = vsel %vm830, %v816, %v829
    %v832 = vld [vmem:[%s9] sm:$0xff]
    %v833 = vld [vmem:[%s9 + $0x8] sm:$0xff]
    %v834 = vld [vmem:[%s9 + $0x10] sm:$0xff]
    %v835 = vld [vmem:[%s9 + $0x18] sm:$0xff]
    %v836 = vld [vmem:[%s9 + $0x20] sm:$0xff]
    %v837 = vld [vmem:[%s9 + $0x28] sm:$0xff]
    %v838 = vld [vmem:[%s9 + $0x30] sm:$0xff]
    %v839 = vld [vmem:[%s9 + $0x38] sm:$0xff]
    %v840 = vld [vmem:[%s9 + $0x40] sm:$0xff]
    %v841 = vld [vmem:[%s9 + $0x48] sm:$0xff]
    %v842 = vld [vmem:[%s9 + $0x50] sm:$0xff]
    %v843 = vld [vmem:[%s9 + $0x58] sm:$0xff]
    %v844 = vld [vmem:[%s9 + $0x60] sm:$0xff]
    %v845 = vld [vmem:[%s9 + $0x68] sm:$0xff]
    %v846 = vld [vmem:[%s9 + $0x70] sm:$0xff]
    %v847 = vld [vmem:[%s9 + $0x78] sm:$0xff]
    %848 = vmatpush.msra.mxu0 %v847
    %849 = vmatpush.msra.mxu0 %v846
    %850 = vmatpush.msra.mxu0 %v845
    %851 = vmatpush.msra.mxu0 %v844
    %852 = vmatpush.msra.mxu0 %v843
    %853 = vmatpush.msra.mxu0 %v842
    %854 = vmatpush.msra.mxu0 %v841
    %855 = vmatpush.msra.mxu0 %v840
    %856 = vmatpush.msra.mxu0 %v839
    %857 = vmatpush.msra.mxu0 %v838
    %858 = vmatpush.msra.mxu0 %v837
    %859 = vmatpush.msra.mxu0 %v836
    %860 = vmatpush.msra.mxu0 %v835
    %861 = vmatpush.msra.mxu0 %v834
    %862 = vmatpush.msra.mxu0 %v833
    %863 = vmatpush.msra.mxu0 %v832
    %864 = vmatmul.f32.gmra.mxu0 %v831
    %v865 = vpop.f32.mrf.mxu0
    %v866 = vadd.f32 0.0, %v865
    %867 = vdwg.mxu0
    %v868 = vmul.f32 %v866, %v866
    %v870 = vrot.slane %v868, 7
    %v872 = vsub.f32 %v866, %v870
    %v873 = vmax.f32 %v872, 0.0
    %v874 = vperm.slane %v866, 0
    %v875 = vsub.f32 %v796, %v874
    %v876 = vsub.f32 %v799, %v874
    %v877 = vsub.f32 %v802, %v874
    %v878 = vsub.f32 %v805, %v874
    %v879 = vadd.f32 %v873, 1e-05
    %v880 = vrsqrt.pop %v879
    %v881 = vmul.f32 %v880, %v879
    %v882 = vmul.f32 %v881, %v880
    %v883 = vmul.f32 0.5, %v882
    %v884 = vsub.f32 1.5, %v883
    %v885 = vmul.f32 %v880, %v884
    %vm886 = vweird.f32 %v879
    %vm887 = vweird.f32 %v880
    %vm888 = vmor %vm886, %vm887
    %v889 = vsel %vm888, %v880, %v885
    %v891 = vrot.slane %v807, 7
    %v893 = vmul.f32 %v889, %v891
    %v894 = vperm.slane %v893, 1
    %v895 = vmul.f32 %v875, %v894
    %v896 = vmul.f32 %v876, %v894
    %v897 = vmul.f32 %v877, %v894
    %v898 = vmul.f32 %v878, %v894
    %v899 = vperm.slane %v807, 1
    %v900 = vadd.f32 %v895, %v899
    %v901 = vadd.f32 %v896, %v899
    %v902 = vadd.f32 %v897, %v899
    %v903 = vadd.f32 %v898, %v899
    %v904 = vmax.f32 %v900, 0.0
    %v905 = vmax.f32 %v901, 0.0
    %v906 = vmax.f32 %v902, 0.0
    %v907 = vmax.f32 %v903, 0.0
    %v908 = vld [vmem:[#allocation4] sm:$0xff]
    %v909 = vld [vmem:[#allocation4 + $0x8] sm:$0xff]
    %vm910 = vcmask 261120
    %v912 = vsel %vm910, %v908, 0
    %v915 = vsel %vm910, %v909, 0
    %917 = vmatpush.msra.mxu0 0.0
    %918 = vmatpush.msra.mxu0 0.0
    %919 = vmatpush.msra.mxu0 0.0
    %920 = vmatpush.msra.mxu0 0.0
    %921 = vmatpush.msra.mxu0 0.0
    %922 = vmatpush.msra.mxu0 0.0
    %923 = vmatpush.msra.mxu0 0.0
    %924 = vmatpush.msra.mxu0 0.0
    %925 = vmatpush.msra.mxu0 0.0
    %926 = vmatpush.msra.mxu0 0.0
    %927 = vmatpush.msra.mxu0 0.0
    %928 = vmatpush.msra.mxu0 0.0
    %929 = vmatpush.msra.mxu0 %v907
    %930 = vmatpush.msra.mxu0 %v906
    %931 = vmatpush.msra.mxu0 %v905
    %932 = vmatpush.msra.mxu0 %v904
    %933 = vmatmul.f32.gmra.mxu0 %v912
    %v934 = vpop.f32.mrf.mxu0
    %v935 = vadd.f32 0.0, %v934
    %936 = vmatmul.f32.gmra.mxu0 %v915
    %v937 = vpop.f32.mrf.mxu0
    %v938 = vadd.f32 0.0, %v937
    %939 = vdwg.mxu0
    %s940 = scalar_lea.vmem [#allocation4], 16
    %v941 = vld [vmem:[%s940] sm:$0xff]
    %v942 = vld [vmem:[%s940 + $0x8] sm:$0xff]
    %v944 = vsel %vm910, %v941, 0
    %v947 = vsel %vm910, %v942, 0
    %949 = vmatpush.msra.mxu0 0.0
    %950 = vmatpush.msra.mxu0 0.0
    %951 = vmatpush.msra.mxu0 0.0
    %952 = vmatpush.msra.mxu0 0.0
    %953 = vmatpush.msra.mxu0 0.0
    %954 = vmatpush.msra.mxu0 0.0
    %955 = vmatpush.msra.mxu0 0.0
    %956 = vmatpush.msra.mxu0 0.0
    %957 = vmatpush.msra.mxu0 0.0
    %958 = vmatpush.msra.mxu0 0.0
    %959 = vmatpush.msra.mxu0 0.0
    %960 = vmatpush.msra.mxu0 0.0
    %961 = vmatpush.msra.mxu0 %v907
    %962 = vmatpush.msra.mxu0 %v906
    %963 = vmatpush.msra.mxu0 %v905
    %964 = vmatpush.msra.mxu0 %v904
    %965 = vmatmul.f32.gmra.mxu0 %v944
    %v966 = vpop.f32.mrf.mxu0
    %v967 = vadd.f32 0.0, %v966
    %968 = vmatmul.f32.gmra.mxu0 %v947
    %v969 = vpop.f32.mrf.mxu0
    %v970 = vadd.f32 0.0, %v969
    %971 = vdwg.mxu0
    %s972 = scalar_lea.vmem [#allocation4], 32
    %v973 = vld [vmem:[%s972] sm:$0xff]
    %v974 = vld [vmem:[%s972 + $0x8] sm:$0xff]
    %v976 = vsel %vm910, %v973, 0
    %v979 = vsel %vm910, %v974, 0
    %981 = vmatpush.msra.mxu0 0.0
    %982 = vmatpush.msra.mxu0 0.0
    %983 = vmatpush.msra.mxu0 0.0
    %984 = vmatpush.msra.mxu0 0.0
    %985 = vmatpush.msra.mxu0 0.0
    %986 = vmatpush.msra.mxu0 0.0
    %987 = vmatpush.msra.mxu0 0.0
    %988 = vmatpush.msra.mxu0 0.0
    %989 = vmatpush.msra.mxu0 0.0
    %990 = vmatpush.msra.mxu0 0.0
    %991 = vmatpush.msra.mxu0 0.0
    %992 = vmatpush.msra.mxu0 0.0
    %993 = vmatpush.msra.mxu0 %v907
    %994 = vmatpush.msra.mxu0 %v906
    %995 = vmatpush.msra.mxu0 %v905
    %996 = vmatpush.msra.mxu0 %v904
    %997 = vmatmul.f32.gmra.mxu0 %v976
    %v998 = vpop.f32.mrf.mxu0
    %v999 = vadd.f32 0.0, %v998
    %1000 = vmatmul.f32.gmra.mxu0 %v979
    %v1001 = vpop.f32.mrf.mxu0
    %v1002 = vadd.f32 0.0, %v1001
    %1003 = vdwg.mxu0
    %v1004 = vld [vmem:[%s13] sm:$0xff]
    %v1005 = vld [vmem:[%s13 + $0x8] sm:$0xff]
    %v1006 = vld [vmem:[%s13 + $0x10] sm:$0xff]
    %v1007 = vld [vmem:[%s13 + $0x18] sm:$0xff]
    %v1008 = vld [vmem:[%s13 + $0x20] sm:$0xff]
    %v1009 = vld [vmem:[%s13 + $0x28] sm:$0xff]
    %v1010 = vld [vmem:[%s13 + $0x30] sm:$0xff]
    %v1011 = vld [vmem:[%s13 + $0x38] sm:$0xff]
    %v1012 = vld [vmem:[%s13 + $0x40] sm:$0xff]
    %v1013 = vld [vmem:[%s13 + $0x48] sm:$0xff]
    %v1014 = vld [vmem:[%s13 + $0x50] sm:$0xff]
    %v1015 = vld [vmem:[%s13 + $0x58] sm:$0xff]
    %v1016 = vld [vmem:[%s13 + $0x60] sm:$0xff]
    %v1017 = vld [vmem:[%s13 + $0x68] sm:$0xff]
    %v1018 = vld [vmem:[%s13 + $0x70] sm:$0xff]
    %v1019 = vld [vmem:[%s13 + $0x78] sm:$0xff]
    %v1020 = vld [vmem:[%s13 + $0x80] sm:$0xff]
    %v1021 = vld [vmem:[%s13 + $0x88] sm:$0xff]
    %v1022 = vld [vmem:[%s13 + $0x90] sm:$0xff]
    %v1023 = vld [vmem:[%s13 + $0x98] sm:$0xff]
    %v1024 = vld [vmem:[%s13 + $0xa0] sm:$0xff]
    %v1025 = vld [vmem:[%s13 + $0xa8] sm:$0xff]
    %v1026 = vld [vmem:[%s13 + $0xb0] sm:$0xff]
    %v1027 = vld [vmem:[%s13 + $0xb8] sm:$0xff]
    %v1028 = vld [vmem:[%s13 + $0xc0] sm:$0xff]
    %v1029 = vld [vmem:[%s13 + $0xc8] sm:$0xff]
    %v1030 = vld [vmem:[%s13 + $0xd0] sm:$0xff]
    %v1031 = vld [vmem:[%s13 + $0xd8] sm:$0xff]
    %v1032 = vld [vmem:[%s13 + $0xe0] sm:$0xff]
    %v1033 = vld [vmem:[%s13 + $0xe8] sm:$0xff]
    %v1034 = vld [vmem:[%s13 + $0xf0] sm:$0xff]
    %v1035 = vld [vmem:[%s13 + $0xf8] sm:$0xff]
    %v1036 = vld [vmem:[%s13 + $0x100] sm:$0xff]
    %v1037 = vld [vmem:[%s13 + $0x108] sm:$0xff]
    %v1038 = vld [vmem:[%s13 + $0x110] sm:$0xff]
    %v1039 = vld [vmem:[%s13 + $0x118] sm:$0xff]
    %v1040 = vld [vmem:[%s13 + $0x120] sm:$0xff]
    %v1041 = vld [vmem:[%s13 + $0x128] sm:$0xff]
    %v1042 = vld [vmem:[%s13 + $0x130] sm:$0xff]
    %v1043 = vld [vmem:[%s13 + $0x138] sm:$0xff]
    %v1044 = vld [vmem:[%s13 + $0x140] sm:$0xff]
    %v1045 = vld [vmem:[%s13 + $0x148] sm:$0xff]
    %v1046 = vld [vmem:[%s13 + $0x150] sm:$0xff]
    %v1047 = vld [vmem:[%s13 + $0x158] sm:$0xff]
    %v1048 = vld [vmem:[%s13 + $0x160] sm:$0xff]
    %v1049 = vld [vmem:[%s13 + $0x168] sm:$0xff]
    %v1050 = vld [vmem:[%s13 + $0x170] sm:$0xff]
    %v1051 = vld [vmem:[%s13 + $0x178] sm:$0xff]
    %1052 = vmatpush.msra.mxu0 %v1019
    %1053 = vmatpush.msra.mxu0 %v1018
    %1054 = vmatpush.msra.mxu0 %v1017
    %1055 = vmatpush.msra.mxu0 %v1016
    %1056 = vmatpush.msra.mxu0 %v1015
    %1057 = vmatpush.msra.mxu0 %v1014
    %1058 = vmatpush.msra.mxu0 %v1013
    %1059 = vmatpush.msra.mxu0 %v1012
    %1060 = vmatpush.msra.mxu0 %v1011
    %1061 = vmatpush.msra.mxu0 %v1010
    %1062 = vmatpush.msra.mxu0 %v1009
    %1063 = vmatpush.msra.mxu0 %v1008
    %1064 = vmatpush.msra.mxu0 %v1007
    %1065 = vmatpush.msra.mxu0 %v1006
    %1066 = vmatpush.msra.mxu0 %v1005
    %1067 = vmatpush.msra.mxu0 %v1004
    %1068 = vmatmul.f32.gmra.mxu0 %v935
    %v1069 = vpop.f32.mrf.mxu0
    %v1070 = vadd.f32 0.0, %v1069
    %1071 = vmatmul.f32.gmra.mxu0 %v938
    %v1072 = vpop.f32.mrf.mxu0
    %v1073 = vadd.f32 0.0, %v1072
    %1074 = vdwg.mxu0
    %1075 = vmatpush.msra.mxu0 %v1035
    %1076 = vmatpush.msra.mxu0 %v1034
    %1077 = vmatpush.msra.mxu0 %v1033
    %1078 = vmatpush.msra.mxu0 %v1032
    %1079 = vmatpush.msra.mxu0 %v1031
    %1080 = vmatpush.msra.mxu0 %v1030
    %1081 = vmatpush.msra.mxu0 %v1029
    %1082 = vmatpush.msra.mxu0 %v1028
    %1083 = vmatpush.msra.mxu0 %v1027
    %1084 = vmatpush.msra.mxu0 %v1026
    %1085 = vmatpush.msra.mxu0 %v1025
    %1086 = vmatpush.msra.mxu0 %v1024
    %1087 = vmatpush.msra.mxu0 %v1023
    %1088 = vmatpush.msra.mxu0 %v1022
    %1089 = vmatpush.msra.mxu0 %v1021
    %1090 = vmatpush.msra.mxu0 %v1020
    %1091 = vmatmul.f32.gmra.mxu0 %v967
    %v1092 = vpop.f32.mrf.mxu0
    %v1093 = vadd.f32 %v1070, %v1092
    %1094 = vmatmul.f32.gmra.mxu0 %v970
    %v1095 = vpop.f32.mrf.mxu0
    %v1096 = vadd.f32 %v1073, %v1095
    %1097 = vdwg.mxu0
    %1098 = vmatpush.msra.mxu0 %v1051
    %1099 = vmatpush.msra.mxu0 %v1050
    %1100 = vmatpush.msra.mxu0 %v1049
    %1101 = vmatpush.msra.mxu0 %v1048
    %1102 = vmatpush.msra.mxu0 %v1047
    %1103 = vmatpush.msra.mxu0 %v1046
    %1104 = vmatpush.msra.mxu0 %v1045
    %1105 = vmatpush.msra.mxu0 %v1044
    %1106 = vmatpush.msra.mxu0 %v1043
    %1107 = vmatpush.msra.mxu0 %v1042
    %1108 = vmatpush.msra.mxu0 %v1041
    %1109 = vmatpush.msra.mxu0 %v1040
    %1110 = vmatpush.msra.mxu0 %v1039
    %1111 = vmatpush.msra.mxu0 %v1038
    %1112 = vmatpush.msra.mxu0 %v1037
    %1113 = vmatpush.msra.mxu0 %v1036
    %1114 = vmatmul.f32.gmra.mxu0 %v999
    %v1115 = vpop.f32.mrf.mxu0
    %v1116 = vadd.f32 %v1093, %v1115
    %1117 = vmatmul.f32.gmra.mxu0 %v1002
    %v1118 = vpop.f32.mrf.mxu0
    %v1119 = vadd.f32 %v1096, %v1118
    %1120 = vdwg.mxu0
    %v1121 = vld [vmem:[%s15] sm:$0x3]
    %v1122 = vadd.f32 %v1116, %v1119
    %v1123 = vrot.slane %v1122, 4
    %v1124 = vadd.f32 %v1122, %v1123
    %v1125 = vrot.slane %v1124, 2
    %v1126 = vadd.f32 %v1124, %v1125
    %v1127 = vrot.slane %v1126, 1
    %v1128 = vadd.f32 %v1126, %v1127
    %v1129 = vmul.f32 %v1116, %v1116
    %v1130 = vmul.f32 %v1119, %v1119
    %v1131 = vadd.f32 %v1129, %v1130
    %v1132 = vrot.slane %v1131, 4
    %v1133 = vadd.f32 %v1131, %v1132
    %v1134 = vrot.slane %v1133, 2
    %v1135 = vadd.f32 %v1133, %v1134
    %v1136 = vrot.slane %v1135, 1
    %v1137 = vadd.f32 %v1135, %v1136
    %v1138 = vsel %vm830, %v1128, %v1137
    %v1139 = vld [vmem:[%s17] sm:$0xff]
    %v1140 = vld [vmem:[%s17 + $0x8] sm:$0xff]
    %v1141 = vld [vmem:[%s17 + $0x10] sm:$0xff]
    %v1142 = vld [vmem:[%s17 + $0x18] sm:$0xff]
    %v1143 = vld [vmem:[%s17 + $0x20] sm:$0xff]
    %v1144 = vld [vmem:[%s17 + $0x28] sm:$0xff]
    %v1145 = vld [vmem:[%s17 + $0x30] sm:$0xff]
    %v1146 = vld [vmem:[%s17 + $0x38] sm:$0xff]
    %v1147 = vld [vmem:[%s17 + $0x40] sm:$0xff]
    %v1148 = vld [vmem:[%s17 + $0x48] sm:$0xff]
    %v1149 = vld [vmem:[%s17 + $0x50] sm:$0xff]
    %v1150 = vld [vmem:[%s17 + $0x58] sm:$0xff]
    %v1151 = vld [vmem:[%s17 + $0x60] sm:$0xff]
    %v1152 = vld [vmem:[%s17 + $0x68] sm:$0xff]
    %v1153 = vld [vmem:[%s17 + $0x70] sm:$0xff]
    %v1154 = vld [vmem:[%s17 + $0x78] sm:$0xff]
    %1155 = vmatpush.msra.mxu0 %v1154
    %1156 = vmatpush.msra.mxu0 %v1153
    %1157 = vmatpush.msra.mxu0 %v1152
    %1158 = vmatpush.msra.mxu0 %v1151
    %1159 = vmatpush.msra.mxu0 %v1150
    %1160 = vmatpush.msra.mxu0 %v1149
    %1161 = vmatpush.msra.mxu0 %v1148
    %1162 = vmatpush.msra.mxu0 %v1147
    %1163 = vmatpush.msra.mxu0 %v1146
    %1164 = vmatpush.msra.mxu0 %v1145
    %1165 = vmatpush.msra.mxu0 %v1144
    %1166 = vmatpush.msra.mxu0 %v1143
    %1167 = vmatpush.msra.mxu0 %v1142
    %1168 = vmatpush.msra.mxu0 %v1141
    %1169 = vmatpush.msra.mxu0 %v1140
    %1170 = vmatpush.msra.mxu0 %v1139
    %1171 = vmatmul.f32.gmra.mxu0 %v1138
    %v1172 = vpop.f32.mrf.mxu0
    %v1173 = vadd.f32 0.0, %v1172
    %1174 = vdwg.mxu0
    %v1175 = vmul.f32 %v1173, %v1173
    %v1177 = vrot.slane %v1175, 7
    %v1179 = vsub.f32 %v1173, %v1177
    %v1180 = vmax.f32 %v1179, 0.0
    %v1181 = vperm.slane %v1173, 0
    %v1182 = vsub.f32 %v1116, %v1181
    %v1183 = vsub.f32 %v1119, %v1181
    %v1184 = vadd.f32 %v1180, 1e-05
    %v1185 = vrsqrt.pop %v1184
    %v1186 = vmul.f32 %v1185, %v1184
    %v1187 = vmul.f32 %v1186, %v1185
    %v1188 = vmul.f32 0.5, %v1187
    %v1189 = vsub.f32 1.5, %v1188
    %v1190 = vmul.f32 %v1185, %v1189
    %vm1191 = vweird.f32 %v1184
    %vm1192 = vweird.f32 %v1185
    %vm1193 = vmor %vm1191, %vm1192
    %v1194 = vsel %vm1193, %v1185, %v1190
    %v1196 = vrot.slane %v1121, 7
    %v1198 = vmul.f32 %v1194, %v1196
    %v1199 = vperm.slane %v1198, 1
    %v1200 = vmul.f32 %v1182, %v1199
    %v1201 = vmul.f32 %v1183, %v1199
    %v1202 = vperm.slane %v1121, 1
    %v1203 = vadd.f32 %v1200, %v1202
    %v1204 = vadd.f32 %v1201, %v1202
    %v1205 = vmax.f32 %v1203, 0.0
    %v1206 = vmax.f32 %v1204, 0.0
    %v1207 = vld [vmem:[%s19] sm:$0xff]
    %vm1208 = vcmask 130048
    %v1210 = vsel %vm1208, %v1207, 0
    %1212 = vmatpush.msra.mxu0 0.0
    %1213 = vmatpush.msra.mxu0 0.0
    %1214 = vmatpush.msra.mxu0 0.0
    %1215 = vmatpush.msra.mxu0 0.0
    %1216 = vmatpush.msra.mxu0 0.0
    %1217 = vmatpush.msra.mxu0 0.0
    %1218 = vmatpush.msra.mxu0 0.0
    %1219 = vmatpush.msra.mxu0 0.0
    %1220 = vmatpush.msra.mxu0 0.0
    %1221 = vmatpush.msra.mxu0 0.0
    %1222 = vmatpush.msra.mxu0 0.0
    %1223 = vmatpush.msra.mxu0 0.0
    %1224 = vmatpush.msra.mxu0 0.0
    %1225 = vmatpush.msra.mxu0 0.0
    %1226 = vmatpush.msra.mxu0 %v1206
    %1227 = vmatpush.msra.mxu0 %v1205
    %1228 = vmatmul.f32.gmra.mxu0 %v1210
    %v1229 = vpop.f32.mrf.mxu0
    %v1230 = vadd.f32 0.0, %v1229
    %1231 = vdwg.mxu0
    %s1232 = scalar_lea.vmem %s19, 8
    %v1233 = vld [vmem:[%s1232] sm:$0xff]
    %v1235 = vsel %vm1208, %v1233, 0
    %1237 = vmatpush.msra.mxu0 0.0
    %1238 = vmatpush.msra.mxu0 0.0
    %1239 = vmatpush.msra.mxu0 0.0
    %1240 = vmatpush.msra.mxu0 0.0
    %1241 = vmatpush.msra.mxu0 0.0
    %1242 = vmatpush.msra.mxu0 0.0
    %1243 = vmatpush.msra.mxu0 0.0
    %1244 = vmatpush.msra.mxu0 0.0
    %1245 = vmatpush.msra.mxu0 0.0
    %1246 = vmatpush.msra.mxu0 0.0
    %1247 = vmatpush.msra.mxu0 0.0
    %1248 = vmatpush.msra.mxu0 0.0
    %1249 = vmatpush.msra.mxu0 0.0
    %1250 = vmatpush.msra.mxu0 0.0
    %1251 = vmatpush.msra.mxu0 %v1206
    %1252 = vmatpush.msra.mxu0 %v1205
    %1253 = vmatmul.f32.gmra.mxu0 %v1235
    %v1254 = vpop.f32.mrf.mxu0
    %v1255 = vadd.f32 0.0, %v1254
    %1256 = vdwg.mxu0
    %s1257 = scalar_lea.vmem %s19, 16
    %v1258 = vld [vmem:[%s1257] sm:$0xff]
    %v1260 = vsel %vm1208, %v1258, 0
    %1262 = vmatpush.msra.mxu0 0.0
    %1263 = vmatpush.msra.mxu0 0.0
    %1264 = vmatpush.msra.mxu0 0.0
    %1265 = vmatpush.msra.mxu0 0.0
    %1266 = vmatpush.msra.mxu0 0.0
    %1267 = vmatpush.msra.mxu0 0.0
    %1268 = vmatpush.msra.mxu0 0.0
    %1269 = vmatpush.msra.mxu0 0.0
    %1270 = vmatpush.msra.mxu0 0.0
    %1271 = vmatpush.msra.mxu0 0.0
    %1272 = vmatpush.msra.mxu0 0.0
    %1273 = vmatpush.msra.mxu0 0.0
    %1274 = vmatpush.msra.mxu0 0.0
    %1275 = vmatpush.msra.mxu0 0.0
    %1276 = vmatpush.msra.mxu0 %v1206
    %1277 = vmatpush.msra.mxu0 %v1205
    %1278 = vmatmul.f32.gmra.mxu0 %v1260
    %v1279 = vpop.f32.mrf.mxu0
    %v1280 = vadd.f32 0.0, %v1279
    %1281 = vdwg.mxu0
    %v1282 = vld [vmem:[#allocation6] sm:$0xff]
    %v1283 = vld [vmem:[#allocation6 + $0x8] sm:$0xff]
    %v1284 = vld [vmem:[#allocation6 + $0x10] sm:$0xff]
    %v1285 = vld [vmem:[#allocation6 + $0x18] sm:$0xff]
    %v1286 = vld [vmem:[#allocation6 + $0x20] sm:$0xff]
    %v1287 = vld [vmem:[#allocation6 + $0x28] sm:$0xff]
    %v1288 = vld [vmem:[#allocation6 + $0x30] sm:$0xff]
    %v1289 = vld [vmem:[#allocation6 + $0x38] sm:$0xff]
    %v1290 = vld [vmem:[#allocation6 + $0x40] sm:$0xff]
    %v1291 = vld [vmem:[#allocation6 + $0x48] sm:$0xff]
    %v1292 = vld [vmem:[#allocation6 + $0x50] sm:$0xff]
    %v1293 = vld [vmem:[#allocation6 + $0x58] sm:$0xff]
    %v1294 = vld [vmem:[#allocation6 + $0x60] sm:$0xff]
    %v1295 = vld [vmem:[#allocation6 + $0x68] sm:$0xff]
    %v1296 = vld [vmem:[#allocation6 + $0x70] sm:$0xff]
    %v1297 = vld [vmem:[#allocation6 + $0x78] sm:$0xff]
    %v1298 = vld [vmem:[#allocation6 + $0x80] sm:$0xff]
    %v1299 = vld [vmem:[#allocation6 + $0x88] sm:$0xff]
    %v1300 = vld [vmem:[#allocation6 + $0x90] sm:$0xff]
    %v1301 = vld [vmem:[#allocation6 + $0x98] sm:$0xff]
    %v1302 = vld [vmem:[#allocation6 + $0xa0] sm:$0xff]
    %v1303 = vld [vmem:[#allocation6 + $0xa8] sm:$0xff]
    %v1304 = vld [vmem:[#allocation6 + $0xb0] sm:$0xff]
    %v1305 = vld [vmem:[#allocation6 + $0xb8] sm:$0xff]
    %v1306 = vld [vmem:[#allocation6 + $0xc0] sm:$0xff]
    %v1307 = vld [vmem:[#allocation6 + $0xc8] sm:$0xff]
    %v1308 = vld [vmem:[#allocation6 + $0xd0] sm:$0xff]
    %v1309 = vld [vmem:[#allocation6 + $0xd8] sm:$0xff]
    %v1310 = vld [vmem:[#allocation6 + $0xe0] sm:$0xff]
    %v1311 = vld [vmem:[#allocation6 + $0xe8] sm:$0xff]
    %v1312 = vld [vmem:[#allocation6 + $0xf0] sm:$0xff]
    %v1313 = vld [vmem:[#allocation6 + $0xf8] sm:$0xff]
    %v1314 = vld [vmem:[#allocation6 + $0x100] sm:$0xff]
    %v1315 = vld [vmem:[#allocation6 + $0x108] sm:$0xff]
    %v1316 = vld [vmem:[#allocation6 + $0x110] sm:$0xff]
    %v1317 = vld [vmem:[#allocation6 + $0x118] sm:$0xff]
    %v1318 = vld [vmem:[#allocation6 + $0x120] sm:$0xff]
    %v1319 = vld [vmem:[#allocation6 + $0x128] sm:$0xff]
    %v1320 = vld [vmem:[#allocation6 + $0x130] sm:$0xff]
    %v1321 = vld [vmem:[#allocation6 + $0x138] sm:$0xff]
    %v1322 = vld [vmem:[#allocation6 + $0x140] sm:$0xff]
    %v1323 = vld [vmem:[#allocation6 + $0x148] sm:$0xff]
    %v1324 = vld [vmem:[#allocation6 + $0x150] sm:$0xff]
    %v1325 = vld [vmem:[#allocation6 + $0x158] sm:$0xff]
    %v1326 = vld [vmem:[#allocation6 + $0x160] sm:$0xff]
    %v1327 = vld [vmem:[#allocation6 + $0x168] sm:$0xff]
    %v1328 = vld [vmem:[#allocation6 + $0x170] sm:$0xff]
    %v1329 = vld [vmem:[#allocation6 + $0x178] sm:$0xff]
    %1330 = vmatpush.msra.mxu0 %v1297
    %1331 = vmatpush.msra.mxu0 %v1296
    %1332 = vmatpush.msra.mxu0 %v1295
    %1333 = vmatpush.msra.mxu0 %v1294
    %1334 = vmatpush.msra.mxu0 %v1293
    %1335 = vmatpush.msra.mxu0 %v1292
    %1336 = vmatpush.msra.mxu0 %v1291
    %1337 = vmatpush.msra.mxu0 %v1290
    %1338 = vmatpush.msra.mxu0 %v1289
    %1339 = vmatpush.msra.mxu0 %v1288
    %1340 = vmatpush.msra.mxu0 %v1287
    %1341 = vmatpush.msra.mxu0 %v1286
    %1342 = vmatpush.msra.mxu0 %v1285
    %1343 = vmatpush.msra.mxu0 %v1284
    %1344 = vmatpush.msra.mxu0 %v1283
    %1345 = vmatpush.msra.mxu0 %v1282
    %1346 = vmatmul.f32.gmra.mxu0 %v1230
    %v1347 = vpop.f32.mrf.mxu0
    %v1348 = vadd.f32 0.0, %v1347
    %1349 = vdwg.mxu0
    %1350 = vmatpush.msra.mxu0 %v1313
    %1351 = vmatpush.msra.mxu0 %v1312
    %1352 = vmatpush.msra.mxu0 %v1311
    %1353 = vmatpush.msra.mxu0 %v1310
    %1354 = vmatpush.msra.mxu0 %v1309
    %1355 = vmatpush.msra.mxu0 %v1308
    %1356 = vmatpush.msra.mxu0 %v1307
    %1357 = vmatpush.msra.mxu0 %v1306
    %1358 = vmatpush.msra.mxu0 %v1305
    %1359 = vmatpush.msra.mxu0 %v1304
    %1360 = vmatpush.msra.mxu0 %v1303
    %1361 = vmatpush.msra.mxu0 %v1302
    %1362 = vmatpush.msra.mxu0 %v1301
    %1363 = vmatpush.msra.mxu0 %v1300
    %1364 = vmatpush.msra.mxu0 %v1299
    %1365 = vmatpush.msra.mxu0 %v1298
    %1366 = vmatmul.f32.gmra.mxu0 %v1255
    %v1367 = vpop.f32.mrf.mxu0
    %v1368 = vadd.f32 %v1348, %v1367
    %1369 = vdwg.mxu0
    %1370 = vmatpush.msra.mxu0 %v1329
    %1371 = vmatpush.msra.mxu0 %v1328
    %1372 = vmatpush.msra.mxu0 %v1327
    %1373 = vmatpush.msra.mxu0 %v1326
    %1374 = vmatpush.msra.mxu0 %v1325
    %1375 = vmatpush.msra.mxu0 %v1324
    %1376 = vmatpush.msra.mxu0 %v1323
    %1377 = vmatpush.msra.mxu0 %v1322
    %1378 = vmatpush.msra.mxu0 %v1321
    %1379 = vmatpush.msra.mxu0 %v1320
    %1380 = vmatpush.msra.mxu0 %v1319
    %1381 = vmatpush.msra.mxu0 %v1318
    %1382 = vmatpush.msra.mxu0 %v1317
    %1383 = vmatpush.msra.mxu0 %v1316
    %1384 = vmatpush.msra.mxu0 %v1315
    %1385 = vmatpush.msra.mxu0 %v1314
    %1386 = vmatmul.f32.gmra.mxu0 %v1280
    %v1387 = vpop.f32.mrf.mxu0
    %v1388 = vadd.f32 %v1368, %v1387
    %1389 = vdwg.mxu0
    %v1390 = vld [vmem:[%s23] sm:$0x3]
    %v1391 = vrot.slane %v1388, 4
    %v1392 = vadd.f32 %v1388, %v1391
    %v1393 = vrot.slane %v1392, 2
    %v1394 = vadd.f32 %v1392, %v1393
    %v1395 = vrot.slane %v1394, 1
    %v1396 = vadd.f32 %v1394, %v1395
    %v1397 = vmul.f32 %v1388, %v1388
    %v1398 = vrot.slane %v1397, 4
    %v1399 = vadd.f32 %v1397, %v1398
    %v1400 = vrot.slane %v1399, 2
    %v1401 = vadd.f32 %v1399, %v1400
    %v1402 = vrot.slane %v1401, 1
    %v1403 = vadd.f32 %v1401, %v1402
    %v1404 = vsel %vm830, %v1396, %v1403
    %v1405 = vld [vmem:[%s25] sm:$0xff]
    %v1406 = vld [vmem:[%s25 + $0x8] sm:$0xff]
    %v1407 = vld [vmem:[%s25 + $0x10] sm:$0xff]
    %v1408 = vld [vmem:[%s25 + $0x18] sm:$0xff]
    %v1409 = vld [vmem:[%s25 + $0x20] sm:$0xff]
    %v1410 = vld [vmem:[%s25 + $0x28] sm:$0xff]
    %v1411 = vld [vmem:[%s25 + $0x30] sm:$0xff]
    %v1412 = vld [vmem:[%s25 + $0x38] sm:$0xff]
    %v1413 = vld [vmem:[%s25 + $0x40] sm:$0xff]
    %v1414 = vld [vmem:[%s25 + $0x48] sm:$0xff]
    %v1415 = vld [vmem:[%s25 + $0x50] sm:$0xff]
    %v1416 = vld [vmem:[%s25 + $0x58] sm:$0xff]
    %v1417 = vld [vmem:[%s25 + $0x60] sm:$0xff]
    %v1418 = vld [vmem:[%s25 + $0x68] sm:$0xff]
    %v1419 = vld [vmem:[%s25 + $0x70] sm:$0xff]
    %v1420 = vld [vmem:[%s25 + $0x78] sm:$0xff]
    %1421 = vmatpush.msra.mxu0 %v1420
    %1422 = vmatpush.msra.mxu0 %v1419
    %1423 = vmatpush.msra.mxu0 %v1418
    %1424 = vmatpush.msra.mxu0 %v1417
    %1425 = vmatpush.msra.mxu0 %v1416
    %1426 = vmatpush.msra.mxu0 %v1415
    %1427 = vmatpush.msra.mxu0 %v1414
    %1428 = vmatpush.msra.mxu0 %v1413
    %1429 = vmatpush.msra.mxu0 %v1412
    %1430 = vmatpush.msra.mxu0 %v1411
    %1431 = vmatpush.msra.mxu0 %v1410
    %1432 = vmatpush.msra.mxu0 %v1409
    %1433 = vmatpush.msra.mxu0 %v1408
    %1434 = vmatpush.msra.mxu0 %v1407
    %1435 = vmatpush.msra.mxu0 %v1406
    %1436 = vmatpush.msra.mxu0 %v1405
    %1437 = vmatmul.f32.gmra.mxu0 %v1404
    %v1438 = vpop.f32.mrf.mxu0
    %v1439 = vadd.f32 0.0, %v1438
    %1440 = vdwg.mxu0
    %v1441 = vmul.f32 %v1439, %v1439
    %v1443 = vrot.slane %v1441, 7
    %v1445 = vsub.f32 %v1439, %v1443
    %v1446 = vmax.f32 %v1445, 0.0
    %v1447 = vperm.slane %v1439, 0
    %v1448 = vsub.f32 %v1388, %v1447
    %v1449 = vadd.f32 %v1446, 1e-05
    %v1450 = vrsqrt.pop %v1449
    %v1451 = vmul.f32 %v1450, %v1449
    %v1452 = vmul.f32 %v1451, %v1450
    %v1453 = vmul.f32 0.5, %v1452
    %v1454 = vsub.f32 1.5, %v1453
    %v1455 = vmul.f32 %v1450, %v1454
    %vm1456 = vweird.f32 %v1449
    %vm1457 = vweird.f32 %v1450
    %vm1458 = vmor %vm1456, %vm1457
    %v1459 = vsel %vm1458, %v1450, %v1455
    %v1461 = vrot.slane %v1390, 7
    %v1463 = vmul.f32 %v1459, %v1461
    %v1464 = vperm.slane %v1463, 1
    %v1465 = vmul.f32 %v1448, %v1464
    %v1466 = vperm.slane %v1390, 1
    %v1467 = vadd.f32 %v1465, %v1466
    %v1468 = vmax.f32 %v1467, 0.0
    %v1469 = vld [vmem:[%s27] sm:$0xf]
    %vm1470 = vcmask 64512
    %v1472 = vsel %vm1470, %v1469, 0
    %1474 = vmatpush.msra.mxu0 0.0
    %1475 = vmatpush.msra.mxu0 0.0
    %1476 = vmatpush.msra.mxu0 0.0
    %1477 = vmatpush.msra.mxu0 0.0
    %1478 = vmatpush.msra.mxu0 0.0
    %1479 = vmatpush.msra.mxu0 0.0
    %1480 = vmatpush.msra.mxu0 0.0
    %1481 = vmatpush.msra.mxu0 0.0
    %1482 = vmatpush.msra.mxu0 0.0
    %1483 = vmatpush.msra.mxu0 0.0
    %1484 = vmatpush.msra.mxu0 0.0
    %1485 = vmatpush.msra.mxu0 0.0
    %1486 = vmatpush.msra.mxu0 0.0
    %1487 = vmatpush.msra.mxu0 0.0
    %1488 = vmatpush.msra.mxu0 0.0
    %1489 = vmatpush.msra.mxu0 %v1468
    %1490 = vmatmul.f32.gmra.mxu0 %v1472
    %v1491 = vpop.f32.mrf.mxu0
    %v1492 = vadd.f32 0.0, %v1491
    %1493 = vdwg.mxu0
    %s1494 = scalar_lea.vmem %s27, 4
    %v1495 = vld [vmem:[%s1494] sm:$0xf]
    %v1497 = vsel %vm1470, %v1495, 0
    %1499 = vmatpush.msra.mxu0 0.0
    %1500 = vmatpush.msra.mxu0 0.0
    %1501 = vmatpush.msra.mxu0 0.0
    %1502 = vmatpush.msra.mxu0 0.0
    %1503 = vmatpush.msra.mxu0 0.0
    %1504 = vmatpush.msra.mxu0 0.0
    %1505 = vmatpush.msra.mxu0 0.0
    %1506 = vmatpush.msra.mxu0 0.0
    %1507 = vmatpush.msra.mxu0 0.0
    %1508 = vmatpush.msra.mxu0 0.0
    %1509 = vmatpush.msra.mxu0 0.0
    %1510 = vmatpush.msra.mxu0 0.0
    %1511 = vmatpush.msra.mxu0 0.0
    %1512 = vmatpush.msra.mxu0 0.0
    %1513 = vmatpush.msra.mxu0 0.0
    %1514 = vmatpush.msra.mxu0 %v1468
    %1515 = vmatmul.f32.gmra.mxu0 %v1497
    %v1516 = vpop.f32.mrf.mxu0
    %v1517 = vadd.f32 0.0, %v1516
    %1518 = vdwg.mxu0
    %s1519 = scalar_lea.vmem %s27, 8
    %v1520 = vld [vmem:[%s1519] sm:$0xf]
    %v1522 = vsel %vm1470, %v1520, 0
    %1524 = vmatpush.msra.mxu0 0.0
    %1525 = vmatpush.msra.mxu0 0.0
    %1526 = vmatpush.msra.mxu0 0.0
    %1527 = vmatpush.msra.mxu0 0.0
    %1528 = vmatpush.msra.mxu0 0.0
    %1529 = vmatpush.msra.mxu0 0.0
    %1530 = vmatpush.msra.mxu0 0.0
    %1531 = vmatpush.msra.mxu0 0.0
    %1532 = vmatpush.msra.mxu0 0.0
    %1533 = vmatpush.msra.mxu0 0.0
    %1534 = vmatpush.msra.mxu0 0.0
    %1535 = vmatpush.msra.mxu0 0.0
    %1536 = vmatpush.msra.mxu0 0.0
    %1537 = vmatpush.msra.mxu0 0.0
    %1538 = vmatpush.msra.mxu0 0.0
    %1539 = vmatpush.msra.mxu0 %v1468
    %1540 = vmatmul.f32.gmra.mxu0 %v1522
    %v1541 = vpop.f32.mrf.mxu0
    %v1542 = vadd.f32 0.0, %v1541
    %1543 = vdwg.mxu0
    %v1544 = vld [vmem:[#allocation7] sm:$0xff]
    %v1545 = vld [vmem:[#allocation7 + $0x8] sm:$0xff]
    %v1546 = vld [vmem:[#allocation7 + $0x10] sm:$0xff]
    %v1547 = vld [vmem:[#allocation7 + $0x18] sm:$0xff]
    %v1548 = vld [vmem:[#allocation7 + $0x20] sm:$0xff]
    %v1549 = vld [vmem:[#allocation7 + $0x28] sm:$0xff]
    %v1550 = vld [vmem:[#allocation7 + $0x30] sm:$0xff]
    %v1551 = vld [vmem:[#allocation7 + $0x38] sm:$0xff]
    %v1552 = vld [vmem:[#allocation7 + $0x40] sm:$0xff]
    %v1553 = vld [vmem:[#allocation7 + $0x48] sm:$0xff]
    %v1554 = vld [vmem:[#allocation7 + $0x50] sm:$0xff]
    %v1555 = vld [vmem:[#allocation7 + $0x58] sm:$0xff]
    %v1556 = vld [vmem:[#allocation7 + $0x60] sm:$0xff]
    %v1557 = vld [vmem:[#allocation7 + $0x68] sm:$0xff]
    %v1558 = vld [vmem:[#allocation7 + $0x70] sm:$0xff]
    %v1559 = vld [vmem:[#allocation7 + $0x78] sm:$0xff]
    %v1560 = vld [vmem:[#allocation7 + $0x80] sm:$0xff]
    %v1561 = vld [vmem:[#allocation7 + $0x88] sm:$0xff]
    %v1562 = vld [vmem:[#allocation7 + $0x90] sm:$0xff]
    %v1563 = vld [vmem:[#allocation7 + $0x98] sm:$0xff]
    %v1564 = vld [vmem:[#allocation7 + $0xa0] sm:$0xff]
    %v1565 = vld [vmem:[#allocation7 + $0xa8] sm:$0xff]
    %v1566 = vld [vmem:[#allocation7 + $0xb0] sm:$0xff]
    %v1567 = vld [vmem:[#allocation7 + $0xb8] sm:$0xff]
    %v1568 = vld [vmem:[#allocation7 + $0xc0] sm:$0xff]
    %v1569 = vld [vmem:[#allocation7 + $0xc8] sm:$0xff]
    %v1570 = vld [vmem:[#allocation7 + $0xd0] sm:$0xff]
    %v1571 = vld [vmem:[#allocation7 + $0xd8] sm:$0xff]
    %v1572 = vld [vmem:[#allocation7 + $0xe0] sm:$0xff]
    %v1573 = vld [vmem:[#allocation7 + $0xe8] sm:$0xff]
    %v1574 = vld [vmem:[#allocation7 + $0xf0] sm:$0xff]
    %v1575 = vld [vmem:[#allocation7 + $0xf8] sm:$0xff]
    %v1576 = vld [vmem:[#allocation7 + $0x100] sm:$0xff]
    %v1577 = vld [vmem:[#allocation7 + $0x108] sm:$0xff]
    %v1578 = vld [vmem:[#allocation7 + $0x110] sm:$0xff]
    %v1579 = vld [vmem:[#allocation7 + $0x118] sm:$0xff]
    %v1580 = vld [vmem:[#allocation7 + $0x120] sm:$0xff]
    %v1581 = vld [vmem:[#allocation7 + $0x128] sm:$0xff]
    %v1582 = vld [vmem:[#allocation7 + $0x130] sm:$0xff]
    %v1583 = vld [vmem:[#allocation7 + $0x138] sm:$0xff]
    %v1584 = vld [vmem:[#allocation7 + $0x140] sm:$0xff]
    %v1585 = vld [vmem:[#allocation7 + $0x148] sm:$0xff]
    %v1586 = vld [vmem:[#allocation7 + $0x150] sm:$0xff]
    %v1587 = vld [vmem:[#allocation7 + $0x158] sm:$0xff]
    %v1588 = vld [vmem:[#allocation7 + $0x160] sm:$0xff]
    %v1589 = vld [vmem:[#allocation7 + $0x168] sm:$0xff]
    %v1590 = vld [vmem:[#allocation7 + $0x170] sm:$0xff]
    %v1591 = vld [vmem:[#allocation7 + $0x178] sm:$0xff]
    %1592 = vmatpush.msra.mxu0 %v1559
    %1593 = vmatpush.msra.mxu0 %v1558
    %1594 = vmatpush.msra.mxu0 %v1557
    %1595 = vmatpush.msra.mxu0 %v1556
    %1596 = vmatpush.msra.mxu0 %v1555
    %1597 = vmatpush.msra.mxu0 %v1554
    %1598 = vmatpush.msra.mxu0 %v1553
    %1599 = vmatpush.msra.mxu0 %v1552
    %1600 = vmatpush.msra.mxu0 %v1551
    %1601 = vmatpush.msra.mxu0 %v1550
    %1602 = vmatpush.msra.mxu0 %v1549
    %1603 = vmatpush.msra.mxu0 %v1548
    %1604 = vmatpush.msra.mxu0 %v1547
    %1605 = vmatpush.msra.mxu0 %v1546
    %1606 = vmatpush.msra.mxu0 %v1545
    %1607 = vmatpush.msra.mxu0 %v1544
    %1608 = vmatmul.f32.gmra.mxu0 %v1492
    %v1609 = vpop.f32.mrf.mxu0
    %v1610 = vadd.f32 0.0, %v1609
    %1611 = vdwg.mxu0
    %1612 = vmatpush.msra.mxu0 %v1575
    %1613 = vmatpush.msra.mxu0 %v1574
    %1614 = vmatpush.msra.mxu0 %v1573
    %1615 = vmatpush.msra.mxu0 %v1572
    %1616 = vmatpush.msra.mxu0 %v1571
    %1617 = vmatpush.msra.mxu0 %v1570
    %1618 = vmatpush.msra.mxu0 %v1569
    %1619 = vmatpush.msra.mxu0 %v1568
    %1620 = vmatpush.msra.mxu0 %v1567
    %1621 = vmatpush.msra.mxu0 %v1566
    %1622 = vmatpush.msra.mxu0 %v1565
    %1623 = vmatpush.msra.mxu0 %v1564
    %1624 = vmatpush.msra.mxu0 %v1563
    %1625 = vmatpush.msra.mxu0 %v1562
    %1626 = vmatpush.msra.mxu0 %v1561
    %1627 = vmatpush.msra.mxu0 %v1560
    %1628 = vmatmul.f32.gmra.mxu0 %v1517
    %v1629 = vpop.f32.mrf.mxu0
    %v1630 = vadd.f32 %v1610, %v1629
    %1631 = vdwg.mxu0
    %1632 = vmatpush.msra.mxu0 %v1591
    %1633 = vmatpush.msra.mxu0 %v1590
    %1634 = vmatpush.msra.mxu0 %v1589
    %1635 = vmatpush.msra.mxu0 %v1588
    %1636 = vmatpush.msra.mxu0 %v1587
    %1637 = vmatpush.msra.mxu0 %v1586
    %1638 = vmatpush.msra.mxu0 %v1585
    %1639 = vmatpush.msra.mxu0 %v1584
    %1640 = vmatpush.msra.mxu0 %v1583
    %1641 = vmatpush.msra.mxu0 %v1582
    %1642 = vmatpush.msra.mxu0 %v1581
    %1643 = vmatpush.msra.mxu0 %v1580
    %1644 = vmatpush.msra.mxu0 %v1579
    %1645 = vmatpush.msra.mxu0 %v1578
    %1646 = vmatpush.msra.mxu0 %v1577
    %1647 = vmatpush.msra.mxu0 %v1576
    %1648 = vmatmul.f32.gmra.mxu0 %v1542
    %v1649 = vpop.f32.mrf.mxu0
    %v1650 = vadd.f32 %v1630, %v1649
    %1651 = vdwg.mxu0
    %v1652 = vld [vmem:[%s31] sm:$0x3]
    %vm1653 = vcmask 1043456
    %v1654 = vsel %vm1653, %v1650, 0.0
    %v1655 = vrot.slane %v1654, 4
    %v1656 = vadd.f32 %v1654, %v1655
    %v1657 = vrot.slane %v1656, 2
    %v1658 = vadd.f32 %v1656, %v1657
    %v1659 = vrot.slane %v1658, 1
    %v1660 = vadd.f32 %v1658, %v1659
    %v1661 = vld [vmem:[#allocation9] sm:$0xff]
    %v1662 = vld [vmem:[#allocation9 + $0x8] sm:$0xff]
    %v1663 = vld [vmem:[#allocation9 + $0x10] sm:$0xff]
    %v1664 = vld [vmem:[#allocation9 + $0x18] sm:$0xff]
    %v1665 = vld [vmem:[#allocation9 + $0x20] sm:$0xff]
    %v1666 = vld [vmem:[#allocation9 + $0x28] sm:$0xff]
    %v1667 = vld [vmem:[#allocation9 + $0x30] sm:$0xff]
    %v1668 = vld [vmem:[#allocation9 + $0x38] sm:$0xff]
    %v1669 = vld [vmem:[#allocation9 + $0x40] sm:$0xff]
    %v1670 = vld [vmem:[#allocation9 + $0x48] sm:$0xff]
    %v1671 = vld [vmem:[#allocation9 + $0x50] sm:$0xff]
    %v1672 = vld [vmem:[#allocation9 + $0x58] sm:$0xff]
    %v1673 = vld [vmem:[#allocation9 + $0x60] sm:$0xff]
    %v1674 = vld [vmem:[#allocation9 + $0x68] sm:$0xff]
    %v1675 = vld [vmem:[#allocation9 + $0x70] sm:$0xff]
    %v1676 = vld [vmem:[#allocation9 + $0x78] sm:$0xff]
    %1677 = vmatpush.msra.mxu0 %v1676
    %1678 = vmatpush.msra.mxu0 %v1675
    %1679 = vmatpush.msra.mxu0 %v1674
    %1680 = vmatpush.msra.mxu0 %v1673
    %1681 = vmatpush.msra.mxu0 %v1672
    %1682 = vmatpush.msra.mxu0 %v1671
    %1683 = vmatpush.msra.mxu0 %v1670
    %1684 = vmatpush.msra.mxu0 %v1669
    %1685 = vmatpush.msra.mxu0 %v1668
    %1686 = vmatpush.msra.mxu0 %v1667
    %1687 = vmatpush.msra.mxu0 %v1666
    %1688 = vmatpush.msra.mxu0 %v1665
    %1689 = vmatpush.msra.mxu0 %v1664
    %1690 = vmatpush.msra.mxu0 %v1663
    %1691 = vmatpush.msra.mxu0 %v1662
    %1692 = vmatpush.msra.mxu0 %v1661
    %1693 = vmatmul.f32.gmra.mxu0 %v1660
    %v1694 = vpop.f32.mrf.mxu0
    %v1695 = vadd.f32 0.0, %v1694
    %1696 = vdwg.mxu0
    %v1697 = vperm.slane %v1695, 0
    %v1698 = vsub.f32 %v1650, %v1697
    %v1699 = vmul.f32 %v1698, %v1698
    %v1700 = vsel %vm1653, %v1699, 0.0
    %v1701 = vrot.slane %v1700, 4
    %v1702 = vadd.f32 %v1700, %v1701
    %v1703 = vrot.slane %v1702, 2
    %v1704 = vadd.f32 %v1702, %v1703
    %v1705 = vrot.slane %v1704, 1
    %v1706 = vadd.f32 %v1704, %v1705
    %1707 = vmatpush.msra.mxu0 %v1676
    %1708 = vmatpush.msra.mxu0 %v1675
    %1709 = vmatpush.msra.mxu0 %v1674
    %1710 = vmatpush.msra.mxu0 %v1673
    %1711 = vmatpush.msra.mxu0 %v1672
    %1712 = vmatpush.msra.mxu0 %v1671
    %1713 = vmatpush.msra.mxu0 %v1670
    %1714 = vmatpush.msra.mxu0 %v1669
    %1715 = vmatpush.msra.mxu0 %v1668
    %1716 = vmatpush.msra.mxu0 %v1667
    %1717 = vmatpush.msra.mxu0 %v1666
    %1718 = vmatpush.msra.mxu0 %v1665
    %1719 = vmatpush.msra.mxu0 %v1664
    %1720 = vmatpush.msra.mxu0 %v1663
    %1721 = vmatpush.msra.mxu0 %v1662
    %1722 = vmatpush.msra.mxu0 %v1661
    %1723 = vmatmul.f32.gmra.mxu0 %v1706
    %v1724 = vpop.f32.mrf.mxu0
    %v1725 = vadd.f32 1e-05, %v1724
    %1726 = vdwg.mxu0
    %v1727 = vrsqrt.pop %v1725
    %v1728 = vmul.f32 %v1727, %v1725
    %v1729 = vmul.f32 %v1728, %v1727
    %v1730 = vmul.f32 0.5, %v1729
    %v1731 = vsub.f32 1.5, %v1730
    %v1732 = vmul.f32 %v1727, %v1731
    %vm1733 = vweird.f32 %v1725
    %vm1734 = vweird.f32 %v1727
    %vm1735 = vmor %vm1733, %vm1734
    %v1736 = vsel %vm1735, %v1727, %v1732
    %v1737 = vmul.f32 %v1736, %v1652
    %v1738 = vperm.slane %v1737, 0
    %v1739 = vmul.f32 %v1698, %v1738
    %v1740 = vperm.slane %v1652, 1
    %v1741 = vadd.f32 %v1739, %v1740
    %v1742 = vmax.f32 %v1741, 0.0
    %v1743 = vld [vmem:[%s35] sm:$0x3]
    %vm1744 = vcmask 31744
    %v1746 = vsel %vm1744, %v1743, 0
    %v1749 = vsel %vm1653, %v1742, 0
    %1751 = vmatpush.msra.mxu0 0.0
    %1752 = vmatpush.msra.mxu0 0.0
    %1753 = vmatpush.msra.mxu0 0.0
    %1754 = vmatpush.msra.mxu0 0.0
    %1755 = vmatpush.msra.mxu0 0.0
    %1756 = vmatpush.msra.mxu0 0.0
    %1757 = vmatpush.msra.mxu0 0.0
    %1758 = vmatpush.msra.mxu0 0.0
    %1759 = vmatpush.msra.mxu0 0.0
    %1760 = vmatpush.msra.mxu0 0.0
    %1761 = vmatpush.msra.mxu0 0.0
    %1762 = vmatpush.msra.mxu0 0.0
    %1763 = vmatpush.msra.mxu0 0.0
    %1764 = vmatpush.msra.mxu0 0.0
    %1765 = vmatpush.msra.mxu0 0.0
    %1766 = vmatpush.msra.mxu0 %v1749
    %1767 = vmatmul.f32.gmra.mxu0 %v1746
    %v1768 = vpop.f32.mrf.mxu0
    %v1769 = vadd.f32 0.0, %v1768
    %1770 = vdwg.mxu0
    %s1771 = scalar_lea.vmem %s35, 2
    %v1772 = vld [vmem:[%s1771] sm:$0x3]
    %v1774 = vsel %vm1744, %v1772, 0
    %1776 = vmatpush.msra.mxu0 0.0
    %1777 = vmatpush.msra.mxu0 0.0
    %1778 = vmatpush.msra.mxu0 0.0
    %1779 = vmatpush.msra.mxu0 0.0
    %1780 = vmatpush.msra.mxu0 0.0
    %1781 = vmatpush.msra.mxu0 0.0
    %1782 = vmatpush.msra.mxu0 0.0
    %1783 = vmatpush.msra.mxu0 0.0
    %1784 = vmatpush.msra.mxu0 0.0
    %1785 = vmatpush.msra.mxu0 0.0
    %1786 = vmatpush.msra.mxu0 0.0
    %1787 = vmatpush.msra.mxu0 0.0
    %1788 = vmatpush.msra.mxu0 0.0
    %1789 = vmatpush.msra.mxu0 0.0
    %1790 = vmatpush.msra.mxu0 0.0
    %1791 = vmatpush.msra.mxu0 %v1749
    %1792 = vmatmul.f32.gmra.mxu0 %v1774
    %v1793 = vpop.f32.mrf.mxu0
    %v1794 = vadd.f32 0.0, %v1793
    %1795 = vdwg.mxu0
    %v1796 = vld [vmem:[%s37] sm:$0xff]
    %v1797 = vld [vmem:[%s37 + $0x8] sm:$0xff]
    %v1798 = vld [vmem:[%s37 + $0x10] sm:$0xff]
    %v1799 = vld [vmem:[%s37 + $0x18] sm:$0xff]
    %v1800 = vld [vmem:[%s37 + $0x20] sm:$0xff]
    %v1801 = vld [vmem:[%s37 + $0x28] sm:$0xff]
    %v1802 = vld [vmem:[%s37 + $0x30] sm:$0xff]
    %v1803 = vld [vmem:[%s37 + $0x38] sm:$0xff]
    %v1804 = vld [vmem:[%s37 + $0x40] sm:$0xff]
    %v1805 = vld [vmem:[%s37 + $0x48] sm:$0xff]
    %v1806 = vld [vmem:[%s37 + $0x50] sm:$0xff]
    %v1807 = vld [vmem:[%s37 + $0x58] sm:$0xff]
    %v1808 = vld [vmem:[%s37 + $0x60] sm:$0xff]
    %v1809 = vld [vmem:[%s37 + $0x68] sm:$0xff]
    %v1810 = vld [vmem:[%s37 + $0x70] sm:$0xff]
    %v1811 = vld [vmem:[%s37 + $0x78] sm:$0xff]
    %v1812 = vld [vmem:[%s37 + $0x80] sm:$0xff]
    %v1813 = vld [vmem:[%s37 + $0x88] sm:$0xff]
    %v1814 = vld [vmem:[%s37 + $0x90] sm:$0xff]
    %v1815 = vld [vmem:[%s37 + $0x98] sm:$0xff]
    %v1816 = vld [vmem:[%s37 + $0xa0] sm:$0xff]
    %v1817 = vld [vmem:[%s37 + $0xa8] sm:$0xff]
    %v1818 = vld [vmem:[%s37 + $0xb0] sm:$0xff]
    %v1819 = vld [vmem:[%s37 + $0xb8] sm:$0xff]
    %v1820 = vld [vmem:[%s37 + $0xc0] sm:$0xff]
    %v1821 = vld [vmem:[%s37 + $0xc8] sm:$0xff]
    %v1822 = vld [vmem:[%s37 + $0xd0] sm:$0xff]
    %v1823 = vld [vmem:[%s37 + $0xd8] sm:$0xff]
    %v1824 = vld [vmem:[%s37 + $0xe0] sm:$0xff]
    %v1825 = vld [vmem:[%s37 + $0xe8] sm:$0xff]
    %v1826 = vld [vmem:[%s37 + $0xf0] sm:$0xff]
    %v1827 = vld [vmem:[%s37 + $0xf8] sm:$0xff]
    %1828 = vmatpush.msra.mxu0 %v1811
    %1829 = vmatpush.msra.mxu0 %v1810
    %1830 = vmatpush.msra.mxu0 %v1809
    %1831 = vmatpush.msra.mxu0 %v1808
    %1832 = vmatpush.msra.mxu0 %v1807
    %1833 = vmatpush.msra.mxu0 %v1806
    %1834 = vmatpush.msra.mxu0 %v1805
    %1835 = vmatpush.msra.mxu0 %v1804
    %1836 = vmatpush.msra.mxu0 %v1803
    %1837 = vmatpush.msra.mxu0 %v1802
    %1838 = vmatpush.msra.mxu0 %v1801
    %1839 = vmatpush.msra.mxu0 %v1800
    %1840 = vmatpush.msra.mxu0 %v1799
    %1841 = vmatpush.msra.mxu0 %v1798
    %1842 = vmatpush.msra.mxu0 %v1797
    %1843 = vmatpush.msra.mxu0 %v1796
    %1844 = vmatmul.f32.gmra.mxu0 %v1769
    %v1845 = vpop.f32.mrf.mxu0
    %v1846 = vadd.f32 0.0, %v1845
    %1847 = vdwg.mxu0
    %1848 = vmatpush.msra.mxu0 %v1827
    %1849 = vmatpush.msra.mxu0 %v1826
    %1850 = vmatpush.msra.mxu0 %v1825
    %1851 = vmatpush.msra.mxu0 %v1824
    %1852 = vmatpush.msra.mxu0 %v1823
    %1853 = vmatpush.msra.mxu0 %v1822
    %1854 = vmatpush.msra.mxu0 %v1821
    %1855 = vmatpush.msra.mxu0 %v1820
    %1856 = vmatpush.msra.mxu0 %v1819
    %1857 = vmatpush.msra.mxu0 %v1818
    %1858 = vmatpush.msra.mxu0 %v1817
    %1859 = vmatpush.msra.mxu0 %v1816
    %1860 = vmatpush.msra.mxu0 %v1815
    %1861 = vmatpush.msra.mxu0 %v1814
    %1862 = vmatpush.msra.mxu0 %v1813
    %1863 = vmatpush.msra.mxu0 %v1812
    %1864 = vmatmul.f32.gmra.mxu0 %v1794
    %v1865 = vpop.f32.mrf.mxu0
    %v1866 = vadd.f32 %v1846, %v1865
    %1867 = vdwg.mxu0
    %v1868 = vld [vmem:[%s39] sm:$0x3]
    %vm1869 = vcmask 1041408
    %v1870 = vsel %vm1869, %v1866, 0.0
    %v1871 = vrot.slane %v1870, 4
    %v1872 = vadd.f32 %v1870, %v1871
    %v1873 = vrot.slane %v1872, 2
    %v1874 = vadd.f32 %v1872, %v1873
    %v1875 = vrot.slane %v1874, 1
    %v1876 = vadd.f32 %v1874, %v1875
    %v1877 = vld [vmem:[#allocation10] sm:$0xff]
    %v1878 = vld [vmem:[#allocation10 + $0x8] sm:$0xff]
    %v1879 = vld [vmem:[#allocation10 + $0x10] sm:$0xff]
    %v1880 = vld [vmem:[#allocation10 + $0x18] sm:$0xff]
    %v1881 = vld [vmem:[#allocation10 + $0x20] sm:$0xff]
    %v1882 = vld [vmem:[#allocation10 + $0x28] sm:$0xff]
    %v1883 = vld [vmem:[#allocation10 + $0x30] sm:$0xff]
    %v1884 = vld [vmem:[#allocation10 + $0x38] sm:$0xff]
    %v1885 = vld [vmem:[#allocation10 + $0x40] sm:$0xff]
    %v1886 = vld [vmem:[#allocation10 + $0x48] sm:$0xff]
    %v1887 = vld [vmem:[#allocation10 + $0x50] sm:$0xff]
    %v1888 = vld [vmem:[#allocation10 + $0x58] sm:$0xff]
    %v1889 = vld [vmem:[#allocation10 + $0x60] sm:$0xff]
    %v1890 = vld [vmem:[#allocation10 + $0x68] sm:$0xff]
    %v1891 = vld [vmem:[#allocation10 + $0x70] sm:$0xff]
    %v1892 = vld [vmem:[#allocation10 + $0x78] sm:$0xff]
    %1893 = vmatpush.msra.mxu0 %v1892
    %1894 = vmatpush.msra.mxu0 %v1891
    %1895 = vmatpush.msra.mxu0 %v1890
    %1896 = vmatpush.msra.mxu0 %v1889
    %1897 = vmatpush.msra.mxu0 %v1888
    %1898 = vmatpush.msra.mxu0 %v1887
    %1899 = vmatpush.msra.mxu0 %v1886
    %1900 = vmatpush.msra.mxu0 %v1885
    %1901 = vmatpush.msra.mxu0 %v1884
    %1902 = vmatpush.msra.mxu0 %v1883
    %1903 = vmatpush.msra.mxu0 %v1882
    %1904 = vmatpush.msra.mxu0 %v1881
    %1905 = vmatpush.msra.mxu0 %v1880
    %1906 = vmatpush.msra.mxu0 %v1879
    %1907 = vmatpush.msra.mxu0 %v1878
    %1908 = vmatpush.msra.mxu0 %v1877
    %1909 = vmatmul.f32.gmra.mxu0 %v1876
    %v1910 = vpop.f32.mrf.mxu0
    %v1911 = vadd.f32 0.0, %v1910
    %1912 = vdwg.mxu0
    %v1913 = vperm.slane %v1911, 0
    %v1914 = vsub.f32 %v1866, %v1913
    %v1915 = vmul.f32 %v1914, %v1914
    %v1916 = vsel %vm1869, %v1915, 0.0
    %v1917 = vrot.slane %v1916, 4
    %v1918 = vadd.f32 %v1916, %v1917
    %v1919 = vrot.slane %v1918, 2
    %v1920 = vadd.f32 %v1918, %v1919
    %v1921 = vrot.slane %v1920, 1
    %v1922 = vadd.f32 %v1920, %v1921
    %1923 = vmatpush.msra.mxu0 %v1892
    %1924 = vmatpush.msra.mxu0 %v1891
    %1925 = vmatpush.msra.mxu0 %v1890
    %1926 = vmatpush.msra.mxu0 %v1889
    %1927 = vmatpush.msra.mxu0 %v1888
    %1928 = vmatpush.msra.mxu0 %v1887
    %1929 = vmatpush.msra.mxu0 %v1886
    %1930 = vmatpush.msra.mxu0 %v1885
    %1931 = vmatpush.msra.mxu0 %v1884
    %1932 = vmatpush.msra.mxu0 %v1883
    %1933 = vmatpush.msra.mxu0 %v1882
    %1934 = vmatpush.msra.mxu0 %v1881
    %1935 = vmatpush.msra.mxu0 %v1880
    %1936 = vmatpush.msra.mxu0 %v1879
    %1937 = vmatpush.msra.mxu0 %v1878
    %1938 = vmatpush.msra.mxu0 %v1877
    %1939 = vmatmul.f32.gmra.mxu0 %v1922
    %v1940 = vpop.f32.mrf.mxu0
    %v1941 = vadd.f32 1e-05, %v1940
    %1942 = vdwg.mxu0
    %v1943 = vrsqrt.pop %v1941
    %v1944 = vmul.f32 %v1943, %v1941
    %v1945 = vmul.f32 %v1944, %v1943
    %v1946 = vmul.f32 0.5, %v1945
    %v1947 = vsub.f32 1.5, %v1946
    %v1948 = vmul.f32 %v1943, %v1947
    %vm1949 = vweird.f32 %v1941
    %vm1950 = vweird.f32 %v1943
    %vm1951 = vmor %vm1949, %vm1950
    %v1952 = vsel %vm1951, %v1943, %v1948
    %v1953 = vmul.f32 %v1952, %v1868
    %v1954 = vperm.slane %v1953, 0
    %v1955 = vmul.f32 %v1914, %v1954
    %v1956 = vperm.slane %v1868, 1
    %v1957 = vadd.f32 %v1955, %v1956
    %v1958 = vmax.f32 %v1957, 0.0
    %v1959 = vld [vmem:[#allocation12] sm:$0xff]
    %v1960 = vld [vmem:[#allocation12 + $0x8] sm:$0xff]
    %v1961 = vld [vmem:[#allocation12 + $0x10] sm:$0xff]
    %v1962 = vld [vmem:[#allocation12 + $0x18] sm:$0xff]
    %v1963 = vld [vmem:[#allocation12 + $0x20] sm:$0xff]
    %v1964 = vld [vmem:[#allocation12 + $0x28] sm:$0xff]
    %v1965 = vld [vmem:[#allocation12 + $0x30] sm:$0xff]
    %v1966 = vld [vmem:[#allocation12 + $0x38] sm:$0xff]
    %v1967 = vld [vmem:[#allocation12 + $0x40] sm:$0xff]
    %v1968 = vld [vmem:[#allocation12 + $0x48] sm:$0xff]
    %v1969 = vld [vmem:[#allocation12 + $0x50] sm:$0xff]
    %v1970 = vld [vmem:[#allocation12 + $0x58] sm:$0xff]
    %v1971 = vld [vmem:[#allocation12 + $0x60] sm:$0xff]
    %v1972 = vld [vmem:[#allocation12 + $0x68] sm:$0xff]
    %v1973 = vld [vmem:[#allocation12 + $0x70] sm:$0xff]
    %v1974 = vld [vmem:[#allocation12 + $0x78] sm:$0xff]
    %v1975 = vld [vmem:[%s45] sm:$0x1]
    %v1977 = vperm.slane %v1975, 0
    %1979 = vmatpush.msra.mxu0 %v1974
    %1980 = vmatpush.msra.mxu0 %v1973
    %1981 = vmatpush.msra.mxu0 %v1972
    %1982 = vmatpush.msra.mxu0 %v1971
    %1983 = vmatpush.msra.mxu0 %v1970
    %1984 = vmatpush.msra.mxu0 %v1969
    %1985 = vmatpush.msra.mxu0 %v1968
    %1986 = vmatpush.msra.mxu0 %v1967
    %1987 = vmatpush.msra.mxu0 %v1966
    %1988 = vmatpush.msra.mxu0 %v1965
    %1989 = vmatpush.msra.mxu0 %v1964
    %1990 = vmatpush.msra.mxu0 %v1963
    %1991 = vmatpush.msra.mxu0 %v1962
    %1992 = vmatpush.msra.mxu0 %v1961
    %1993 = vmatpush.msra.mxu0 %v1960
    %1994 = vmatpush.msra.mxu0 %v1959
    %1995 = vmatmul.f32.gmra.mxu0 %v1958
    %v1996 = vpop.f32.mrf.mxu0
    %v1997 = vadd.f32 %v1977, %v1996
    %1998 = vdwg.mxu0
    %v1999 = vld [vmem:[%s47] sm:$0xf]
    %vm2000 = vcmask 15360
    %v2002 = vsel %vm2000, %v1999, 0
    %v2005 = vsel %vm1869, %v1997, 0
    %2007 = vmatpush.msra.mxu0 0.0
    %2008 = vmatpush.msra.mxu0 0.0
    %2009 = vmatpush.msra.mxu0 0.0
    %2010 = vmatpush.msra.mxu0 0.0
    %2011 = vmatpush.msra.mxu0 0.0
    %2012 = vmatpush.msra.mxu0 0.0
    %2013 = vmatpush.msra.mxu0 0.0
    %2014 = vmatpush.msra.mxu0 0.0
    %2015 = vmatpush.msra.mxu0 0.0
    %2016 = vmatpush.msra.mxu0 0.0
    %2017 = vmatpush.msra.mxu0 0.0
    %2018 = vmatpush.msra.mxu0 0.0
    %2019 = vmatpush.msra.mxu0 0.0
    %2020 = vmatpush.msra.mxu0 0.0
    %2021 = vmatpush.msra.mxu0 0.0
    %2022 = vmatpush.msra.mxu0 %v2005
    %2023 = vmatmul.f32.gmra.mxu0 %v2002
    %v2024 = vpop.f32.mrf.mxu0
    %v2025 = vadd.f32 0.0, %v2024
    %2026 = vdwg.mxu0
    %s2027 = scalar_lea.vmem %s47, 4
    %v2028 = vld [vmem:[%s2027] sm:$0xf]
    %v2030 = vsel %vm2000, %v2028, 0
    %2032 = vmatpush.msra.mxu0 0.0
    %2033 = vmatpush.msra.mxu0 0.0
    %2034 = vmatpush.msra.mxu0 0.0
    %2035 = vmatpush.msra.mxu0 0.0
    %2036 = vmatpush.msra.mxu0 0.0
    %2037 = vmatpush.msra.mxu0 0.0
    %2038 = vmatpush.msra.mxu0 0.0
    %2039 = vmatpush.msra.mxu0 0.0
    %2040 = vmatpush.msra.mxu0 0.0
    %2041 = vmatpush.msra.mxu0 0.0
    %2042 = vmatpush.msra.mxu0 0.0
    %2043 = vmatpush.msra.mxu0 0.0
    %2044 = vmatpush.msra.mxu0 0.0
    %2045 = vmatpush.msra.mxu0 0.0
    %2046 = vmatpush.msra.mxu0 0.0
    %2047 = vmatpush.msra.mxu0 %v2005
    %2048 = vmatmul.f32.gmra.mxu0 %v2030
    %v2049 = vpop.f32.mrf.mxu0
    %v2050 = vadd.f32 0.0, %v2049
    %2051 = vdwg.mxu0
    %v2052 = vld [vmem:[#allocation13] sm:$0xff]
    %v2053 = vld [vmem:[#allocation13 + $0x8] sm:$0xff]
    %v2054 = vld [vmem:[#allocation13 + $0x10] sm:$0xff]
    %v2055 = vld [vmem:[#allocation13 + $0x18] sm:$0xff]
    %v2056 = vld [vmem:[#allocation13 + $0x20] sm:$0xff]
    %v2057 = vld [vmem:[#allocation13 + $0x28] sm:$0xff]
    %v2058 = vld [vmem:[#allocation13 + $0x30] sm:$0xff]
    %v2059 = vld [vmem:[#allocation13 + $0x38] sm:$0xff]
    %v2060 = vld [vmem:[#allocation13 + $0x40] sm:$0xff]
    %v2061 = vld [vmem:[#allocation13 + $0x48] sm:$0xff]
    %v2062 = vld [vmem:[#allocation13 + $0x50] sm:$0xff]
    %v2063 = vld [vmem:[#allocation13 + $0x58] sm:$0xff]
    %v2064 = vld [vmem:[#allocation13 + $0x60] sm:$0xff]
    %v2065 = vld [vmem:[#allocation13 + $0x68] sm:$0xff]
    %v2066 = vld [vmem:[#allocation13 + $0x70] sm:$0xff]
    %v2067 = vld [vmem:[#allocation13 + $0x78] sm:$0xff]
    %v2068 = vld [vmem:[#allocation13 + $0x80] sm:$0xff]
    %v2069 = vld [vmem:[#allocation13 + $0x88] sm:$0xff]
    %v2070 = vld [vmem:[#allocation13 + $0x90] sm:$0xff]
    %v2071 = vld [vmem:[#allocation13 + $0x98] sm:$0xff]
    %v2072 = vld [vmem:[#allocation13 + $0xa0] sm:$0xff]
    %v2073 = vld [vmem:[#allocation13 + $0xa8] sm:$0xff]
    %v2074 = vld [vmem:[#allocation13 + $0xb0] sm:$0xff]
    %v2075 = vld [vmem:[#allocation13 + $0xb8] sm:$0xff]
    %v2076 = vld [vmem:[#allocation13 + $0xc0] sm:$0xff]
    %v2077 = vld [vmem:[#allocation13 + $0xc8] sm:$0xff]
    %v2078 = vld [vmem:[#allocation13 + $0xd0] sm:$0xff]
    %v2079 = vld [vmem:[#allocation13 + $0xd8] sm:$0xff]
    %v2080 = vld [vmem:[#allocation13 + $0xe0] sm:$0xff]
    %v2081 = vld [vmem:[#allocation13 + $0xe8] sm:$0xff]
    %v2082 = vld [vmem:[#allocation13 + $0xf0] sm:$0xff]
    %v2083 = vld [vmem:[#allocation13 + $0xf8] sm:$0xff]
    %2084 = vmatpush.msra.mxu0 %v2067
    %2085 = vmatpush.msra.mxu0 %v2066
    %2086 = vmatpush.msra.mxu0 %v2065
    %2087 = vmatpush.msra.mxu0 %v2064
    %2088 = vmatpush.msra.mxu0 %v2063
    %2089 = vmatpush.msra.mxu0 %v2062
    %2090 = vmatpush.msra.mxu0 %v2061
    %2091 = vmatpush.msra.mxu0 %v2060
    %2092 = vmatpush.msra.mxu0 %v2059
    %2093 = vmatpush.msra.mxu0 %v2058
    %2094 = vmatpush.msra.mxu0 %v2057
    %2095 = vmatpush.msra.mxu0 %v2056
    %2096 = vmatpush.msra.mxu0 %v2055
    %2097 = vmatpush.msra.mxu0 %v2054
    %2098 = vmatpush.msra.mxu0 %v2053
    %2099 = vmatpush.msra.mxu0 %v2052
    %2100 = vmatmul.f32.gmra.mxu0 %v2025
    %v2101 = vpop.f32.mrf.mxu0
    %v2102 = vadd.f32 0.0, %v2101
    %2103 = vdwg.mxu0
    %2104 = vmatpush.msra.mxu0 %v2083
    %2105 = vmatpush.msra.mxu0 %v2082
    %2106 = vmatpush.msra.mxu0 %v2081
    %2107 = vmatpush.msra.mxu0 %v2080
    %2108 = vmatpush.msra.mxu0 %v2079
    %2109 = vmatpush.msra.mxu0 %v2078
    %2110 = vmatpush.msra.mxu0 %v2077
    %2111 = vmatpush.msra.mxu0 %v2076
    %2112 = vmatpush.msra.mxu0 %v2075
    %2113 = vmatpush.msra.mxu0 %v2074
    %2114 = vmatpush.msra.mxu0 %v2073
    %2115 = vmatpush.msra.mxu0 %v2072
    %2116 = vmatpush.msra.mxu0 %v2071
    %2117 = vmatpush.msra.mxu0 %v2070
    %2118 = vmatpush.msra.mxu0 %v2069
    %2119 = vmatpush.msra.mxu0 %v2068
    %2120 = vmatmul.f32.gmra.mxu0 %v2050
    %v2121 = vpop.f32.mrf.mxu0
    %v2122 = vadd.f32 %v2102, %v2121
    %2123 = vdwg.mxu0
    %v2124 = vld [vmem:[%s51] sm:$0x3]
    %v2125 = vsel %vm1653, %v2122, 0.0
    %v2126 = vrot.slane %v2125, 4
    %v2127 = vadd.f32 %v2125, %v2126
    %v2128 = vrot.slane %v2127, 2
    %v2129 = vadd.f32 %v2127, %v2128
    %v2130 = vrot.slane %v2129, 1
    %v2131 = vadd.f32 %v2129, %v2130
    %v2132 = vld [vmem:[#allocation15] sm:$0xff]
    %v2133 = vld [vmem:[#allocation15 + $0x8] sm:$0xff]
    %v2134 = vld [vmem:[#allocation15 + $0x10] sm:$0xff]
    %v2135 = vld [vmem:[#allocation15 + $0x18] sm:$0xff]
    %v2136 = vld [vmem:[#allocation15 + $0x20] sm:$0xff]
    %v2137 = vld [vmem:[#allocation15 + $0x28] sm:$0xff]
    %v2138 = vld [vmem:[#allocation15 + $0x30] sm:$0xff]
    %v2139 = vld [vmem:[#allocation15 + $0x38] sm:$0xff]
    %v2140 = vld [vmem:[#allocation15 + $0x40] sm:$0xff]
    %v2141 = vld [vmem:[#allocation15 + $0x48] sm:$0xff]
    %v2142 = vld [vmem:[#allocation15 + $0x50] sm:$0xff]
    %v2143 = vld [vmem:[#allocation15 + $0x58] sm:$0xff]
    %v2144 = vld [vmem:[#allocation15 + $0x60] sm:$0xff]
    %v2145 = vld [vmem:[#allocation15 + $0x68] sm:$0xff]
    %v2146 = vld [vmem:[#allocation15 + $0x70] sm:$0xff]
    %v2147 = vld [vmem:[#allocation15 + $0x78] sm:$0xff]
    %2148 = vmatpush.msra.mxu0 %v2147
    %2149 = vmatpush.msra.mxu0 %v2146
    %2150 = vmatpush.msra.mxu0 %v2145
    %2151 = vmatpush.msra.mxu0 %v2144
    %2152 = vmatpush.msra.mxu0 %v2143
    %2153 = vmatpush.msra.mxu0 %v2142
    %2154 = vmatpush.msra.mxu0 %v2141
    %2155 = vmatpush.msra.mxu0 %v2140
    %2156 = vmatpush.msra.mxu0 %v2139
    %2157 = vmatpush.msra.mxu0 %v2138
    %2158 = vmatpush.msra.mxu0 %v2137
    %2159 = vmatpush.msra.mxu0 %v2136
    %2160 = vmatpush.msra.mxu0 %v2135
    %2161 = vmatpush.msra.mxu0 %v2134
    %2162 = vmatpush.msra.mxu0 %v2133
    %2163 = vmatpush.msra.mxu0 %v2132
    %2164 = vmatmul.f32.gmra.mxu0 %v2131
    %v2165 = vpop.f32.mrf.mxu0
    %v2166 = vadd.f32 0.0, %v2165
    %2167 = vdwg.mxu0
    %v2168 = vperm.slane %v2166, 0
    %v2169 = vsub.f32 %v2122, %v2168
    %v2170 = vmul.f32 %v2169, %v2169
    %v2171 = vsel %vm1653, %v2170, 0.0
    %v2172 = vrot.slane %v2171, 4
    %v2173 = vadd.f32 %v2171, %v2172
    %v2174 = vrot.slane %v2173, 2
    %v2175 = vadd.f32 %v2173, %v2174
    %v2176 = vrot.slane %v2175, 1
    %v2177 = vadd.f32 %v2175, %v2176
    %2178 = vmatpush.msra.mxu0 %v2147
    %2179 = vmatpush.msra.mxu0 %v2146
    %2180 = vmatpush.msra.mxu0 %v2145
    %2181 = vmatpush.msra.mxu0 %v2144
    %2182 = vmatpush.msra.mxu0 %v2143
    %2183 = vmatpush.msra.mxu0 %v2142
    %2184 = vmatpush.msra.mxu0 %v2141
    %2185 = vmatpush.msra.mxu0 %v2140
    %2186 = vmatpush.msra.mxu0 %v2139
    %2187 = vmatpush.msra.mxu0 %v2138
    %2188 = vmatpush.msra.mxu0 %v2137
    %2189 = vmatpush.msra.mxu0 %v2136
    %2190 = vmatpush.msra.mxu0 %v2135
    %2191 = vmatpush.msra.mxu0 %v2134
    %2192 = vmatpush.msra.mxu0 %v2133
    %2193 = vmatpush.msra.mxu0 %v2132
    %2194 = vmatmul.f32.gmra.mxu0 %v2177
    %v2195 = vpop.f32.mrf.mxu0
    %v2196 = vadd.f32 1e-05, %v2195
    %2197 = vdwg.mxu0
    %v2198 = vrsqrt.pop %v2196
    %v2199 = vmul.f32 %v2198, %v2196
    %v2200 = vmul.f32 %v2199, %v2198
    %v2201 = vmul.f32 0.5, %v2200
    %v2202 = vsub.f32 1.5, %v2201
    %v2203 = vmul.f32 %v2198, %v2202
    %vm2204 = vweird.f32 %v2196
    %vm2205 = vweird.f32 %v2198
    %vm2206 = vmor %vm2204, %vm2205
    %v2207 = vsel %vm2206, %v2198, %v2203
    %v2208 = vmul.f32 %v2207, %v2124
    %v2209 = vperm.slane %v2208, 0
    %v2210 = vmul.f32 %v2169, %v2209
    %v2211 = vperm.slane %v2124, 1
    %v2212 = vadd.f32 %v2210, %v2211
    %v2213 = vmax.f32 %v2212, 0.0
    %v2214 = vld [vmem:[%s55] sm:$0xff]
    %v2216 = vsel %vm1744, %v2214, 0
    %v2219 = vsel %vm1653, %v2213, 0
    %2221 = vmatpush.msra.mxu0 0.0
    %2222 = vmatpush.msra.mxu0 0.0
    %2223 = vmatpush.msra.mxu0 0.0
    %2224 = vmatpush.msra.mxu0 0.0
    %2225 = vmatpush.msra.mxu0 0.0
    %2226 = vmatpush.msra.mxu0 0.0
    %2227 = vmatpush.msra.mxu0 0.0
    %2228 = vmatpush.msra.mxu0 0.0
    %2229 = vmatpush.msra.mxu0 0.0
    %2230 = vmatpush.msra.mxu0 0.0
    %2231 = vmatpush.msra.mxu0 0.0
    %2232 = vmatpush.msra.mxu0 0.0
    %2233 = vmatpush.msra.mxu0 0.0
    %2234 = vmatpush.msra.mxu0 0.0
    %2235 = vmatpush.msra.mxu0 0.0
    %2236 = vmatpush.msra.mxu0 %v2219
    %2237 = vmatmul.f32.gmra.mxu0 %v2216
    %v2238 = vpop.f32.mrf.mxu0
    %v2239 = vadd.f32 0.0, %v2238
    %2240 = vdwg.mxu0
    %s2241 = scalar_lea.vmem %s55, 8
    %v2242 = vld [vmem:[%s2241] sm:$0xff]
    %v2244 = vsel %vm1744, %v2242, 0
    %2246 = vmatpush.msra.mxu0 0.0
    %2247 = vmatpush.msra.mxu0 0.0
    %2248 = vmatpush.msra.mxu0 0.0
    %2249 = vmatpush.msra.mxu0 0.0
    %2250 = vmatpush.msra.mxu0 0.0
    %2251 = vmatpush.msra.mxu0 0.0
    %2252 = vmatpush.msra.mxu0 0.0
    %2253 = vmatpush.msra.mxu0 0.0
    %2254 = vmatpush.msra.mxu0 0.0
    %2255 = vmatpush.msra.mxu0 0.0
    %2256 = vmatpush.msra.mxu0 0.0
    %2257 = vmatpush.msra.mxu0 0.0
    %2258 = vmatpush.msra.mxu0 0.0
    %2259 = vmatpush.msra.mxu0 0.0
    %2260 = vmatpush.msra.mxu0 0.0
    %2261 = vmatpush.msra.mxu0 %v2219
    %2262 = vmatmul.f32.gmra.mxu0 %v2244
    %v2263 = vpop.f32.mrf.mxu0
    %v2264 = vadd.f32 0.0, %v2263
    %2265 = vdwg.mxu0
    %s2266 = scalar_lea.vmem %s55, 16
    %v2267 = vld [vmem:[%s2266] sm:$0xff]
    %v2269 = vsel %vm1744, %v2267, 0
    %2271 = vmatpush.msra.mxu0 0.0
    %2272 = vmatpush.msra.mxu0 0.0
    %2273 = vmatpush.msra.mxu0 0.0
    %2274 = vmatpush.msra.mxu0 0.0
    %2275 = vmatpush.msra.mxu0 0.0
    %2276 = vmatpush.msra.mxu0 0.0
    %2277 = vmatpush.msra.mxu0 0.0
    %2278 = vmatpush.msra.mxu0 0.0
    %2279 = vmatpush.msra.mxu0 0.0
    %2280 = vmatpush.msra.mxu0 0.0
    %2281 = vmatpush.msra.mxu0 0.0
    %2282 = vmatpush.msra.mxu0 0.0
    %2283 = vmatpush.msra.mxu0 0.0
    %2284 = vmatpush.msra.mxu0 0.0
    %2285 = vmatpush.msra.mxu0 0.0
    %2286 = vmatpush.msra.mxu0 %v2219
    %2287 = vmatmul.f32.gmra.mxu0 %v2269
    %v2288 = vpop.f32.mrf.mxu0
    %v2289 = vadd.f32 0.0, %v2288
    %2290 = vdwg.mxu0
    %v2291 = vld [vmem:[#allocation16] sm:$0xff]
    %v2292 = vld [vmem:[#allocation16 + $0x8] sm:$0xff]
    %v2293 = vld [vmem:[#allocation16 + $0x10] sm:$0xff]
    %v2294 = vld [vmem:[#allocation16 + $0x18] sm:$0xff]
    %v2295 = vld [vmem:[#allocation16 + $0x20] sm:$0xff]
    %v2296 = vld [vmem:[#allocation16 + $0x28] sm:$0xff]
    %v2297 = vld [vmem:[#allocation16 + $0x30] sm:$0xff]
    %v2298 = vld [vmem:[#allocation16 + $0x38] sm:$0xff]
    %v2299 = vld [vmem:[#allocation16 + $0x40] sm:$0xff]
    %v2300 = vld [vmem:[#allocation16 + $0x48] sm:$0xff]
    %v2301 = vld [vmem:[#allocation16 + $0x50] sm:$0xff]
    %v2302 = vld [vmem:[#allocation16 + $0x58] sm:$0xff]
    %v2303 = vld [vmem:[#allocation16 + $0x60] sm:$0xff]
    %v2304 = vld [vmem:[#allocation16 + $0x68] sm:$0xff]
    %v2305 = vld [vmem:[#allocation16 + $0x70] sm:$0xff]
    %v2306 = vld [vmem:[#allocation16 + $0x78] sm:$0xff]
    %v2307 = vld [vmem:[#allocation16 + $0x80] sm:$0xff]
    %v2308 = vld [vmem:[#allocation16 + $0x88] sm:$0xff]
    %v2309 = vld [vmem:[#allocation16 + $0x90] sm:$0xff]
    %v2310 = vld [vmem:[#allocation16 + $0x98] sm:$0xff]
    %v2311 = vld [vmem:[#allocation16 + $0xa0] sm:$0xff]
    %v2312 = vld [vmem:[#allocation16 + $0xa8] sm:$0xff]
    %v2313 = vld [vmem:[#allocation16 + $0xb0] sm:$0xff]
    %v2314 = vld [vmem:[#allocation16 + $0xb8] sm:$0xff]
    %v2315 = vld [vmem:[#allocation16 + $0xc0] sm:$0xff]
    %v2316 = vld [vmem:[#allocation16 + $0xc8] sm:$0xff]
    %v2317 = vld [vmem:[#allocation16 + $0xd0] sm:$0xff]
    %v2318 = vld [vmem:[#allocation16 + $0xd8] sm:$0xff]
    %v2319 = vld [vmem:[#allocation16 + $0xe0] sm:$0xff]
    %v2320 = vld [vmem:[#allocation16 + $0xe8] sm:$0xff]
    %v2321 = vld [vmem:[#allocation16 + $0xf0] sm:$0xff]
    %v2322 = vld [vmem:[#allocation16 + $0xf8] sm:$0xff]
    %v2323 = vld [vmem:[#allocation16 + $0x100] sm:$0xff]
    %v2324 = vld [vmem:[#allocation16 + $0x108] sm:$0xff]
    %v2325 = vld [vmem:[#allocation16 + $0x110] sm:$0xff]
    %v2326 = vld [vmem:[#allocation16 + $0x118] sm:$0xff]
    %v2327 = vld [vmem:[#allocation16 + $0x120] sm:$0xff]
    %v2328 = vld [vmem:[#allocation16 + $0x128] sm:$0xff]
    %v2329 = vld [vmem:[#allocation16 + $0x130] sm:$0xff]
    %v2330 = vld [vmem:[#allocation16 + $0x138] sm:$0xff]
    %v2331 = vld [vmem:[#allocation16 + $0x140] sm:$0xff]
    %v2332 = vld [vmem:[#allocation16 + $0x148] sm:$0xff]
    %v2333 = vld [vmem:[#allocation16 + $0x150] sm:$0xff]
    %v2334 = vld [vmem:[#allocation16 + $0x158] sm:$0xff]
    %v2335 = vld [vmem:[#allocation16 + $0x160] sm:$0xff]
    %v2336 = vld [vmem:[#allocation16 + $0x168] sm:$0xff]
    %v2337 = vld [vmem:[#allocation16 + $0x170] sm:$0xff]
    %v2338 = vld [vmem:[#allocation16 + $0x178] sm:$0xff]
    %2339 = vmatpush.msra.mxu0 %v2306
    %2340 = vmatpush.msra.mxu0 %v2305
    %2341 = vmatpush.msra.mxu0 %v2304
    %2342 = vmatpush.msra.mxu0 %v2303
    %2343 = vmatpush.msra.mxu0 %v2302
    %2344 = vmatpush.msra.mxu0 %v2301
    %2345 = vmatpush.msra.mxu0 %v2300
    %2346 = vmatpush.msra.mxu0 %v2299
    %2347 = vmatpush.msra.mxu0 %v2298
    %2348 = vmatpush.msra.mxu0 %v2297
    %2349 = vmatpush.msra.mxu0 %v2296
    %2350 = vmatpush.msra.mxu0 %v2295
    %2351 = vmatpush.msra.mxu0 %v2294
    %2352 = vmatpush.msra.mxu0 %v2293
    %2353 = vmatpush.msra.mxu0 %v2292
    %2354 = vmatpush.msra.mxu0 %v2291
    %2355 = vmatmul.f32.gmra.mxu0 %v2239
    %v2356 = vpop.f32.mrf.mxu0
    %v2357 = vadd.f32 0.0, %v2356
    %2358 = vdwg.mxu0
    %2359 = vmatpush.msra.mxu0 %v2322
    %2360 = vmatpush.msra.mxu0 %v2321
    %2361 = vmatpush.msra.mxu0 %v2320
    %2362 = vmatpush.msra.mxu0 %v2319
    %2363 = vmatpush.msra.mxu0 %v2318
    %2364 = vmatpush.msra.mxu0 %v2317
    %2365 = vmatpush.msra.mxu0 %v2316
    %2366 = vmatpush.msra.mxu0 %v2315
    %2367 = vmatpush.msra.mxu0 %v2314
    %2368 = vmatpush.msra.mxu0 %v2313
    %2369 = vmatpush.msra.mxu0 %v2312
    %2370 = vmatpush.msra.mxu0 %v2311
    %2371 = vmatpush.msra.mxu0 %v2310
    %2372 = vmatpush.msra.mxu0 %v2309
    %2373 = vmatpush.msra.mxu0 %v2308
    %2374 = vmatpush.msra.mxu0 %v2307
    %2375 = vmatmul.f32.gmra.mxu0 %v2264
    %v2376 = vpop.f32.mrf.mxu0
    %v2377 = vadd.f32 %v2357, %v2376
    %2378 = vdwg.mxu0
    %2379 = vmatpush.msra.mxu0 %v2338
    %2380 = vmatpush.msra.mxu0 %v2337
    %2381 = vmatpush.msra.mxu0 %v2336
    %2382 = vmatpush.msra.mxu0 %v2335
    %2383 = vmatpush.msra.mxu0 %v2334
    %2384 = vmatpush.msra.mxu0 %v2333
    %2385 = vmatpush.msra.mxu0 %v2332
    %2386 = vmatpush.msra.mxu0 %v2331
    %2387 = vmatpush.msra.mxu0 %v2330
    %2388 = vmatpush.msra.mxu0 %v2329
    %2389 = vmatpush.msra.mxu0 %v2328
    %2390 = vmatpush.msra.mxu0 %v2327
    %2391 = vmatpush.msra.mxu0 %v2326
    %2392 = vmatpush.msra.mxu0 %v2325
    %2393 = vmatpush.msra.mxu0 %v2324
    %2394 = vmatpush.msra.mxu0 %v2323
    %2395 = vmatmul.f32.gmra.mxu0 %v2289
    %v2396 = vpop.f32.mrf.mxu0
    %v2397 = vadd.f32 %v2377, %v2396
    %2398 = vdwg.mxu0
    %v2399 = vld [vmem:[%s59] sm:$0x3]
    %v2400 = vrot.slane %v2397, 4
    %v2401 = vadd.f32 %v2397, %v2400
    %v2402 = vrot.slane %v2401, 2
    %v2403 = vadd.f32 %v2401, %v2402
    %v2404 = vrot.slane %v2403, 1
    %v2405 = vadd.f32 %v2403, %v2404
    %v2406 = vmul.f32 %v2397, %v2397
    %v2407 = vrot.slane %v2406, 4
    %v2408 = vadd.f32 %v2406, %v2407
    %v2409 = vrot.slane %v2408, 2
    %v2410 = vadd.f32 %v2408, %v2409
    %v2411 = vrot.slane %v2410, 1
    %v2412 = vadd.f32 %v2410, %v2411
    %v2413 = vsel %vm830, %v2405, %v2412
    %v2414 = vld [vmem:[#allocation18] sm:$0xff]
    %v2415 = vld [vmem:[#allocation18 + $0x8] sm:$0xff]
    %v2416 = vld [vmem:[#allocation18 + $0x10] sm:$0xff]
    %v2417 = vld [vmem:[#allocation18 + $0x18] sm:$0xff]
    %v2418 = vld [vmem:[#allocation18 + $0x20] sm:$0xff]
    %v2419 = vld [vmem:[#allocation18 + $0x28] sm:$0xff]
    %v2420 = vld [vmem:[#allocation18 + $0x30] sm:$0xff]
    %v2421 = vld [vmem:[#allocation18 + $0x38] sm:$0xff]
    %v2422 = vld [vmem:[#allocation18 + $0x40] sm:$0xff]
    %v2423 = vld [vmem:[#allocation18 + $0x48] sm:$0xff]
    %v2424 = vld [vmem:[#allocation18 + $0x50] sm:$0xff]
    %v2425 = vld [vmem:[#allocation18 + $0x58] sm:$0xff]
    %v2426 = vld [vmem:[#allocation18 + $0x60] sm:$0xff]
    %v2427 = vld [vmem:[#allocation18 + $0x68] sm:$0xff]
    %v2428 = vld [vmem:[#allocation18 + $0x70] sm:$0xff]
    %v2429 = vld [vmem:[#allocation18 + $0x78] sm:$0xff]
    %2430 = vmatpush.msra.mxu0 %v2429
    %2431 = vmatpush.msra.mxu0 %v2428
    %2432 = vmatpush.msra.mxu0 %v2427
    %2433 = vmatpush.msra.mxu0 %v2426
    %2434 = vmatpush.msra.mxu0 %v2425
    %2435 = vmatpush.msra.mxu0 %v2424
    %2436 = vmatpush.msra.mxu0 %v2423
    %2437 = vmatpush.msra.mxu0 %v2422
    %2438 = vmatpush.msra.mxu0 %v2421
    %2439 = vmatpush.msra.mxu0 %v2420
    %2440 = vmatpush.msra.mxu0 %v2419
    %2441 = vmatpush.msra.mxu0 %v2418
    %2442 = vmatpush.msra.mxu0 %v2417
    %2443 = vmatpush.msra.mxu0 %v2416
    %2444 = vmatpush.msra.mxu0 %v2415
    %2445 = vmatpush.msra.mxu0 %v2414
    %2446 = vmatmul.f32.gmra.mxu0 %v2413
    %v2447 = vpop.f32.mrf.mxu0
    %v2448 = vadd.f32 0.0, %v2447
    %2449 = vdwg.mxu0
    %v2450 = vmul.f32 %v2448, %v2448
    %v2452 = vrot.slane %v2450, 7
    %v2454 = vsub.f32 %v2448, %v2452
    %v2455 = vmax.f32 %v2454, 0.0
    %v2456 = vperm.slane %v2448, 0
    %v2457 = vsub.f32 %v2397, %v2456
    %v2458 = vadd.f32 %v2455, 1e-05
    %v2459 = vrsqrt.pop %v2458
    %v2460 = vmul.f32 %v2459, %v2458
    %v2461 = vmul.f32 %v2460, %v2459
    %v2462 = vmul.f32 0.5, %v2461
    %v2463 = vsub.f32 1.5, %v2462
    %v2464 = vmul.f32 %v2459, %v2463
    %vm2465 = vweird.f32 %v2458
    %vm2466 = vweird.f32 %v2459
    %vm2467 = vmor %vm2465, %vm2466
    %v2468 = vsel %vm2467, %v2459, %v2464
    %v2470 = vrot.slane %v2399, 7
    %v2472 = vmul.f32 %v2468, %v2470
    %v2473 = vperm.slane %v2472, 1
    %v2474 = vmul.f32 %v2457, %v2473
    %v2475 = vperm.slane %v2399, 1
    %v2476 = vadd.f32 %v2474, %v2475
    %v2477 = vmax.f32 %v2476, 0.0
    %v2478 = vld [vmem:[%s63] sm:$0xff]
    %v2479 = vld [vmem:[%s63 + $0x8] sm:$0xff]
    %v2481 = vsel %vm1470, %v2478, 0
    %v2484 = vsel %vm1470, %v2479, 0
    %2486 = vmatpush.msra.mxu0 0.0
    %2487 = vmatpush.msra.mxu0 0.0
    %2488 = vmatpush.msra.mxu0 0.0
    %2489 = vmatpush.msra.mxu0 0.0
    %2490 = vmatpush.msra.mxu0 0.0
    %2491 = vmatpush.msra.mxu0 0.0
    %2492 = vmatpush.msra.mxu0 0.0
    %2493 = vmatpush.msra.mxu0 0.0
    %2494 = vmatpush.msra.mxu0 0.0
    %2495 = vmatpush.msra.mxu0 0.0
    %2496 = vmatpush.msra.mxu0 0.0
    %2497 = vmatpush.msra.mxu0 0.0
    %2498 = vmatpush.msra.mxu0 0.0
    %2499 = vmatpush.msra.mxu0 0.0
    %2500 = vmatpush.msra.mxu0 0.0
    %2501 = vmatpush.msra.mxu0 %v2477
    %2502 = vmatmul.f32.gmra.mxu0 %v2481
    %v2503 = vpop.f32.mrf.mxu0
    %v2504 = vadd.f32 0.0, %v2503
    %2505 = vmatmul.f32.gmra.mxu0 %v2484
    %v2506 = vpop.f32.mrf.mxu0
    %v2507 = vadd.f32 0.0, %v2506
    %2508 = vdwg.mxu0
    %s2509 = scalar_lea.vmem %s63, 16
    %v2510 = vld [vmem:[%s2509] sm:$0xff]
    %v2511 = vld [vmem:[%s2509 + $0x8] sm:$0xff]
    %v2513 = vsel %vm1470, %v2510, 0
    %v2516 = vsel %vm1470, %v2511, 0
    %2518 = vmatpush.msra.mxu0 0.0
    %2519 = vmatpush.msra.mxu0 0.0
    %2520 = vmatpush.msra.mxu0 0.0
    %2521 = vmatpush.msra.mxu0 0.0
    %2522 = vmatpush.msra.mxu0 0.0
    %2523 = vmatpush.msra.mxu0 0.0
    %2524 = vmatpush.msra.mxu0 0.0
    %2525 = vmatpush.msra.mxu0 0.0
    %2526 = vmatpush.msra.mxu0 0.0
    %2527 = vmatpush.msra.mxu0 0.0
    %2528 = vmatpush.msra.mxu0 0.0
    %2529 = vmatpush.msra.mxu0 0.0
    %2530 = vmatpush.msra.mxu0 0.0
    %2531 = vmatpush.msra.mxu0 0.0
    %2532 = vmatpush.msra.mxu0 0.0
    %2533 = vmatpush.msra.mxu0 %v2477
    %2534 = vmatmul.f32.gmra.mxu0 %v2513
    %v2535 = vpop.f32.mrf.mxu0
    %v2536 = vadd.f32 0.0, %v2535
    %2537 = vmatmul.f32.gmra.mxu0 %v2516
    %v2538 = vpop.f32.mrf.mxu0
    %v2539 = vadd.f32 0.0, %v2538
    %2540 = vdwg.mxu0
    %s2541 = scalar_lea.vmem %s63, 32
    %v2542 = vld [vmem:[%s2541] sm:$0xff]
    %v2543 = vld [vmem:[%s2541 + $0x8] sm:$0xff]
    %v2545 = vsel %vm1470, %v2542, 0
    %v2548 = vsel %vm1470, %v2543, 0
    %2550 = vmatpush.msra.mxu0 0.0
    %2551 = vmatpush.msra.mxu0 0.0
    %2552 = vmatpush.msra.mxu0 0.0
    %2553 = vmatpush.msra.mxu0 0.0
    %2554 = vmatpush.msra.mxu0 0.0
    %2555 = vmatpush.msra.mxu0 0.0
    %2556 = vmatpush.msra.mxu0 0.0
    %2557 = vmatpush.msra.mxu0 0.0
    %2558 = vmatpush.msra.mxu0 0.0
    %2559 = vmatpush.msra.mxu0 0.0
    %2560 = vmatpush.msra.mxu0 0.0
    %2561 = vmatpush.msra.mxu0 0.0
    %2562 = vmatpush.msra.mxu0 0.0
    %2563 = vmatpush.msra.mxu0 0.0
    %2564 = vmatpush.msra.mxu0 0.0
    %2565 = vmatpush.msra.mxu0 %v2477
    %2566 = vmatmul.f32.gmra.mxu0 %v2545
    %v2567 = vpop.f32.mrf.mxu0
    %v2568 = vadd.f32 0.0, %v2567
    %2569 = vmatmul.f32.gmra.mxu0 %v2548
    %v2570 = vpop.f32.mrf.mxu0
    %v2571 = vadd.f32 0.0, %v2570
    %2572 = vdwg.mxu0
    %v2573 = vld [vmem:[#allocation19] sm:$0xff]
    %v2574 = vld [vmem:[#allocation19 + $0x8] sm:$0xff]
    %v2575 = vld [vmem:[#allocation19 + $0x10] sm:$0xff]
    %v2576 = vld [vmem:[#allocation19 + $0x18] sm:$0xff]
    %v2577 = vld [vmem:[#allocation19 + $0x20] sm:$0xff]
    %v2578 = vld [vmem:[#allocation19 + $0x28] sm:$0xff]
    %v2579 = vld [vmem:[#allocation19 + $0x30] sm:$0xff]
    %v2580 = vld [vmem:[#allocation19 + $0x38] sm:$0xff]
    %v2581 = vld [vmem:[#allocation19 + $0x40] sm:$0xff]
    %v2582 = vld [vmem:[#allocation19 + $0x48] sm:$0xff]
    %v2583 = vld [vmem:[#allocation19 + $0x50] sm:$0xff]
    %v2584 = vld [vmem:[#allocation19 + $0x58] sm:$0xff]
    %v2585 = vld [vmem:[#allocation19 + $0x60] sm:$0xff]
    %v2586 = vld [vmem:[#allocation19 + $0x68] sm:$0xff]
    %v2587 = vld [vmem:[#allocation19 + $0x70] sm:$0xff]
    %v2588 = vld [vmem:[#allocation19 + $0x78] sm:$0xff]
    %v2589 = vld [vmem:[#allocation19 + $0x80] sm:$0xff]
    %v2590 = vld [vmem:[#allocation19 + $0x88] sm:$0xff]
    %v2591 = vld [vmem:[#allocation19 + $0x90] sm:$0xff]
    %v2592 = vld [vmem:[#allocation19 + $0x98] sm:$0xff]
    %v2593 = vld [vmem:[#allocation19 + $0xa0] sm:$0xff]
    %v2594 = vld [vmem:[#allocation19 + $0xa8] sm:$0xff]
    %v2595 = vld [vmem:[#allocation19 + $0xb0] sm:$0xff]
    %v2596 = vld [vmem:[#allocation19 + $0xb8] sm:$0xff]
    %v2597 = vld [vmem:[#allocation19 + $0xc0] sm:$0xff]
    %v2598 = vld [vmem:[#allocation19 + $0xc8] sm:$0xff]
    %v2599 = vld [vmem:[#allocation19 + $0xd0] sm:$0xff]
    %v2600 = vld [vmem:[#allocation19 + $0xd8] sm:$0xff]
    %v2601 = vld [vmem:[#allocation19 + $0xe0] sm:$0xff]
    %v2602 = vld [vmem:[#allocation19 + $0xe8] sm:$0xff]
    %v2603 = vld [vmem:[#allocation19 + $0xf0] sm:$0xff]
    %v2604 = vld [vmem:[#allocation19 + $0xf8] sm:$0xff]
    %v2605 = vld [vmem:[#allocation19 + $0x100] sm:$0xff]
    %v2606 = vld [vmem:[#allocation19 + $0x108] sm:$0xff]
    %v2607 = vld [vmem:[#allocation19 + $0x110] sm:$0xff]
    %v2608 = vld [vmem:[#allocation19 + $0x118] sm:$0xff]
    %v2609 = vld [vmem:[#allocation19 + $0x120] sm:$0xff]
    %v2610 = vld [vmem:[#allocation19 + $0x128] sm:$0xff]
    %v2611 = vld [vmem:[#allocation19 + $0x130] sm:$0xff]
    %v2612 = vld [vmem:[#allocation19 + $0x138] sm:$0xff]
    %v2613 = vld [vmem:[#allocation19 + $0x140] sm:$0xff]
    %v2614 = vld [vmem:[#allocation19 + $0x148] sm:$0xff]
    %v2615 = vld [vmem:[#allocation19 + $0x150] sm:$0xff]
    %v2616 = vld [vmem:[#allocation19 + $0x158] sm:$0xff]
    %v2617 = vld [vmem:[#allocation19 + $0x160] sm:$0xff]
    %v2618 = vld [vmem:[#allocation19 + $0x168] sm:$0xff]
    %v2619 = vld [vmem:[#allocation19 + $0x170] sm:$0xff]
    %v2620 = vld [vmem:[#allocation19 + $0x178] sm:$0xff]
    %2621 = vmatpush.msra.mxu0 %v2588
    %2622 = vmatpush.msra.mxu0 %v2587
    %2623 = vmatpush.msra.mxu0 %v2586
    %2624 = vmatpush.msra.mxu0 %v2585
    %2625 = vmatpush.msra.mxu0 %v2584
    %2626 = vmatpush.msra.mxu0 %v2583
    %2627 = vmatpush.msra.mxu0 %v2582
    %2628 = vmatpush.msra.mxu0 %v2581
    %2629 = vmatpush.msra.mxu0 %v2580
    %2630 = vmatpush.msra.mxu0 %v2579
    %2631 = vmatpush.msra.mxu0 %v2578
    %2632 = vmatpush.msra.mxu0 %v2577
    %2633 = vmatpush.msra.mxu0 %v2576
    %2634 = vmatpush.msra.mxu0 %v2575
    %2635 = vmatpush.msra.mxu0 %v2574
    %2636 = vmatpush.msra.mxu0 %v2573
    %2637 = vmatmul.f32.gmra.mxu0 %v2504
    %v2638 = vpop.f32.mrf.mxu0
    %v2639 = vadd.f32 0.0, %v2638
    %2640 = vmatmul.f32.gmra.mxu0 %v2507
    %v2641 = vpop.f32.mrf.mxu0
    %v2642 = vadd.f32 0.0, %v2641
    %2643 = vdwg.mxu0
    %2644 = vmatpush.msra.mxu0 %v2604
    %2645 = vmatpush.msra.mxu0 %v2603
    %2646 = vmatpush.msra.mxu0 %v2602
    %2647 = vmatpush.msra.mxu0 %v2601
    %2648 = vmatpush.msra.mxu0 %v2600
    %2649 = vmatpush.msra.mxu0 %v2599
    %2650 = vmatpush.msra.mxu0 %v2598
    %2651 = vmatpush.msra.mxu0 %v2597
    %2652 = vmatpush.msra.mxu0 %v2596
    %2653 = vmatpush.msra.mxu0 %v2595
    %2654 = vmatpush.msra.mxu0 %v2594
    %2655 = vmatpush.msra.mxu0 %v2593
    %2656 = vmatpush.msra.mxu0 %v2592
    %2657 = vmatpush.msra.mxu0 %v2591
    %2658 = vmatpush.msra.mxu0 %v2590
    %2659 = vmatpush.msra.mxu0 %v2589
    %2660 = vmatmul.f32.gmra.mxu0 %v2536
    %v2661 = vpop.f32.mrf.mxu0
    %v2662 = vadd.f32 %v2639, %v2661
    %2663 = vmatmul.f32.gmra.mxu0 %v2539
    %v2664 = vpop.f32.mrf.mxu0
    %v2665 = vadd.f32 %v2642, %v2664
    %2666 = vdwg.mxu0
    %2667 = vmatpush.msra.mxu0 %v2620
    %2668 = vmatpush.msra.mxu0 %v2619
    %2669 = vmatpush.msra.mxu0 %v2618
    %2670 = vmatpush.msra.mxu0 %v2617
    %2671 = vmatpush.msra.mxu0 %v2616
    %2672 = vmatpush.msra.mxu0 %v2615
    %2673 = vmatpush.msra.mxu0 %v2614
    %2674 = vmatpush.msra.mxu0 %v2613
    %2675 = vmatpush.msra.mxu0 %v2612
    %2676 = vmatpush.msra.mxu0 %v2611
    %2677 = vmatpush.msra.mxu0 %v2610
    %2678 = vmatpush.msra.mxu0 %v2609
    %2679 = vmatpush.msra.mxu0 %v2608
    %2680 = vmatpush.msra.mxu0 %v2607
    %2681 = vmatpush.msra.mxu0 %v2606
    %2682 = vmatpush.msra.mxu0 %v2605
    %2683 = vmatmul.f32.gmra.mxu0 %v2568
    %v2684 = vpop.f32.mrf.mxu0
    %v2685 = vadd.f32 %v2662, %v2684
    %2686 = vmatmul.f32.gmra.mxu0 %v2571
    %v2687 = vpop.f32.mrf.mxu0
    %v2688 = vadd.f32 %v2665, %v2687
    %2689 = vdwg.mxu0
    %v2690 = vld [vmem:[%s67] sm:$0x3]
    %v2691 = vadd.f32 %v2685, %v2688
    %v2692 = vrot.slane %v2691, 4
    %v2693 = vadd.f32 %v2691, %v2692
    %v2694 = vrot.slane %v2693, 2
    %v2695 = vadd.f32 %v2693, %v2694
    %v2696 = vrot.slane %v2695, 1
    %v2697 = vadd.f32 %v2695, %v2696
    %v2698 = vmul.f32 %v2685, %v2685
    %v2699 = vmul.f32 %v2688, %v2688
    %v2700 = vadd.f32 %v2698, %v2699
    %v2701 = vrot.slane %v2700, 4
    %v2702 = vadd.f32 %v2700, %v2701
    %v2703 = vrot.slane %v2702, 2
    %v2704 = vadd.f32 %v2702, %v2703
    %v2705 = vrot.slane %v2704, 1
    %v2706 = vadd.f32 %v2704, %v2705
    %v2707 = vsel %vm830, %v2697, %v2706
    %v2708 = vld [vmem:[#allocation21] sm:$0xff]
    %v2709 = vld [vmem:[#allocation21 + $0x8] sm:$0xff]
    %v2710 = vld [vmem:[#allocation21 + $0x10] sm:$0xff]
    %v2711 = vld [vmem:[#allocation21 + $0x18] sm:$0xff]
    %v2712 = vld [vmem:[#allocation21 + $0x20] sm:$0xff]
    %v2713 = vld [vmem:[#allocation21 + $0x28] sm:$0xff]
    %v2714 = vld [vmem:[#allocation21 + $0x30] sm:$0xff]
    %v2715 = vld [vmem:[#allocation21 + $0x38] sm:$0xff]
    %v2716 = vld [vmem:[#allocation21 + $0x40] sm:$0xff]
    %v2717 = vld [vmem:[#allocation21 + $0x48] sm:$0xff]
    %v2718 = vld [vmem:[#allocation21 + $0x50] sm:$0xff]
    %v2719 = vld [vmem:[#allocation21 + $0x58] sm:$0xff]
    %v2720 = vld [vmem:[#allocation21 + $0x60] sm:$0xff]
    %v2721 = vld [vmem:[#allocation21 + $0x68] sm:$0xff]
    %v2722 = vld [vmem:[#allocation21 + $0x70] sm:$0xff]
    %v2723 = vld [vmem:[#allocation21 + $0x78] sm:$0xff]
    %2724 = vmatpush.msra.mxu0 %v2723
    %2725 = vmatpush.msra.mxu0 %v2722
    %2726 = vmatpush.msra.mxu0 %v2721
    %2727 = vmatpush.msra.mxu0 %v2720
    %2728 = vmatpush.msra.mxu0 %v2719
    %2729 = vmatpush.msra.mxu0 %v2718
    %2730 = vmatpush.msra.mxu0 %v2717
    %2731 = vmatpush.msra.mxu0 %v2716
    %2732 = vmatpush.msra.mxu0 %v2715
    %2733 = vmatpush.msra.mxu0 %v2714
    %2734 = vmatpush.msra.mxu0 %v2713
    %2735 = vmatpush.msra.mxu0 %v2712
    %2736 = vmatpush.msra.mxu0 %v2711
    %2737 = vmatpush.msra.mxu0 %v2710
    %2738 = vmatpush.msra.mxu0 %v2709
    %2739 = vmatpush.msra.mxu0 %v2708
    %2740 = vmatmul.f32.gmra.mxu0 %v2707
    %v2741 = vpop.f32.mrf.mxu0
    %v2742 = vadd.f32 0.0, %v2741
    %2743 = vdwg.mxu0
    %v2744 = vmul.f32 %v2742, %v2742
    %v2746 = vrot.slane %v2744, 7
    %v2748 = vsub.f32 %v2742, %v2746
    %v2749 = vmax.f32 %v2748, 0.0
    %v2750 = vperm.slane %v2742, 0
    %v2751 = vsub.f32 %v2685, %v2750
    %v2752 = vsub.f32 %v2688, %v2750
    %v2753 = vadd.f32 %v2749, 1e-05
    %v2754 = vrsqrt.pop %v2753
    %v2755 = vmul.f32 %v2754, %v2753
    %v2756 = vmul.f32 %v2755, %v2754
    %v2757 = vmul.f32 0.5, %v2756
    %v2758 = vsub.f32 1.5, %v2757
    %v2759 = vmul.f32 %v2754, %v2758
    %vm2760 = vweird.f32 %v2753
    %vm2761 = vweird.f32 %v2754
    %vm2762 = vmor %vm2760, %vm2761
    %v2763 = vsel %vm2762, %v2754, %v2759
    %v2765 = vrot.slane %v2690, 7
    %v2767 = vmul.f32 %v2763, %v2765
    %v2768 = vperm.slane %v2767, 1
    %v2769 = vmul.f32 %v2751, %v2768
    %v2770 = vmul.f32 %v2752, %v2768
    %v2771 = vperm.slane %v2690, 1
    %v2772 = vadd.f32 %v2769, %v2771
    %v2773 = vadd.f32 %v2770, %v2771
    %v2774 = vmax.f32 %v2772, 0.0
    %v2775 = vmax.f32 %v2773, 0.0
    %v2776 = vld [vmem:[%s71] sm:$0xff]
    %v2777 = vld [vmem:[%s71 + $0x8] sm:$0xff]
    %v2778 = vld [vmem:[%s71 + $0x10] sm:$0xff]
    %v2779 = vld [vmem:[%s71 + $0x18] sm:$0xff]
    %v2781 = vsel %vm1208, %v2776, 0
    %v2784 = vsel %vm1208, %v2777, 0
    %v2787 = vsel %vm1208, %v2778, 0
    %v2790 = vsel %vm1208, %v2779, 0
    %2792 = vmatpush.msra.mxu0 0.0
    %2793 = vmatpush.msra.mxu0 0.0
    %2794 = vmatpush.msra.mxu0 0.0
    %2795 = vmatpush.msra.mxu0 0.0
    %2796 = vmatpush.msra.mxu0 0.0
    %2797 = vmatpush.msra.mxu0 0.0
    %2798 = vmatpush.msra.mxu0 0.0
    %2799 = vmatpush.msra.mxu0 0.0
    %2800 = vmatpush.msra.mxu0 0.0
    %2801 = vmatpush.msra.mxu0 0.0
    %2802 = vmatpush.msra.mxu0 0.0
    %2803 = vmatpush.msra.mxu0 0.0
    %2804 = vmatpush.msra.mxu0 0.0
    %2805 = vmatpush.msra.mxu0 0.0
    %2806 = vmatpush.msra.mxu0 %v2775
    %2807 = vmatpush.msra.mxu0 %v2774
    %2808 = vmatmul.f32.gmra.mxu0 %v2781
    %v2809 = vpop.f32.mrf.mxu0
    %v2810 = vadd.f32 0.0, %v2809
    %2811 = vmatmul.f32.gmra.mxu0 %v2784
    %v2812 = vpop.f32.mrf.mxu0
    %v2813 = vadd.f32 0.0, %v2812
    %2814 = vmatmul.f32.gmra.mxu0 %v2787
    %v2815 = vpop.f32.mrf.mxu0
    %v2816 = vadd.f32 0.0, %v2815
    %2817 = vmatmul.f32.gmra.mxu0 %v2790
    %v2818 = vpop.f32.mrf.mxu0
    %v2819 = vadd.f32 0.0, %v2818
    %2820 = vdwg.mxu0
    %s2821 = scalar_lea.vmem %s71, 32
    %v2822 = vld [vmem:[%s2821] sm:$0xff]
    %v2823 = vld [vmem:[%s2821 + $0x8] sm:$0xff]
    %v2824 = vld [vmem:[%s2821 + $0x10] sm:$0xff]
    %v2825 = vld [vmem:[%s2821 + $0x18] sm:$0xff]
    %v2827 = vsel %vm1208, %v2822, 0
    %v2830 = vsel %vm1208, %v2823, 0
    %v2833 = vsel %vm1208, %v2824, 0
    %v2836 = vsel %vm1208, %v2825, 0
    %2838 = vmatpush.msra.mxu0 0.0
    %2839 = vmatpush.msra.mxu0 0.0
    %2840 = vmatpush.msra.mxu0 0.0
    %2841 = vmatpush.msra.mxu0 0.0
    %2842 = vmatpush.msra.mxu0 0.0
    %2843 = vmatpush.msra.mxu0 0.0
    %2844 = vmatpush.msra.mxu0 0.0
    %2845 = vmatpush.msra.mxu0 0.0
    %2846 = vmatpush.msra.mxu0 0.0
    %2847 = vmatpush.msra.mxu0 0.0
    %2848 = vmatpush.msra.mxu0 0.0
    %2849 = vmatpush.msra.mxu0 0.0
    %2850 = vmatpush.msra.mxu0 0.0
    %2851 = vmatpush.msra.mxu0 0.0
    %2852 = vmatpush.msra.mxu0 %v2775
    %2853 = vmatpush.msra.mxu0 %v2774
    %2854 = vmatmul.f32.gmra.mxu0 %v2827
    %v2855 = vpop.f32.mrf.mxu0
    %v2856 = vadd.f32 0.0, %v2855
    %2857 = vmatmul.f32.gmra.mxu0 %v2830
    %v2858 = vpop.f32.mrf.mxu0
    %v2859 = vadd.f32 0.0, %v2858
    %2860 = vmatmul.f32.gmra.mxu0 %v2833
    %v2861 = vpop.f32.mrf.mxu0
    %v2862 = vadd.f32 0.0, %v2861
    %2863 = vmatmul.f32.gmra.mxu0 %v2836
    %v2864 = vpop.f32.mrf.mxu0
    %v2865 = vadd.f32 0.0, %v2864
    %2866 = vdwg.mxu0
    %s2867 = scalar_lea.vmem %s71, 64
    %v2868 = vld [vmem:[%s2867] sm:$0xff]
    %v2869 = vld [vmem:[%s2867 + $0x8] sm:$0xff]
    %v2870 = vld [vmem:[%s2867 + $0x10] sm:$0xff]
    %v2871 = vld [vmem:[%s2867 + $0x18] sm:$0xff]
    %v2873 = vsel %vm1208, %v2868, 0
    %v2876 = vsel %vm1208, %v2869, 0
    %v2879 = vsel %vm1208, %v2870, 0
    %v2882 = vsel %vm1208, %v2871, 0
    %2884 = vmatpush.msra.mxu0 0.0
    %2885 = vmatpush.msra.mxu0 0.0
    %2886 = vmatpush.msra.mxu0 0.0
    %2887 = vmatpush.msra.mxu0 0.0
    %2888 = vmatpush.msra.mxu0 0.0
    %2889 = vmatpush.msra.mxu0 0.0
    %2890 = vmatpush.msra.mxu0 0.0
    %2891 = vmatpush.msra.mxu0 0.0
    %2892 = vmatpush.msra.mxu0 0.0
    %2893 = vmatpush.msra.mxu0 0.0
    %2894 = vmatpush.msra.mxu0 0.0
    %2895 = vmatpush.msra.mxu0 0.0
    %2896 = vmatpush.msra.mxu0 0.0
    %2897 = vmatpush.msra.mxu0 0.0
    %2898 = vmatpush.msra.mxu0 %v2775
    %2899 = vmatpush.msra.mxu0 %v2774
    %2900 = vmatmul.f32.gmra.mxu0 %v2873
    %v2901 = vpop.f32.mrf.mxu0
    %v2902 = vadd.f32 0.0, %v2901
    %2903 = vmatmul.f32.gmra.mxu0 %v2876
    %v2904 = vpop.f32.mrf.mxu0
    %v2905 = vadd.f32 0.0, %v2904
    %2906 = vmatmul.f32.gmra.mxu0 %v2879
    %v2907 = vpop.f32.mrf.mxu0
    %v2908 = vadd.f32 0.0, %v2907
    %2909 = vmatmul.f32.gmra.mxu0 %v2882
    %v2910 = vpop.f32.mrf.mxu0
    %v2911 = vadd.f32 0.0, %v2910
    %2912 = vdwg.mxu0
    %v2913 = vld [vmem:[#allocation22] sm:$0xff]
    %v2914 = vld [vmem:[#allocation22 + $0x8] sm:$0xff]
    %v2915 = vld [vmem:[#allocation22 + $0x10] sm:$0xff]
    %v2916 = vld [vmem:[#allocation22 + $0x18] sm:$0xff]
    %v2917 = vld [vmem:[#allocation22 + $0x20] sm:$0xff]
    %v2918 = vld [vmem:[#allocation22 + $0x28] sm:$0xff]
    %v2919 = vld [vmem:[#allocation22 + $0x30] sm:$0xff]
    %v2920 = vld [vmem:[#allocation22 + $0x38] sm:$0xff]
    %v2921 = vld [vmem:[#allocation22 + $0x40] sm:$0xff]
    %v2922 = vld [vmem:[#allocation22 + $0x48] sm:$0xff]
    %v2923 = vld [vmem:[#allocation22 + $0x50] sm:$0xff]
    %v2924 = vld [vmem:[#allocation22 + $0x58] sm:$0xff]
    %v2925 = vld [vmem:[#allocation22 + $0x60] sm:$0xff]
    %v2926 = vld [vmem:[#allocation22 + $0x68] sm:$0xff]
    %v2927 = vld [vmem:[#allocation22 + $0x70] sm:$0xff]
    %v2928 = vld [vmem:[#allocation22 + $0x78] sm:$0xff]
    %v2929 = vld [vmem:[#allocation22 + $0x80] sm:$0xff]
    %v2930 = vld [vmem:[#allocation22 + $0x88] sm:$0xff]
    %v2931 = vld [vmem:[#allocation22 + $0x90] sm:$0xff]
    %v2932 = vld [vmem:[#allocation22 + $0x98] sm:$0xff]
    %v2933 = vld [vmem:[#allocation22 + $0xa0] sm:$0xff]
    %v2934 = vld [vmem:[#allocation22 + $0xa8] sm:$0xff]
    %v2935 = vld [vmem:[#allocation22 + $0xb0] sm:$0xff]
    %v2936 = vld [vmem:[#allocation22 + $0xb8] sm:$0xff]
    %v2937 = vld [vmem:[#allocation22 + $0xc0] sm:$0xff]
    %v2938 = vld [vmem:[#allocation22 + $0xc8] sm:$0xff]
    %v2939 = vld [vmem:[#allocation22 + $0xd0] sm:$0xff]
    %v2940 = vld [vmem:[#allocation22 + $0xd8] sm:$0xff]
    %v2941 = vld [vmem:[#allocation22 + $0xe0] sm:$0xff]
    %v2942 = vld [vmem:[#allocation22 + $0xe8] sm:$0xff]
    %v2943 = vld [vmem:[#allocation22 + $0xf0] sm:$0xff]
    %v2944 = vld [vmem:[#allocation22 + $0xf8] sm:$0xff]
    %v2945 = vld [vmem:[#allocation22 + $0x100] sm:$0xff]
    %v2946 = vld [vmem:[#allocation22 + $0x108] sm:$0xff]
    %v2947 = vld [vmem:[#allocation22 + $0x110] sm:$0xff]
    %v2948 = vld [vmem:[#allocation22 + $0x118] sm:$0xff]
    %v2949 = vld [vmem:[#allocation22 + $0x120] sm:$0xff]
    %v2950 = vld [vmem:[#allocation22 + $0x128] sm:$0xff]
    %v2951 = vld [vmem:[#allocation22 + $0x130] sm:$0xff]
    %v2952 = vld [vmem:[#allocation22 + $0x138] sm:$0xff]
    %v2953 = vld [vmem:[#allocation22 + $0x140] sm:$0xff]
    %v2954 = vld [vmem:[#allocation22 + $0x148] sm:$0xff]
    %v2955 = vld [vmem:[#allocation22 + $0x150] sm:$0xff]
    %v2956 = vld [vmem:[#allocation22 + $0x158] sm:$0xff]
    %v2957 = vld [vmem:[#allocation22 + $0x160] sm:$0xff]
    %v2958 = vld [vmem:[#allocation22 + $0x168] sm:$0xff]
    %v2959 = vld [vmem:[#allocation22 + $0x170] sm:$0xff]
    %v2960 = vld [vmem:[#allocation22 + $0x178] sm:$0xff]
    %2961 = vmatpush.msra.mxu0 %v2928
    %2962 = vmatpush.msra.mxu0 %v2927
    %2963 = vmatpush.msra.mxu0 %v2926
    %2964 = vmatpush.msra.mxu0 %v2925
    %2965 = vmatpush.msra.mxu0 %v2924
    %2966 = vmatpush.msra.mxu0 %v2923
    %2967 = vmatpush.msra.mxu0 %v2922
    %2968 = vmatpush.msra.mxu0 %v2921
    %2969 = vmatpush.msra.mxu0 %v2920
    %2970 = vmatpush.msra.mxu0 %v2919
    %2971 = vmatpush.msra.mxu0 %v2918
    %2972 = vmatpush.msra.mxu0 %v2917
    %2973 = vmatpush.msra.mxu0 %v2916
    %2974 = vmatpush.msra.mxu0 %v2915
    %2975 = vmatpush.msra.mxu0 %v2914
    %2976 = vmatpush.msra.mxu0 %v2913
    %2977 = vmatmul.f32.gmra.mxu0 %v2810
    %v2978 = vpop.f32.mrf.mxu0
    %v2979 = vadd.f32 0.0, %v2978
    %2980 = vmatmul.f32.gmra.mxu0 %v2813
    %v2981 = vpop.f32.mrf.mxu0
    %v2982 = vadd.f32 0.0, %v2981
    %2983 = vmatmul.f32.gmra.mxu0 %v2816
    %v2984 = vpop.f32.mrf.mxu0
    %v2985 = vadd.f32 0.0, %v2984
    %2986 = vmatmul.f32.gmra.mxu0 %v2819
    %v2987 = vpop.f32.mrf.mxu0
    %v2988 = vadd.f32 0.0, %v2987
    %2989 = vdwg.mxu0
    %2990 = vmatpush.msra.mxu0 %v2944
    %2991 = vmatpush.msra.mxu0 %v2943
    %2992 = vmatpush.msra.mxu0 %v2942
    %2993 = vmatpush.msra.mxu0 %v2941
    %2994 = vmatpush.msra.mxu0 %v2940
    %2995 = vmatpush.msra.mxu0 %v2939
    %2996 = vmatpush.msra.mxu0 %v2938
    %2997 = vmatpush.msra.mxu0 %v2937
    %2998 = vmatpush.msra.mxu0 %v2936
    %2999 = vmatpush.msra.mxu0 %v2935
    %3000 = vmatpush.msra.mxu0 %v2934
    %3001 = vmatpush.msra.mxu0 %v2933
    %3002 = vmatpush.msra.mxu0 %v2932
    %3003 = vmatpush.msra.mxu0 %v2931
    %3004 = vmatpush.msra.mxu0 %v2930
    %3005 = vmatpush.msra.mxu0 %v2929
    %3006 = vmatmul.f32.gmra.mxu0 %v2856
    %v3007 = vpop.f32.mrf.mxu0
    %v3008 = vadd.f32 %v2979, %v3007
    %3009 = vmatmul.f32.gmra.mxu0 %v2859
    %v3010 = vpop.f32.mrf.mxu0
    %v3011 = vadd.f32 %v2982, %v3010
    %3012 = vmatmul.f32.gmra.mxu0 %v2862
    %v3013 = vpop.f32.mrf.mxu0
    %v3014 = vadd.f32 %v2985, %v3013
    %3015 = vmatmul.f32.gmra.mxu0 %v2865
    %v3016 = vpop.f32.mrf.mxu0
    %v3017 = vadd.f32 %v2988, %v3016
    %3018 = vdwg.mxu0
    %3019 = vmatpush.msra.mxu0 %v2960
    %3020 = vmatpush.msra.mxu0 %v2959
    %3021 = vmatpush.msra.mxu0 %v2958
    %3022 = vmatpush.msra.mxu0 %v2957
    %3023 = vmatpush.msra.mxu0 %v2956
    %3024 = vmatpush.msra.mxu0 %v2955
    %3025 = vmatpush.msra.mxu0 %v2954
    %3026 = vmatpush.msra.mxu0 %v2953
    %3027 = vmatpush.msra.mxu0 %v2952
    %3028 = vmatpush.msra.mxu0 %v2951
    %3029 = vmatpush.msra.mxu0 %v2950
    %3030 = vmatpush.msra.mxu0 %v2949
    %3031 = vmatpush.msra.mxu0 %v2948
    %3032 = vmatpush.msra.mxu0 %v2947
    %3033 = vmatpush.msra.mxu0 %v2946
    %3034 = vmatpush.msra.mxu0 %v2945
    %3035 = vmatmul.f32.gmra.mxu0 %v2902
    %v3036 = vpop.f32.mrf.mxu0
    %v3037 = vadd.f32 %v3008, %v3036
    %3038 = vmatmul.f32.gmra.mxu0 %v2905
    %v3039 = vpop.f32.mrf.mxu0
    %v3040 = vadd.f32 %v3011, %v3039
    %3041 = vmatmul.f32.gmra.mxu0 %v2908
    %v3042 = vpop.f32.mrf.mxu0
    %v3043 = vadd.f32 %v3014, %v3042
    %3044 = vmatmul.f32.gmra.mxu0 %v2911
    %v3045 = vpop.f32.mrf.mxu0
    %v3046 = vadd.f32 %v3017, %v3045
    %3047 = vdwg.mxu0
    %v3048 = vld [vmem:[#allocation24] sm:$0x3]
    %v3049 = vadd.f32 %v3037, %v3040
    %v3050 = vadd.f32 %v3049, %v3043
    %v3051 = vadd.f32 %v3050, %v3046
    %v3052 = vrot.slane %v3051, 4
    %v3053 = vadd.f32 %v3051, %v3052
    %v3054 = vrot.slane %v3053, 2
    %v3055 = vadd.f32 %v3053, %v3054
    %v3056 = vrot.slane %v3055, 1
    %v3057 = vadd.f32 %v3055, %v3056
    %v3058 = vmul.f32 %v3037, %v3037
    %v3059 = vmul.f32 %v3040, %v3040
    %v3060 = vmul.f32 %v3043, %v3043
    %v3061 = vmul.f32 %v3046, %v3046
    %v3062 = vadd.f32 %v3058, %v3059
    %v3063 = vadd.f32 %v3062, %v3060
    %v3064 = vadd.f32 %v3063, %v3061
    %v3065 = vrot.slane %v3064, 4
    %v3066 = vadd.f32 %v3064, %v3065
    %v3067 = vrot.slane %v3066, 2
    %v3068 = vadd.f32 %v3066, %v3067
    %v3069 = vrot.slane %v3068, 1
    %v3070 = vadd.f32 %v3068, %v3069
    %v3071 = vsel %vm830, %v3057, %v3070
    %v3072 = vld [vmem:[#allocation25] sm:$0xff]
    %v3073 = vld [vmem:[#allocation25 + $0x8] sm:$0xff]
    %v3074 = vld [vmem:[#allocation25 + $0x10] sm:$0xff]
    %v3075 = vld [vmem:[#allocation25 + $0x18] sm:$0xff]
    %v3076 = vld [vmem:[#allocation25 + $0x20] sm:$0xff]
    %v3077 = vld [vmem:[#allocation25 + $0x28] sm:$0xff]
    %v3078 = vld [vmem:[#allocation25 + $0x30] sm:$0xff]
    %v3079 = vld [vmem:[#allocation25 + $0x38] sm:$0xff]
    %v3080 = vld [vmem:[#allocation25 + $0x40] sm:$0xff]
    %v3081 = vld [vmem:[#allocation25 + $0x48] sm:$0xff]
    %v3082 = vld [vmem:[#allocation25 + $0x50] sm:$0xff]
    %v3083 = vld [vmem:[#allocation25 + $0x58] sm:$0xff]
    %v3084 = vld [vmem:[#allocation25 + $0x60] sm:$0xff]
    %v3085 = vld [vmem:[#allocation25 + $0x68] sm:$0xff]
    %v3086 = vld [vmem:[#allocation25 + $0x70] sm:$0xff]
    %v3087 = vld [vmem:[#allocation25 + $0x78] sm:$0xff]
    %3088 = vmatpush.msra.mxu0 %v3087
    %3089 = vmatpush.msra.mxu0 %v3086
    %3090 = vmatpush.msra.mxu0 %v3085
    %3091 = vmatpush.msra.mxu0 %v3084
    %3092 = vmatpush.msra.mxu0 %v3083
    %3093 = vmatpush.msra.mxu0 %v3082
    %3094 = vmatpush.msra.mxu0 %v3081
    %3095 = vmatpush.msra.mxu0 %v3080
    %3096 = vmatpush.msra.mxu0 %v3079
    %3097 = vmatpush.msra.mxu0 %v3078
    %3098 = vmatpush.msra.mxu0 %v3077
    %3099 = vmatpush.msra.mxu0 %v3076
    %3100 = vmatpush.msra.mxu0 %v3075
    %3101 = vmatpush.msra.mxu0 %v3074
    %3102 = vmatpush.msra.mxu0 %v3073
    %3103 = vmatpush.msra.mxu0 %v3072
    %3104 = vmatmul.f32.gmra.mxu0 %v3071
    %v3105 = vpop.f32.mrf.mxu0
    %v3106 = vadd.f32 0.0, %v3105
    %3107 = vdwg.mxu0
    %v3108 = vmul.f32 %v3106, %v3106
    %v3110 = vrot.slane %v3108, 7
    %v3112 = vsub.f32 %v3106, %v3110
    %v3113 = vmax.f32 %v3112, 0.0
    %v3114 = vperm.slane %v3106, 0
    %v3115 = vsub.f32 %v3037, %v3114
    %v3116 = vsub.f32 %v3040, %v3114
    %v3117 = vsub.f32 %v3043, %v3114
    %v3118 = vsub.f32 %v3046, %v3114
    %v3119 = vadd.f32 %v3113, 1e-05
    %v3120 = vrsqrt.pop %v3119
    %v3121 = vmul.f32 %v3120, %v3119
    %v3122 = vmul.f32 %v3121, %v3120
    %v3123 = vmul.f32 0.5, %v3122
    %v3124 = vsub.f32 1.5, %v3123
    %v3125 = vmul.f32 %v3120, %v3124
    %vm3126 = vweird.f32 %v3119
    %vm3127 = vweird.f32 %v3120
    %vm3128 = vmor %vm3126, %vm3127
    %v3129 = vsel %vm3128, %v3120, %v3125
    %v3131 = vrot.slane %v3048, 7
    %v3133 = vmul.f32 %v3129, %v3131
    %v3134 = vperm.slane %v3133, 1
    %v3135 = vmul.f32 %v3115, %v3134
    %v3136 = vmul.f32 %v3116, %v3134
    %v3137 = vmul.f32 %v3117, %v3134
    %v3138 = vmul.f32 %v3118, %v3134
    %v3139 = vperm.slane %v3048, 1
    %v3140 = vadd.f32 %v3135, %v3139
    %v3141 = vadd.f32 %v3136, %v3139
    %v3142 = vadd.f32 %v3137, %v3139
    %v3143 = vadd.f32 %v3138, %v3139
    %v3144 = vmax.f32 %v3140, 0.0
    %v3145 = vmax.f32 %v3141, 0.0
    %v3146 = vmax.f32 %v3142, 0.0
    %v3147 = vmax.f32 %v3143, 0.0
    %v3148 = vld [vmem:[%s79] sm:$0xff]
    %v3149 = vld [vmem:[%s79 + $0x8] sm:$0xff]
    %v3150 = vld [vmem:[%s79 + $0x10] sm:$0xff]
    %v3151 = vld [vmem:[%s79 + $0x18] sm:$0xff]
    %v3152 = vld [vmem:[%s79 + $0x20] sm:$0xff]
    %v3153 = vld [vmem:[%s79 + $0x28] sm:$0xff]
    %v3154 = vld [vmem:[%s79 + $0x30] sm:$0xff]
    %v3155 = vld [vmem:[%s79 + $0x38] sm:$0xff]
    %v3157 = vsel %vm910, %v3148, 0
    %v3160 = vsel %vm910, %v3149, 0
    %v3163 = vsel %vm910, %v3150, 0
    %v3166 = vsel %vm910, %v3151, 0
    %v3169 = vsel %vm910, %v3152, 0
    %v3172 = vsel %vm910, %v3153, 0
    %v3175 = vsel %vm910, %v3154, 0
    %v3178 = vsel %vm910, %v3155, 0
    %3180 = vmatpush.msra.mxu0 0.0
    %3181 = vmatpush.msra.mxu0 0.0
    %3182 = vmatpush.msra.mxu0 0.0
    %3183 = vmatpush.msra.mxu0 0.0
    %3184 = vmatpush.msra.mxu0 0.0
    %3185 = vmatpush.msra.mxu0 0.0
    %3186 = vmatpush.msra.mxu0 0.0
    %3187 = vmatpush.msra.mxu0 0.0
    %3188 = vmatpush.msra.mxu0 0.0
    %3189 = vmatpush.msra.mxu0 0.0
    %3190 = vmatpush.msra.mxu0 0.0
    %3191 = vmatpush.msra.mxu0 0.0
    %3192 = vmatpush.msra.mxu0 %v3147
    %3193 = vmatpush.msra.mxu0 %v3146
    %3194 = vmatpush.msra.mxu0 %v3145
    %3195 = vmatpush.msra.mxu0 %v3144
    %3196 = vmatmul.f32.gmra.mxu0 %v3157
    %v3197 = vpop.f32.mrf.mxu0
    %v3198 = vadd.f32 0.0, %v3197
    %3199 = vmatmul.f32.gmra.mxu0 %v3160
    %v3200 = vpop.f32.mrf.mxu0
    %v3201 = vadd.f32 0.0, %v3200
    %3202 = vmatmul.f32.gmra.mxu0 %v3163
    %v3203 = vpop.f32.mrf.mxu0
    %v3204 = vadd.f32 0.0, %v3203
    %3205 = vmatmul.f32.gmra.mxu0 %v3166
    %v3206 = vpop.f32.mrf.mxu0
    %v3207 = vadd.f32 0.0, %v3206
    %3208 = vmatmul.f32.gmra.mxu0 %v3169
    %v3209 = vpop.f32.mrf.mxu0
    %v3210 = vadd.f32 0.0, %v3209
    %3211 = vmatmul.f32.gmra.mxu0 %v3172
    %v3212 = vpop.f32.mrf.mxu0
    %v3213 = vadd.f32 0.0, %v3212
    %3214 = vmatmul.f32.gmra.mxu0 %v3175
    %v3215 = vpop.f32.mrf.mxu0
    %v3216 = vadd.f32 0.0, %v3215
    %3217 = vmatmul.f32.gmra.mxu0 %v3178
    %v3218 = vpop.f32.mrf.mxu0
    %v3219 = vadd.f32 0.0, %v3218
    %3220 = vdwg.mxu0
    %s3221 = scalar_lea.vmem %s79, 64
    %v3222 = vld [vmem:[%s3221] sm:$0xff]
    %v3223 = vld [vmem:[%s3221 + $0x8] sm:$0xff]
    %v3224 = vld [vmem:[%s3221 + $0x10] sm:$0xff]
    %v3225 = vld [vmem:[%s3221 + $0x18] sm:$0xff]
    %v3226 = vld [vmem:[%s3221 + $0x20] sm:$0xff]
    %v3227 = vld [vmem:[%s3221 + $0x28] sm:$0xff]
    %v3228 = vld [vmem:[%s3221 + $0x30] sm:$0xff]
    %v3229 = vld [vmem:[%s3221 + $0x38] sm:$0xff]
    %v3231 = vsel %vm910, %v3222, 0
    %v3234 = vsel %vm910, %v3223, 0
    %v3237 = vsel %vm910, %v3224, 0
    %v3240 = vsel %vm910, %v3225, 0
    %v3243 = vsel %vm910, %v3226, 0
    %v3246 = vsel %vm910, %v3227, 0
    %v3249 = vsel %vm910, %v3228, 0
    %v3252 = vsel %vm910, %v3229, 0
    %3254 = vmatpush.msra.mxu0 0.0
    %3255 = vmatpush.msra.mxu0 0.0
    %3256 = vmatpush.msra.mxu0 0.0
    %3257 = vmatpush.msra.mxu0 0.0
    %3258 = vmatpush.msra.mxu0 0.0
    %3259 = vmatpush.msra.mxu0 0.0
    %3260 = vmatpush.msra.mxu0 0.0
    %3261 = vmatpush.msra.mxu0 0.0
    %3262 = vmatpush.msra.mxu0 0.0
    %3263 = vmatpush.msra.mxu0 0.0
    %3264 = vmatpush.msra.mxu0 0.0
    %3265 = vmatpush.msra.mxu0 0.0
    %3266 = vmatpush.msra.mxu0 %v3147
    %3267 = vmatpush.msra.mxu0 %v3146
    %3268 = vmatpush.msra.mxu0 %v3145
    %3269 = vmatpush.msra.mxu0 %v3144
    %3270 = vmatmul.f32.gmra.mxu0 %v3231
    %v3271 = vpop.f32.mrf.mxu0
    %v3272 = vadd.f32 0.0, %v3271
    %3273 = vmatmul.f32.gmra.mxu0 %v3234
    %v3274 = vpop.f32.mrf.mxu0
    %v3275 = vadd.f32 0.0, %v3274
    %3276 = vmatmul.f32.gmra.mxu0 %v3237
    %v3277 = vpop.f32.mrf.mxu0
    %v3278 = vadd.f32 0.0, %v3277
    %3279 = vmatmul.f32.gmra.mxu0 %v3240
    %v3280 = vpop.f32.mrf.mxu0
    %v3281 = vadd.f32 0.0, %v3280
    %3282 = vmatmul.f32.gmra.mxu0 %v3243
    %v3283 = vpop.f32.mrf.mxu0
    %v3284 = vadd.f32 0.0, %v3283
    %3285 = vmatmul.f32.gmra.mxu0 %v3246
    %v3286 = vpop.f32.mrf.mxu0
    %v3287 = vadd.f32 0.0, %v3286
    %3288 = vmatmul.f32.gmra.mxu0 %v3249
    %v3289 = vpop.f32.mrf.mxu0
    %v3290 = vadd.f32 0.0, %v3289
    %3291 = vmatmul.f32.gmra.mxu0 %v3252
    %v3292 = vpop.f32.mrf.mxu0
    %v3293 = vadd.f32 0.0, %v3292
    %3294 = vdwg.mxu0
    %s3295 = scalar_lea.vmem %s79, 128
    %v3296 = vld [vmem:[%s3295] sm:$0xff]
    %v3297 = vld [vmem:[%s3295 + $0x8] sm:$0xff]
    %v3298 = vld [vmem:[%s3295 + $0x10] sm:$0xff]
    %v3299 = vld [vmem:[%s3295 + $0x18] sm:$0xff]
    %v3300 = vld [vmem:[%s3295 + $0x20] sm:$0xff]
    %v3301 = vld [vmem:[%s3295 + $0x28] sm:$0xff]
    %v3302 = vld [vmem:[%s3295 + $0x30] sm:$0xff]
    %v3303 = vld [vmem:[%s3295 + $0x38] sm:$0xff]
    %v3305 = vsel %vm910, %v3296, 0
    %v3308 = vsel %vm910, %v3297, 0
    %v3311 = vsel %vm910, %v3298, 0
    %v3314 = vsel %vm910, %v3299, 0
    %v3317 = vsel %vm910, %v3300, 0
    %v3320 = vsel %vm910, %v3301, 0
    %v3323 = vsel %vm910, %v3302, 0
    %v3326 = vsel %vm910, %v3303, 0
    %3328 = vmatpush.msra.mxu0 0.0
    %3329 = vmatpush.msra.mxu0 0.0
    %3330 = vmatpush.msra.mxu0 0.0
    %3331 = vmatpush.msra.mxu0 0.0
    %3332 = vmatpush.msra.mxu0 0.0
    %3333 = vmatpush.msra.mxu0 0.0
    %3334 = vmatpush.msra.mxu0 0.0
    %3335 = vmatpush.msra.mxu0 0.0
    %3336 = vmatpush.msra.mxu0 0.0
    %3337 = vmatpush.msra.mxu0 0.0
    %3338 = vmatpush.msra.mxu0 0.0
    %3339 = vmatpush.msra.mxu0 0.0
    %3340 = vmatpush.msra.mxu0 %v3147
    %3341 = vmatpush.msra.mxu0 %v3146
    %3342 = vmatpush.msra.mxu0 %v3145
    %3343 = vmatpush.msra.mxu0 %v3144
    %3344 = vmatmul.f32.gmra.mxu0 %v3305
    %v3345 = vpop.f32.mrf.mxu0
    %v3346 = vadd.f32 0.0, %v3345
    %3347 = vmatmul.f32.gmra.mxu0 %v3308
    %v3348 = vpop.f32.mrf.mxu0
    %v3349 = vadd.f32 0.0, %v3348
    %3350 = vmatmul.f32.gmra.mxu0 %v3311
    %v3351 = vpop.f32.mrf.mxu0
    %v3352 = vadd.f32 0.0, %v3351
    %3353 = vmatmul.f32.gmra.mxu0 %v3314
    %v3354 = vpop.f32.mrf.mxu0
    %v3355 = vadd.f32 0.0, %v3354
    %3356 = vmatmul.f32.gmra.mxu0 %v3317
    %v3357 = vpop.f32.mrf.mxu0
    %v3358 = vadd.f32 0.0, %v3357
    %3359 = vmatmul.f32.gmra.mxu0 %v3320
    %v3360 = vpop.f32.mrf.mxu0
    %v3361 = vadd.f32 0.0, %v3360
    %3362 = vmatmul.f32.gmra.mxu0 %v3323
    %v3363 = vpop.f32.mrf.mxu0
    %v3364 = vadd.f32 0.0, %v3363
    %3365 = vmatmul.f32.gmra.mxu0 %v3326
    %v3366 = vpop.f32.mrf.mxu0
    %v3367 = vadd.f32 0.0, %v3366
    %3368 = vdwg.mxu0
    %v3369 = vld [vmem:[#allocation27] sm:$0xff]
    %v3370 = vld [vmem:[#allocation27 + $0x8] sm:$0xff]
    %v3371 = vld [vmem:[#allocation27 + $0x10] sm:$0xff]
    %v3372 = vld [vmem:[#allocation27 + $0x18] sm:$0xff]
    %v3373 = vld [vmem:[#allocation27 + $0x20] sm:$0xff]
    %v3374 = vld [vmem:[#allocation27 + $0x28] sm:$0xff]
    %v3375 = vld [vmem:[#allocation27 + $0x30] sm:$0xff]
    %v3376 = vld [vmem:[#allocation27 + $0x38] sm:$0xff]
    %v3377 = vld [vmem:[#allocation27 + $0x40] sm:$0xff]
    %v3378 = vld [vmem:[#allocation27 + $0x48] sm:$0xff]
    %v3379 = vld [vmem:[#allocation27 + $0x50] sm:$0xff]
    %v3380 = vld [vmem:[#allocation27 + $0x58] sm:$0xff]
    %v3381 = vld [vmem:[#allocation27 + $0x60] sm:$0xff]
    %v3382 = vld [vmem:[#allocation27 + $0x68] sm:$0xff]
    %v3383 = vld [vmem:[#allocation27 + $0x70] sm:$0xff]
    %v3384 = vld [vmem:[#allocation27 + $0x78] sm:$0xff]
    %v3385 = vld [vmem:[#allocation27 + $0x80] sm:$0xff]
    %v3386 = vld [vmem:[#allocation27 + $0x88] sm:$0xff]
    %v3387 = vld [vmem:[#allocation27 + $0x90] sm:$0xff]
    %v3388 = vld [vmem:[#allocation27 + $0x98] sm:$0xff]
    %v3389 = vld [vmem:[#allocation27 + $0xa0] sm:$0xff]
    %v3390 = vld [vmem:[#allocation27 + $0xa8] sm:$0xff]
    %v3391 = vld [vmem:[#allocation27 + $0xb0] sm:$0xff]
    %v3392 = vld [vmem:[#allocation27 + $0xb8] sm:$0xff]
    %v3393 = vld [vmem:[#allocation27 + $0xc0] sm:$0xff]
    %v3394 = vld [vmem:[#allocation27 + $0xc8] sm:$0xff]
    %v3395 = vld [vmem:[#allocation27 + $0xd0] sm:$0xff]
    %v3396 = vld [vmem:[#allocation27 + $0xd8] sm:$0xff]
    %v3397 = vld [vmem:[#allocation27 + $0xe0] sm:$0xff]
    %v3398 = vld [vmem:[#allocation27 + $0xe8] sm:$0xff]
    %v3399 = vld [vmem:[#allocation27 + $0xf0] sm:$0xff]
    %v3400 = vld [vmem:[#allocation27 + $0xf8] sm:$0xff]
    %v3401 = vld [vmem:[#allocation27 + $0x100] sm:$0xff]
    %v3402 = vld [vmem:[#allocation27 + $0x108] sm:$0xff]
    %v3403 = vld [vmem:[#allocation27 + $0x110] sm:$0xff]
    %v3404 = vld [vmem:[#allocation27 + $0x118] sm:$0xff]
    %v3405 = vld [vmem:[#allocation27 + $0x120] sm:$0xff]
    %v3406 = vld [vmem:[#allocation27 + $0x128] sm:$0xff]
    %v3407 = vld [vmem:[#allocation27 + $0x130] sm:$0xff]
    %v3408 = vld [vmem:[#allocation27 + $0x138] sm:$0xff]
    %v3409 = vld [vmem:[#allocation27 + $0x140] sm:$0xff]
    %v3410 = vld [vmem:[#allocation27 + $0x148] sm:$0xff]
    %v3411 = vld [vmem:[#allocation27 + $0x150] sm:$0xff]
    %v3412 = vld [vmem:[#allocation27 + $0x158] sm:$0xff]
    %v3413 = vld [vmem:[#allocation27 + $0x160] sm:$0xff]
    %v3414 = vld [vmem:[#allocation27 + $0x168] sm:$0xff]
    %v3415 = vld [vmem:[#allocation27 + $0x170] sm:$0xff]
    %v3416 = vld [vmem:[#allocation27 + $0x178] sm:$0xff]
    %3417 = vmatpush.msra.mxu0 %v3384
    %3418 = vmatpush.msra.mxu0 %v3383
    %3419 = vmatpush.msra.mxu0 %v3382
    %3420 = vmatpush.msra.mxu0 %v3381
    %3421 = vmatpush.msra.mxu0 %v3380
    %3422 = vmatpush.msra.mxu0 %v3379
    %3423 = vmatpush.msra.mxu0 %v3378
    %3424 = vmatpush.msra.mxu0 %v3377
    %3425 = vmatpush.msra.mxu0 %v3376
    %3426 = vmatpush.msra.mxu0 %v3375
    %3427 = vmatpush.msra.mxu0 %v3374
    %3428 = vmatpush.msra.mxu0 %v3373
    %3429 = vmatpush.msra.mxu0 %v3372
    %3430 = vmatpush.msra.mxu0 %v3371
    %3431 = vmatpush.msra.mxu0 %v3370
    %3432 = vmatpush.msra.mxu0 %v3369
    %3433 = vmatmul.f32.gmra.mxu0 %v3198
    %v3434 = vpop.f32.mrf.mxu0
    %v3435 = vadd.f32 0.0, %v3434
    %3436 = vmatmul.f32.gmra.mxu0 %v3201
    %v3437 = vpop.f32.mrf.mxu0
    %v3438 = vadd.f32 0.0, %v3437
    %3439 = vmatmul.f32.gmra.mxu0 %v3204
    %v3440 = vpop.f32.mrf.mxu0
    %v3441 = vadd.f32 0.0, %v3440
    %3442 = vmatmul.f32.gmra.mxu0 %v3207
    %v3443 = vpop.f32.mrf.mxu0
    %v3444 = vadd.f32 0.0, %v3443
    %3445 = vmatmul.f32.gmra.mxu0 %v3210
    %v3446 = vpop.f32.mrf.mxu0
    %v3447 = vadd.f32 0.0, %v3446
    %3448 = vmatmul.f32.gmra.mxu0 %v3213
    %v3449 = vpop.f32.mrf.mxu0
    %v3450 = vadd.f32 0.0, %v3449
    %3451 = vmatmul.f32.gmra.mxu0 %v3216
    %v3452 = vpop.f32.mrf.mxu0
    %v3453 = vadd.f32 0.0, %v3452
    %3454 = vmatmul.f32.gmra.mxu0 %v3219
    %v3455 = vpop.f32.mrf.mxu0
    %v3456 = vadd.f32 0.0, %v3455
    %3457 = vdwg.mxu0
    %3458 = vmatpush.msra.mxu0 %v3400
    %3459 = vmatpush.msra.mxu0 %v3399
    %3460 = vmatpush.msra.mxu0 %v3398
    %3461 = vmatpush.msra.mxu0 %v3397
    %3462 = vmatpush.msra.mxu0 %v3396
    %3463 = vmatpush.msra.mxu0 %v3395
    %3464 = vmatpush.msra.mxu0 %v3394
    %3465 = vmatpush.msra.mxu0 %v3393
    %3466 = vmatpush.msra.mxu0 %v3392
    %3467 = vmatpush.msra.mxu0 %v3391
    %3468 = vmatpush.msra.mxu0 %v3390
    %3469 = vmatpush.msra.mxu0 %v3389
    %3470 = vmatpush.msra.mxu0 %v3388
    %3471 = vmatpush.msra.mxu0 %v3387
    %3472 = vmatpush.msra.mxu0 %v3386
    %3473 = vmatpush.msra.mxu0 %v3385
    %3474 = vmatmul.f32.gmra.mxu0 %v3272
    %v3475 = vpop.f32.mrf.mxu0
    %v3476 = vadd.f32 %v3435, %v3475
    %3477 = vmatmul.f32.gmra.mxu0 %v3275
    %v3478 = vpop.f32.mrf.mxu0
    %v3479 = vadd.f32 %v3438, %v3478
    %3480 = vmatmul.f32.gmra.mxu0 %v3278
    %v3481 = vpop.f32.mrf.mxu0
    %v3482 = vadd.f32 %v3441, %v3481
    %3483 = vmatmul.f32.gmra.mxu0 %v3281
    %v3484 = vpop.f32.mrf.mxu0
    %v3485 = vadd.f32 %v3444, %v3484
    %3486 = vmatmul.f32.gmra.mxu0 %v3284
    %v3487 = vpop.f32.mrf.mxu0
    %v3488 = vadd.f32 %v3447, %v3487
    %3489 = vmatmul.f32.gmra.mxu0 %v3287
    %v3490 = vpop.f32.mrf.mxu0
    %v3491 = vadd.f32 %v3450, %v3490
    %3492 = vmatmul.f32.gmra.mxu0 %v3290
    %v3493 = vpop.f32.mrf.mxu0
    %v3494 = vadd.f32 %v3453, %v3493
    %3495 = vmatmul.f32.gmra.mxu0 %v3293
    %v3496 = vpop.f32.mrf.mxu0
    %v3497 = vadd.f32 %v3456, %v3496
    %3498 = vdwg.mxu0
    %3499 = vmatpush.msra.mxu0 %v3416
    %3500 = vmatpush.msra.mxu0 %v3415
    %3501 = vmatpush.msra.mxu0 %v3414
    %3502 = vmatpush.msra.mxu0 %v3413
    %3503 = vmatpush.msra.mxu0 %v3412
    %3504 = vmatpush.msra.mxu0 %v3411
    %3505 = vmatpush.msra.mxu0 %v3410
    %3506 = vmatpush.msra.mxu0 %v3409
    %3507 = vmatpush.msra.mxu0 %v3408
    %3508 = vmatpush.msra.mxu0 %v3407
    %3509 = vmatpush.msra.mxu0 %v3406
    %3510 = vmatpush.msra.mxu0 %v3405
    %3511 = vmatpush.msra.mxu0 %v3404
    %3512 = vmatpush.msra.mxu0 %v3403
    %3513 = vmatpush.msra.mxu0 %v3402
    %3514 = vmatpush.msra.mxu0 %v3401
    %3515 = vmatmul.f32.gmra.mxu0 %v3346
    %v3516 = vpop.f32.mrf.mxu0
    %v3517 = vadd.f32 %v3476, %v3516
    %3518 = vmatmul.f32.gmra.mxu0 %v3349
    %v3519 = vpop.f32.mrf.mxu0
    %v3520 = vadd.f32 %v3479, %v3519
    %3521 = vmatmul.f32.gmra.mxu0 %v3352
    %v3522 = vpop.f32.mrf.mxu0
    %v3523 = vadd.f32 %v3482, %v3522
    %3524 = vmatmul.f32.gmra.mxu0 %v3355
    %v3525 = vpop.f32.mrf.mxu0
    %v3526 = vadd.f32 %v3485, %v3525
    %3527 = vmatmul.f32.gmra.mxu0 %v3358
    %v3528 = vpop.f32.mrf.mxu0
    %v3529 = vadd.f32 %v3488, %v3528
    %3530 = vmatmul.f32.gmra.mxu0 %v3361
    %v3531 = vpop.f32.mrf.mxu0
    %v3532 = vadd.f32 %v3491, %v3531
    %3533 = vmatmul.f32.gmra.mxu0 %v3364
    %v3534 = vpop.f32.mrf.mxu0
    %v3535 = vadd.f32 %v3494, %v3534
    %3536 = vmatmul.f32.gmra.mxu0 %v3367
    %v3537 = vpop.f32.mrf.mxu0
    %v3538 = vadd.f32 %v3497, %v3537
    %3539 = vdwg.mxu0
    %v3540 = vld [vmem:[#allocation28] sm:$0x3]
    %v3541 = vadd.f32 %v3517, %v3520
    %v3542 = vadd.f32 %v3541, %v3523
    %v3543 = vadd.f32 %v3542, %v3526
    %v3544 = vadd.f32 %v3543, %v3529
    %v3545 = vadd.f32 %v3544, %v3532
    %v3546 = vadd.f32 %v3545, %v3535
    %v3547 = vadd.f32 %v3546, %v3538
    %v3548 = vrot.slane %v3547, 4
    %v3549 = vadd.f32 %v3547, %v3548
    %v3550 = vrot.slane %v3549, 2
    %v3551 = vadd.f32 %v3549, %v3550
    %v3552 = vrot.slane %v3551, 1
    %v3553 = vadd.f32 %v3551, %v3552
    %v3554 = vmul.f32 %v3517, %v3517
    %v3555 = vmul.f32 %v3520, %v3520
    %v3556 = vmul.f32 %v3523, %v3523
    %v3557 = vmul.f32 %v3526, %v3526
    %v3558 = vmul.f32 %v3529, %v3529
    %v3559 = vmul.f32 %v3532, %v3532
    %v3560 = vmul.f32 %v3535, %v3535
    %v3561 = vmul.f32 %v3538, %v3538
    %v3562 = vadd.f32 %v3554, %v3555
    %v3563 = vadd.f32 %v3562, %v3556
    %v3564 = vadd.f32 %v3563, %v3557
    %v3565 = vadd.f32 %v3564, %v3558
    %v3566 = vadd.f32 %v3565, %v3559
    %v3567 = vadd.f32 %v3566, %v3560
    %v3568 = vadd.f32 %v3567, %v3561
    %v3569 = vrot.slane %v3568, 4
    %v3570 = vadd.f32 %v3568, %v3569
    %v3571 = vrot.slane %v3570, 2
    %v3572 = vadd.f32 %v3570, %v3571
    %v3573 = vrot.slane %v3572, 1
    %v3574 = vadd.f32 %v3572, %v3573
    %v3575 = vsel %vm830, %v3553, %v3574
    %v3576 = vld [vmem:[#allocation30] sm:$0xff]
    %v3577 = vld [vmem:[#allocation30 + $0x8] sm:$0xff]
    %v3578 = vld [vmem:[#allocation30 + $0x10] sm:$0xff]
    %v3579 = vld [vmem:[#allocation30 + $0x18] sm:$0xff]
    %v3580 = vld [vmem:[#allocation30 + $0x20] sm:$0xff]
    %v3581 = vld [vmem:[#allocation30 + $0x28] sm:$0xff]
    %v3582 = vld [vmem:[#allocation30 + $0x30] sm:$0xff]
    %v3583 = vld [vmem:[#allocation30 + $0x38] sm:$0xff]
    %v3584 = vld [vmem:[#allocation30 + $0x40] sm:$0xff]
    %v3585 = vld [vmem:[#allocation30 + $0x48] sm:$0xff]
    %v3586 = vld [vmem:[#allocation30 + $0x50] sm:$0xff]
    %v3587 = vld [vmem:[#allocation30 + $0x58] sm:$0xff]
    %v3588 = vld [vmem:[#allocation30 + $0x60] sm:$0xff]
    %v3589 = vld [vmem:[#allocation30 + $0x68] sm:$0xff]
    %v3590 = vld [vmem:[#allocation30 + $0x70] sm:$0xff]
    %v3591 = vld [vmem:[#allocation30 + $0x78] sm:$0xff]
    %3592 = vmatpush.msra.mxu0 %v3591
    %3593 = vmatpush.msra.mxu0 %v3590
    %3594 = vmatpush.msra.mxu0 %v3589
    %3595 = vmatpush.msra.mxu0 %v3588
    %3596 = vmatpush.msra.mxu0 %v3587
    %3597 = vmatpush.msra.mxu0 %v3586
    %3598 = vmatpush.msra.mxu0 %v3585
    %3599 = vmatpush.msra.mxu0 %v3584
    %3600 = vmatpush.msra.mxu0 %v3583
    %3601 = vmatpush.msra.mxu0 %v3582
    %3602 = vmatpush.msra.mxu0 %v3581
    %3603 = vmatpush.msra.mxu0 %v3580
    %3604 = vmatpush.msra.mxu0 %v3579
    %3605 = vmatpush.msra.mxu0 %v3578
    %3606 = vmatpush.msra.mxu0 %v3577
    %3607 = vmatpush.msra.mxu0 %v3576
    %3608 = vmatmul.f32.gmra.mxu0 %v3575
    %v3609 = vpop.f32.mrf.mxu0
    %v3610 = vadd.f32 0.0, %v3609
    %3611 = vdwg.mxu0
    %v3612 = vmul.f32 %v3610, %v3610
    %v3614 = vrot.slane %v3612, 7
    %v3616 = vsub.f32 %v3610, %v3614
    %v3617 = vmax.f32 %v3616, 0.0
    %v3618 = vperm.slane %v3610, 0
    %v3619 = vsub.f32 %v3517, %v3618
    %v3620 = vsub.f32 %v3520, %v3618
    %v3621 = vsub.f32 %v3523, %v3618
    %v3622 = vsub.f32 %v3526, %v3618
    %v3623 = vsub.f32 %v3529, %v3618
    %v3624 = vsub.f32 %v3532, %v3618
    %v3625 = vsub.f32 %v3535, %v3618
    %v3626 = vsub.f32 %v3538, %v3618
    %v3627 = vadd.f32 %v3617, 1e-05
    %v3628 = vrsqrt.pop %v3627
    %v3629 = vmul.f32 %v3628, %v3627
    %v3630 = vmul.f32 %v3629, %v3628
    %v3631 = vmul.f32 0.5, %v3630
    %v3632 = vsub.f32 1.5, %v3631
    %v3633 = vmul.f32 %v3628, %v3632
    %vm3634 = vweird.f32 %v3627
    %vm3635 = vweird.f32 %v3628
    %vm3636 = vmor %vm3634, %vm3635
    %v3637 = vsel %vm3636, %v3628, %v3633
    %v3639 = vrot.slane %v3540, 7
    %v3641 = vmul.f32 %v3637, %v3639
    %v3642 = vperm.slane %v3641, 1
    %v3643 = vmul.f32 %v3619, %v3642
    %v3644 = vmul.f32 %v3620, %v3642
    %v3645 = vmul.f32 %v3621, %v3642
    %v3646 = vmul.f32 %v3622, %v3642
    %v3647 = vmul.f32 %v3623, %v3642
    %v3648 = vmul.f32 %v3624, %v3642
    %v3649 = vmul.f32 %v3625, %v3642
    %v3650 = vmul.f32 %v3626, %v3642
    %v3651 = vperm.slane %v3540, 1
    %v3652 = vadd.f32 %v3643, %v3651
    %v3653 = vadd.f32 %v3644, %v3651
    %v3654 = vadd.f32 %v3645, %v3651
    %v3655 = vadd.f32 %v3646, %v3651
    %v3656 = vadd.f32 %v3647, %v3651
    %v3657 = vadd.f32 %v3648, %v3651
    %v3658 = vadd.f32 %v3649, %v3651
    %v3659 = vadd.f32 %v3650, %v3651
    %v3660 = vmax.f32 %v3652, 0.0
    %v3661 = vmax.f32 %v3653, 0.0
    %v3662 = vmax.f32 %v3654, 0.0
    %v3663 = vmax.f32 %v3655, 0.0
    %v3664 = vmax.f32 %v3656, 0.0
    %v3665 = vmax.f32 %v3657, 0.0
    %v3666 = vmax.f32 %v3658, 0.0
    %v3667 = vmax.f32 %v3659, 0.0
    %v3668 = vld [vmem:[#allocation31] sm:$0xff]
    %v3669 = vld [vmem:[#allocation31 + $0x8] sm:$0xff]
    %v3670 = vld [vmem:[#allocation31 + $0x10] sm:$0xff]
    %v3671 = vld [vmem:[#allocation31 + $0x18] sm:$0xff]
    %v3672 = vld [vmem:[#allocation31 + $0x20] sm:$0xff]
    %v3673 = vld [vmem:[#allocation31 + $0x28] sm:$0xff]
    %v3674 = vld [vmem:[#allocation31 + $0x30] sm:$0xff]
    %v3675 = vld [vmem:[#allocation31 + $0x38] sm:$0xff]
    %v3677 = vsel %vm538, %v3668, 0
    %v3680 = vsel %vm538, %v3669, 0
    %v3683 = vsel %vm538, %v3670, 0
    %v3686 = vsel %vm538, %v3671, 0
    %v3689 = vsel %vm538, %v3672, 0
    %v3692 = vsel %vm538, %v3673, 0
    %v3695 = vsel %vm538, %v3674, 0
    %v3698 = vsel %vm538, %v3675, 0
    %3700 = vmatpush.msra.mxu0 0.0
    %3701 = vmatpush.msra.mxu0 0.0
    %3702 = vmatpush.msra.mxu0 0.0
    %3703 = vmatpush.msra.mxu0 0.0
    %3704 = vmatpush.msra.mxu0 0.0
    %3705 = vmatpush.msra.mxu0 0.0
    %3706 = vmatpush.msra.mxu0 0.0
    %3707 = vmatpush.msra.mxu0 0.0
    %3708 = vmatpush.msra.mxu0 %v3667
    %3709 = vmatpush.msra.mxu0 %v3666
    %3710 = vmatpush.msra.mxu0 %v3665
    %3711 = vmatpush.msra.mxu0 %v3664
    %3712 = vmatpush.msra.mxu0 %v3663
    %3713 = vmatpush.msra.mxu0 %v3662
    %3714 = vmatpush.msra.mxu0 %v3661
    %3715 = vmatpush.msra.mxu0 %v3660
    %3716 = vmatmul.f32.gmra.mxu0 %v3677
    %v3717 = vpop.f32.mrf.mxu0
    %v3718 = vadd.f32 0.0, %v3717
    %3719 = vmatmul.f32.gmra.mxu0 %v3680
    %v3720 = vpop.f32.mrf.mxu0
    %v3721 = vadd.f32 0.0, %v3720
    %3722 = vmatmul.f32.gmra.mxu0 %v3683
    %v3723 = vpop.f32.mrf.mxu0
    %v3724 = vadd.f32 0.0, %v3723
    %3725 = vmatmul.f32.gmra.mxu0 %v3686
    %v3726 = vpop.f32.mrf.mxu0
    %v3727 = vadd.f32 0.0, %v3726
    %3728 = vmatmul.f32.gmra.mxu0 %v3689
    %v3729 = vpop.f32.mrf.mxu0
    %v3730 = vadd.f32 0.0, %v3729
    %3731 = vmatmul.f32.gmra.mxu0 %v3692
    %v3732 = vpop.f32.mrf.mxu0
    %v3733 = vadd.f32 0.0, %v3732
    %3734 = vmatmul.f32.gmra.mxu0 %v3695
    %v3735 = vpop.f32.mrf.mxu0
    %v3736 = vadd.f32 0.0, %v3735
    %3737 = vmatmul.f32.gmra.mxu0 %v3698
    %v3738 = vpop.f32.mrf.mxu0
    %v3739 = vadd.f32 0.0, %v3738
    %3740 = vdwg.mxu0
    %s3741 = scalar_lea.vmem [#allocation31], 64
    %v3742 = vld [vmem:[%s3741] sm:$0xff]
    %v3743 = vld [vmem:[%s3741 + $0x8] sm:$0xff]
    %v3744 = vld [vmem:[%s3741 + $0x10] sm:$0xff]
    %v3745 = vld [vmem:[%s3741 + $0x18] sm:$0xff]
    %v3746 = vld [vmem:[%s3741 + $0x20] sm:$0xff]
    %v3747 = vld [vmem:[%s3741 + $0x28] sm:$0xff]
    %v3748 = vld [vmem:[%s3741 + $0x30] sm:$0xff]
    %v3749 = vld [vmem:[%s3741 + $0x38] sm:$0xff]
    %v3751 = vsel %vm538, %v3742, 0
    %v3754 = vsel %vm538, %v3743, 0
    %v3757 = vsel %vm538, %v3744, 0
    %v3760 = vsel %vm538, %v3745, 0
    %v3763 = vsel %vm538, %v3746, 0
    %v3766 = vsel %vm538, %v3747, 0
    %v3769 = vsel %vm538, %v3748, 0
    %v3772 = vsel %vm538, %v3749, 0
    %3774 = vmatpush.msra.mxu0 0.0
    %3775 = vmatpush.msra.mxu0 0.0
    %3776 = vmatpush.msra.mxu0 0.0
    %3777 = vmatpush.msra.mxu0 0.0
    %3778 = vmatpush.msra.mxu0 0.0
    %3779 = vmatpush.msra.mxu0 0.0
    %3780 = vmatpush.msra.mxu0 0.0
    %3781 = vmatpush.msra.mxu0 0.0
    %3782 = vmatpush.msra.mxu0 %v3667
    %3783 = vmatpush.msra.mxu0 %v3666
    %3784 = vmatpush.msra.mxu0 %v3665
    %3785 = vmatpush.msra.mxu0 %v3664
    %3786 = vmatpush.msra.mxu0 %v3663
    %3787 = vmatpush.msra.mxu0 %v3662
    %3788 = vmatpush.msra.mxu0 %v3661
    %3789 = vmatpush.msra.mxu0 %v3660
    %3790 = vmatmul.f32.gmra.mxu0 %v3751
    %v3791 = vpop.f32.mrf.mxu0
    %v3792 = vadd.f32 0.0, %v3791
    %3793 = vmatmul.f32.gmra.mxu0 %v3754
    %v3794 = vpop.f32.mrf.mxu0
    %v3795 = vadd.f32 0.0, %v3794
    %3796 = vmatmul.f32.gmra.mxu0 %v3757
    %v3797 = vpop.f32.mrf.mxu0
    %v3798 = vadd.f32 0.0, %v3797
    %3799 = vmatmul.f32.gmra.mxu0 %v3760
    %v3800 = vpop.f32.mrf.mxu0
    %v3801 = vadd.f32 0.0, %v3800
    %3802 = vmatmul.f32.gmra.mxu0 %v3763
    %v3803 = vpop.f32.mrf.mxu0
    %v3804 = vadd.f32 0.0, %v3803
    %3805 = vmatmul.f32.gmra.mxu0 %v3766
    %v3806 = vpop.f32.mrf.mxu0
    %v3807 = vadd.f32 0.0, %v3806
    %3808 = vmatmul.f32.gmra.mxu0 %v3769
    %v3809 = vpop.f32.mrf.mxu0
    %v3810 = vadd.f32 0.0, %v3809
    %3811 = vmatmul.f32.gmra.mxu0 %v3772
    %v3812 = vpop.f32.mrf.mxu0
    %v3813 = vadd.f32 0.0, %v3812
    %3814 = vdwg.mxu0
    %v3815 = vld [vmem:[#allocation33] sm:$0xff]
    %v3816 = vld [vmem:[#allocation33 + $0x8] sm:$0xff]
    %v3817 = vld [vmem:[#allocation33 + $0x10] sm:$0xff]
    %v3818 = vld [vmem:[#allocation33 + $0x18] sm:$0xff]
    %v3819 = vld [vmem:[#allocation33 + $0x20] sm:$0xff]
    %v3820 = vld [vmem:[#allocation33 + $0x28] sm:$0xff]
    %v3821 = vld [vmem:[#allocation33 + $0x30] sm:$0xff]
    %v3822 = vld [vmem:[#allocation33 + $0x38] sm:$0xff]
    %v3823 = vld [vmem:[#allocation33 + $0x40] sm:$0xff]
    %v3824 = vld [vmem:[#allocation33 + $0x48] sm:$0xff]
    %v3825 = vld [vmem:[#allocation33 + $0x50] sm:$0xff]
    %v3826 = vld [vmem:[#allocation33 + $0x58] sm:$0xff]
    %v3827 = vld [vmem:[#allocation33 + $0x60] sm:$0xff]
    %v3828 = vld [vmem:[#allocation33 + $0x68] sm:$0xff]
    %v3829 = vld [vmem:[#allocation33 + $0x70] sm:$0xff]
    %v3830 = vld [vmem:[#allocation33 + $0x78] sm:$0xff]
    %v3831 = vld [vmem:[#allocation33 + $0x80] sm:$0xff]
    %v3832 = vld [vmem:[#allocation33 + $0x88] sm:$0xff]
    %v3833 = vld [vmem:[#allocation33 + $0x90] sm:$0xff]
    %v3834 = vld [vmem:[#allocation33 + $0x98] sm:$0xff]
    %v3835 = vld [vmem:[#allocation33 + $0xa0] sm:$0xff]
    %v3836 = vld [vmem:[#allocation33 + $0xa8] sm:$0xff]
    %v3837 = vld [vmem:[#allocation33 + $0xb0] sm:$0xff]
    %v3838 = vld [vmem:[#allocation33 + $0xb8] sm:$0xff]
    %v3839 = vld [vmem:[#allocation33 + $0xc0] sm:$0xff]
    %v3840 = vld [vmem:[#allocation33 + $0xc8] sm:$0xff]
    %v3841 = vld [vmem:[#allocation33 + $0xd0] sm:$0xff]
    %v3842 = vld [vmem:[#allocation33 + $0xd8] sm:$0xff]
    %v3843 = vld [vmem:[#allocation33 + $0xe0] sm:$0xff]
    %v3844 = vld [vmem:[#allocation33 + $0xe8] sm:$0xff]
    %v3845 = vld [vmem:[#allocation33 + $0xf0] sm:$0xff]
    %v3846 = vld [vmem:[#allocation33 + $0xf8] sm:$0xff]
    %v3847 = vld [vmem:[#allocation33 + $0x100] sm:$0xff]
    %v3848 = vld [vmem:[#allocation33 + $0x108] sm:$0xff]
    %v3849 = vld [vmem:[#allocation33 + $0x110] sm:$0xff]
    %v3850 = vld [vmem:[#allocation33 + $0x118] sm:$0xff]
    %v3851 = vld [vmem:[#allocation33 + $0x120] sm:$0xff]
    %v3852 = vld [vmem:[#allocation33 + $0x128] sm:$0xff]
    %v3853 = vld [vmem:[#allocation33 + $0x130] sm:$0xff]
    %v3854 = vld [vmem:[#allocation33 + $0x138] sm:$0xff]
    %v3855 = vld [vmem:[#allocation33 + $0x140] sm:$0xff]
    %v3856 = vld [vmem:[#allocation33 + $0x148] sm:$0xff]
    %v3857 = vld [vmem:[#allocation33 + $0x150] sm:$0xff]
    %v3858 = vld [vmem:[#allocation33 + $0x158] sm:$0xff]
    %v3859 = vld [vmem:[#allocation33 + $0x160] sm:$0xff]
    %v3860 = vld [vmem:[#allocation33 + $0x168] sm:$0xff]
    %v3861 = vld [vmem:[#allocation33 + $0x170] sm:$0xff]
    %v3862 = vld [vmem:[#allocation33 + $0x178] sm:$0xff]
    %v3863 = vld [vmem:[#allocation34] sm:$0x1]
    %v3865 = vperm.slane %v3863, 0
    %3867 = vmatpush.msra.mxu0 %v3830
    %3868 = vmatpush.msra.mxu0 %v3829
    %3869 = vmatpush.msra.mxu0 %v3828
    %3870 = vmatpush.msra.mxu0 %v3827
    %3871 = vmatpush.msra.mxu0 %v3826
    %3872 = vmatpush.msra.mxu0 %v3825
    %3873 = vmatpush.msra.mxu0 %v3824
    %3874 = vmatpush.msra.mxu0 %v3823
    %3875 = vmatpush.msra.mxu0 %v3822
    %3876 = vmatpush.msra.mxu0 %v3821
    %3877 = vmatpush.msra.mxu0 %v3820
    %3878 = vmatpush.msra.mxu0 %v3819
    %3879 = vmatpush.msra.mxu0 %v3818
    %3880 = vmatpush.msra.mxu0 %v3817
    %3881 = vmatpush.msra.mxu0 %v3816
    %3882 = vmatpush.msra.mxu0 %v3815
    %3883 = vmatmul.f32.gmra.mxu0 %v3718
    %v3884 = vpop.f32.mrf.mxu0
    %v3885 = vadd.f32 %v3865, %v3884
    %3886 = vmatmul.f32.gmra.mxu0 %v3721
    %v3887 = vpop.f32.mrf.mxu0
    %v3888 = vadd.f32 %v3865, %v3887
    %3889 = vmatmul.f32.gmra.mxu0 %v3724
    %v3890 = vpop.f32.mrf.mxu0
    %v3891 = vadd.f32 %v3865, %v3890
    %3892 = vmatmul.f32.gmra.mxu0 %v3727
    %v3893 = vpop.f32.mrf.mxu0
    %v3894 = vadd.f32 %v3865, %v3893
    %3895 = vmatmul.f32.gmra.mxu0 %v3730
    %v3896 = vpop.f32.mrf.mxu0
    %v3897 = vadd.f32 %v3865, %v3896
    %3898 = vmatmul.f32.gmra.mxu0 %v3733
    %v3899 = vpop.f32.mrf.mxu0
    %v3900 = vadd.f32 %v3865, %v3899
    %3901 = vmatmul.f32.gmra.mxu0 %v3736
    %v3902 = vpop.f32.mrf.mxu0
    %v3903 = vadd.f32 %v3865, %v3902
    %3904 = vmatmul.f32.gmra.mxu0 %v3739
    %v3905 = vpop.f32.mrf.mxu0
    %v3906 = vadd.f32 %v3865, %v3905
    %3907 = vdwg.mxu0
    %3908 = vmatpush.msra.mxu0 %v3846
    %3909 = vmatpush.msra.mxu0 %v3845
    %3910 = vmatpush.msra.mxu0 %v3844
    %3911 = vmatpush.msra.mxu0 %v3843
    %3912 = vmatpush.msra.mxu0 %v3842
    %3913 = vmatpush.msra.mxu0 %v3841
    %3914 = vmatpush.msra.mxu0 %v3840
    %3915 = vmatpush.msra.mxu0 %v3839
    %3916 = vmatpush.msra.mxu0 %v3838
    %3917 = vmatpush.msra.mxu0 %v3837
    %3918 = vmatpush.msra.mxu0 %v3836
    %3919 = vmatpush.msra.mxu0 %v3835
    %3920 = vmatpush.msra.mxu0 %v3834
    %3921 = vmatpush.msra.mxu0 %v3833
    %3922 = vmatpush.msra.mxu0 %v3832
    %3923 = vmatpush.msra.mxu0 %v3831
    %3924 = vmatmul.f32.gmra.mxu0 %v3660
    %v3925 = vpop.f32.mrf.mxu0
    %v3926 = vadd.f32 %v3885, %v3925
    %3927 = vmatmul.f32.gmra.mxu0 %v3661
    %v3928 = vpop.f32.mrf.mxu0
    %v3929 = vadd.f32 %v3888, %v3928
    %3930 = vmatmul.f32.gmra.mxu0 %v3662
    %v3931 = vpop.f32.mrf.mxu0
    %v3932 = vadd.f32 %v3891, %v3931
    %3933 = vmatmul.f32.gmra.mxu0 %v3663
    %v3934 = vpop.f32.mrf.mxu0
    %v3935 = vadd.f32 %v3894, %v3934
    %3936 = vmatmul.f32.gmra.mxu0 %v3664
    %v3937 = vpop.f32.mrf.mxu0
    %v3938 = vadd.f32 %v3897, %v3937
    %3939 = vmatmul.f32.gmra.mxu0 %v3665
    %v3940 = vpop.f32.mrf.mxu0
    %v3941 = vadd.f32 %v3900, %v3940
    %3942 = vmatmul.f32.gmra.mxu0 %v3666
    %v3943 = vpop.f32.mrf.mxu0
    %v3944 = vadd.f32 %v3903, %v3943
    %3945 = vmatmul.f32.gmra.mxu0 %v3667
    %v3946 = vpop.f32.mrf.mxu0
    %v3947 = vadd.f32 %v3906, %v3946
    %3948 = vdwg.mxu0
    %3949 = vmatpush.msra.mxu0 %v3862
    %3950 = vmatpush.msra.mxu0 %v3861
    %3951 = vmatpush.msra.mxu0 %v3860
    %3952 = vmatpush.msra.mxu0 %v3859
    %3953 = vmatpush.msra.mxu0 %v3858
    %3954 = vmatpush.msra.mxu0 %v3857
    %3955 = vmatpush.msra.mxu0 %v3856
    %3956 = vmatpush.msra.mxu0 %v3855
    %3957 = vmatpush.msra.mxu0 %v3854
    %3958 = vmatpush.msra.mxu0 %v3853
    %3959 = vmatpush.msra.mxu0 %v3852
    %3960 = vmatpush.msra.mxu0 %v3851
    %3961 = vmatpush.msra.mxu0 %v3850
    %3962 = vmatpush.msra.mxu0 %v3849
    %3963 = vmatpush.msra.mxu0 %v3848
    %3964 = vmatpush.msra.mxu0 %v3847
    %3965 = vmatmul.f32.gmra.mxu0 %v3792
    %v3966 = vpop.f32.mrf.mxu0
    %v3967 = vadd.f32 %v3926, %v3966
    %3968 = vmatmul.f32.gmra.mxu0 %v3795
    %v3969 = vpop.f32.mrf.mxu0
    %v3970 = vadd.f32 %v3929, %v3969
    %3971 = vmatmul.f32.gmra.mxu0 %v3798
    %v3972 = vpop.f32.mrf.mxu0
    %v3973 = vadd.f32 %v3932, %v3972
    %3974 = vmatmul.f32.gmra.mxu0 %v3801
    %v3975 = vpop.f32.mrf.mxu0
    %v3976 = vadd.f32 %v3935, %v3975
    %3977 = vmatmul.f32.gmra.mxu0 %v3804
    %v3978 = vpop.f32.mrf.mxu0
    %v3979 = vadd.f32 %v3938, %v3978
    %3980 = vmatmul.f32.gmra.mxu0 %v3807
    %v3981 = vpop.f32.mrf.mxu0
    %v3982 = vadd.f32 %v3941, %v3981
    %3983 = vmatmul.f32.gmra.mxu0 %v3810
    %v3984 = vpop.f32.mrf.mxu0
    %v3985 = vadd.f32 %v3944, %v3984
    %3986 = vmatmul.f32.gmra.mxu0 %v3813
    %v3987 = vpop.f32.mrf.mxu0
    %v3988 = vadd.f32 %v3947, %v3987
    %3989 = vdwg.mxu0
    %v3990 = vsub.f32 0.0, %v3967
    %v3991 = vsub.f32 0.0, %v3970
    %v3992 = vsub.f32 0.0, %v3973
    %v3993 = vsub.f32 0.0, %v3976
    %v3994 = vsub.f32 0.0, %v3979
    %v3995 = vsub.f32 0.0, %v3982
    %v3996 = vsub.f32 0.0, %v3985
    %v3997 = vsub.f32 0.0, %v3988
    %v3998 = vmul.f32 %v3990, 1.442695
    %v3999 = vpow.pop %v3998
    %v4000 = vmul.f32 %v3991, 1.442695
    %v4001 = vpow.pop %v4000
    %v4002 = vmul.f32 %v3992, 1.442695
    %v4003 = vpow.pop %v4002
    %v4004 = vmul.f32 %v3993, 1.442695
    %v4005 = vpow.pop %v4004
    %v4006 = vmul.f32 %v3994, 1.442695
    %v4007 = vpow.pop %v4006
    %v4008 = vmul.f32 %v3995, 1.442695
    %v4009 = vpow.pop %v4008
    %v4010 = vmul.f32 %v3996, 1.442695
    %v4011 = vpow.pop %v4010
    %v4012 = vmul.f32 %v3997, 1.442695
    %v4013 = vpow.pop %v4012
    %v4014 = vadd.f32 %v3999, 1.0
    %v4015 = vadd.f32 %v4001, 1.0
    %v4016 = vadd.f32 %v4003, 1.0
    %v4017 = vadd.f32 %v4005, 1.0
    %v4018 = vadd.f32 %v4007, 1.0
    %v4019 = vadd.f32 %v4009, 1.0
    %v4020 = vadd.f32 %v4011, 1.0
    %v4021 = vadd.f32 %v4013, 1.0
    %v4022 = vrcp.pop %v4014
    %v4023 = vmul.f32 %v4014, %v4022
    %v4024 = vsub.f32 1.0, %v4023
    %v4025 = vmul.f32 %v4022, %v4024
    %v4026 = vadd.f32 %v4022, %v4025
    %vm4027 = vweird.f32 %v4014
    %vm4028 = vweird.f32 %v4022
    %vm4029 = vmor %vm4027, %vm4028
    %v4030 = vsel %vm4029, %v4022, %v4026
    %v4031 = vand.u32 2147483647, %v4014
    %vm4032 = vcmp.eq.f32.partialorder %v4031, 8.507059e+37
    %v4033 = vand.u32 %v4014, 2147483648
    %v4034 = vor.u32 1.1754944e-38, %v4033
    %v4035 = vsel %vm4032, %v4034, %v4030
    %v4036 = vmul.f32 1.0, %v4035
    %v4037 = vrcp.pop %v4015
    %v4038 = vmul.f32 %v4015, %v4037
    %v4039 = vsub.f32 1.0, %v4038
    %v4040 = vmul.f32 %v4037, %v4039
    %v4041 = vadd.f32 %v4037, %v4040
    %vm4042 = vweird.f32 %v4015
    %vm4043 = vweird.f32 %v4037
    %vm4044 = vmor %vm4042, %vm4043
    %v4045 = vsel %vm4044, %v4037, %v4041
    %v4046 = vand.u32 2147483647, %v4015
    %vm4047 = vcmp.eq.f32.partialorder %v4046, 8.507059e+37
    %v4048 = vand.u32 %v4015, 2147483648
    %v4049 = vor.u32 1.1754944e-38, %v4048
    %v4050 = vsel %vm4047, %v4049, %v4045
    %v4051 = vmul.f32 1.0, %v4050
    %v4052 = vrcp.pop %v4016
    %v4053 = vmul.f32 %v4016, %v4052
    %v4054 = vsub.f32 1.0, %v4053
    %v4055 = vmul.f32 %v4052, %v4054
    %v4056 = vadd.f32 %v4052, %v4055
    %vm4057 = vweird.f32 %v4016
    %vm4058 = vweird.f32 %v4052
    %vm4059 = vmor %vm4057, %vm4058
    %v4060 = vsel %vm4059, %v4052, %v4056
    %v4061 = vand.u32 2147483647, %v4016
    %vm4062 = vcmp.eq.f32.partialorder %v4061, 8.507059e+37
    %v4063 = vand.u32 %v4016, 2147483648
    %v4064 = vor.u32 1.1754944e-38, %v4063
    %v4065 = vsel %vm4062, %v4064, %v4060
    %v4066 = vmul.f32 1.0, %v4065
    %v4067 = vrcp.pop %v4017
    %v4068 = vmul.f32 %v4017, %v4067
    %v4069 = vsub.f32 1.0, %v4068
    %v4070 = vmul.f32 %v4067, %v4069
    %v4071 = vadd.f32 %v4067, %v4070
    %vm4072 = vweird.f32 %v4017
    %vm4073 = vweird.f32 %v4067
    %vm4074 = vmor %vm4072, %vm4073
    %v4075 = vsel %vm4074, %v4067, %v4071
    %v4076 = vand.u32 2147483647, %v4017
    %vm4077 = vcmp.eq.f32.partialorder %v4076, 8.507059e+37
    %v4078 = vand.u32 %v4017, 2147483648
    %v4079 = vor.u32 1.1754944e-38, %v4078
    %v4080 = vsel %vm4077, %v4079, %v4075
    %v4081 = vmul.f32 1.0, %v4080
    %v4082 = vrcp.pop %v4018
    %v4083 = vmul.f32 %v4018, %v4082
    %v4084 = vsub.f32 1.0, %v4083
    %v4085 = vmul.f32 %v4082, %v4084
    %v4086 = vadd.f32 %v4082, %v4085
    %vm4087 = vweird.f32 %v4018
    %vm4088 = vweird.f32 %v4082
    %vm4089 = vmor %vm4087, %vm4088
    %v4090 = vsel %vm4089, %v4082, %v4086
    %v4091 = vand.u32 2147483647, %v4018
    %vm4092 = vcmp.eq.f32.partialorder %v4091, 8.507059e+37
    %v4093 = vand.u32 %v4018, 2147483648
    %v4094 = vor.u32 1.1754944e-38, %v4093
    %v4095 = vsel %vm4092, %v4094, %v4090
    %v4096 = vmul.f32 1.0, %v4095
    %v4097 = vrcp.pop %v4019
    %v4098 = vmul.f32 %v4019, %v4097
    %v4099 = vsub.f32 1.0, %v4098
    %v4100 = vmul.f32 %v4097, %v4099
    %v4101 = vadd.f32 %v4097, %v4100
    %vm4102 = vweird.f32 %v4019
    %vm4103 = vweird.f32 %v4097
    %vm4104 = vmor %vm4102, %vm4103
    %v4105 = vsel %vm4104, %v4097, %v4101
    %v4106 = vand.u32 2147483647, %v4019
    %vm4107 = vcmp.eq.f32.partialorder %v4106, 8.507059e+37
    %v4108 = vand.u32 %v4019, 2147483648
    %v4109 = vor.u32 1.1754944e-38, %v4108
    %v4110 = vsel %vm4107, %v4109, %v4105
    %v4111 = vmul.f32 1.0, %v4110
    %v4112 = vrcp.pop %v4020
    %v4113 = vmul.f32 %v4020, %v4112
    %v4114 = vsub.f32 1.0, %v4113
    %v4115 = vmul.f32 %v4112, %v4114
    %v4116 = vadd.f32 %v4112, %v4115
    %vm4117 = vweird.f32 %v4020
    %vm4118 = vweird.f32 %v4112
    %vm4119 = vmor %vm4117, %vm4118
    %v4120 = vsel %vm4119, %v4112, %v4116
    %v4121 = vand.u32 2147483647, %v4020
    %vm4122 = vcmp.eq.f32.partialorder %v4121, 8.507059e+37
    %v4123 = vand.u32 %v4020, 2147483648
    %v4124 = vor.u32 1.1754944e-38, %v4123
    %v4125 = vsel %vm4122, %v4124, %v4120
    %v4126 = vmul.f32 1.0, %v4125
    %v4127 = vrcp.pop %v4021
    %v4128 = vmul.f32 %v4021, %v4127
    %v4129 = vsub.f32 1.0, %v4128
    %v4130 = vmul.f32 %v4127, %v4129
    %v4131 = vadd.f32 %v4127, %v4130
    %vm4132 = vweird.f32 %v4021
    %vm4133 = vweird.f32 %v4127
    %vm4134 = vmor %vm4132, %vm4133
    %v4135 = vsel %vm4134, %v4127, %v4131
    %v4136 = vand.u32 2147483647, %v4021
    %vm4137 = vcmp.eq.f32.partialorder %v4136, 8.507059e+37
    %v4138 = vand.u32 %v4021, 2147483648
    %v4139 = vor.u32 1.1754944e-38, %v4138
    %v4140 = vsel %vm4137, %v4139, %v4135
    %v4141 = vmul.f32 1.0, %v4140
    %4142 = vst [vmem:[%s93] sm:$0xff] %v4036
    %4143 = vst [vmem:[%s93 + $0x8] sm:$0xff] %v4051
    %4144 = vst [vmem:[%s93 + $0x10] sm:$0xff] %v4066
    %4145 = vst [vmem:[%s93 + $0x18] sm:$0xff] %v4081
    %4146 = vst [vmem:[%s93 + $0x20] sm:$0xff] %v4096
    %4147 = vst [vmem:[%s93 + $0x28] sm:$0xff] %v4111
    %4148 = vst [vmem:[%s93 + $0x30] sm:$0xff] %v4126
    %4149 = vst [vmem:[%s93 + $0x38] sm:$0xff] %v4141
    // Predicated region
    $region274: #{forward.1} parent=1 // pred_check
      _
    $region275: #{forward.1} parent=1 // pred_check_branch
      %4151 = sbr.rel (0) target = $region277
    $region276: #{forward.1} parent=1 // pred_region
      _
    $region277: #{forward.1} parent=1 // pred_fallthru
      _
    // Predicated region
    $region278: #{forward.1} parent=1 // pred_check
      _
    $region279: #{forward.1} parent=1 // pred_check_branch
      %4153 = sbr.rel (0) target = $region281
    $region280: #{forward.1} parent=1 // pred_region
      _
    $region281: #{forward.1} parent=1 // pred_fallthru
      _
    %4154 = vsyncpa [#allocation3], 1
    %4155 = vsyncpa [#allocation5], 1
    %4156 = vsyncpa [#allocation8], 1
    %4157 = vsyncpa [#allocation11], 1
    %4158 = vsyncpa [#allocation14], 1
    %4159 = vsyncpa [#allocation17], 1
    %4160 = vsyncpa [#allocation20], 1
    %4161 = vsyncpa [#allocation23], 1
    %4162 = vsyncpa [#allocation26], 1
    %4163 = vsyncpa [#allocation29], 1
    %4164 = vsyncpa [#allocation32], 1
    %4165 = vsyncpa [#allocation35], 1

</llo_original>
